<compile_context>
chip_gen: v7x
topology: tpu7x:2x2x1
jax: 0.10.0
libtpu: 0.0.40
codegen_flags: <defaults>
</compile_context>

<pallas_src>
import functools

import jax
import jax.numpy as jnp
from jax.experimental import pallas as pl
from jax.experimental.pallas import tpu as pltpu

# ----------------------------- configuration ------------------------------
B = 2            # batch
M = 2            # modalities (e.g. ['RGB', 'Depth'])
C_IN = 4         # input channels per modality
T = 8            # sample_duration (small)
H = W = 16       # sample_size (small)
C_OUT = 32       # conv output channels == feature dim of the stand-in CNN
NUM_CLASSES = 249
NC_PAD = 256                             # lane-dense class dim (multiple of 128)
KSIZE = 3
K_RAW = KSIZE * KSIZE * KSIZE * C_IN     # 108
K_PAD = 128                              # pad contraction dim to one lane tile
THW = T * H * W                          # 2048


# --------------------------- Pallas kernel body ----------------------------
def fused_kernel(p_ref, wc_ref, bc_ref, wl_ref, bl_ref,
                 feat_ref, per_ref, cons_ref, *, inv_spatial, inv_m):
    """Conv-as-matmul + ReLU + global-avg-pool + classifier + 'avg' consensus.

    grid = (B,); all M modalities are handled inside one step (static loop).
    p_ref   : [1, M, THW, K_PAD]   bf16 im2col patches for batch b
    wc_ref  : [M, K_PAD, C_OUT]    bf16 flattened conv weights (all modalities)
    bc_ref  : [M, 1, C_OUT]        conv biases
    wl_ref  : [M, C_OUT, NC_PAD]   classifier weights (classes padded to 256)
    bl_ref  : [M, 1, NC_PAD]       classifier biases
    feat_ref: [1, M, C_OUT]        pooled features output for batch b
    per_ref : [1, M, NC_PAD]       per-modality logits output for batch b
    cons_ref: [1, 1, NC_PAD]       'avg' consensus output for batch b
    """
    # 1/THW-scaled row vector: the pooling dot directly yields the mean on the
    # MXU. Hoisted once (JAX does not CSE broadcasts inside the static loop).
    pool_row = jnp.full((1, THW), inv_spatial, dtype=jnp.float32)

    pooled_rows = []
    logit_rows = []
    cons_acc = None
    for m_idx in range(M):   # static unroll: all modalities in one grid step
        # conv-as-matmul (bf16 inputs, f32 accumulate) + bias + ReLU
        h = jnp.dot(p_ref[0, m_idx], wc_ref[m_idx],
                    preferred_element_type=jnp.float32)            # [THW, C_OUT]
        h = jnp.maximum(h + bc_ref[m_idx], 0.0)

        # global average pool on the MXU (idle right after the conv dot)
        pooled = jnp.dot(pool_row, h,
                         preferred_element_type=jnp.float32)       # [1, C_OUT]
        pooled_rows.append(pooled)

        # per-modality classifier (f32)
        logits = jnp.dot(pooled, wl_ref[m_idx],
                         preferred_element_type=jnp.float32) + bl_ref[m_idx]
        logit_rows.append(logits)                                  # [1, NC_PAD]

        # 'avg' consensus accumulated in-register (no resident output / pl.when)
        cons_acc = logits if cons_acc is None else cons_acc + logits

    feat_ref[0] = jnp.concatenate(pooled_rows, axis=0)             # [M, C_OUT]
    per_ref[0] = jnp.concatenate(logit_rows, axis=0)               # [M, NC_PAD]
    cons_ref[0] = cons_acc * inv_m                                 # [1, NC_PAD]


# ------------------------------ JAX wrappers -------------------------------
def build_patches(x):
    """x: [B, M, C_IN, T, H, W] (NCDHW per modality, any float dtype) ->
    im2col patches [B, M, THW, K_PAD] (channels-last; the K zero-pad is folded
    into the concat so the full-size tensor is written only once)."""
    x_cl = jnp.transpose(x, (0, 1, 3, 4, 5, 2))                       # [B,M,T,H,W,C]
    xp = jnp.pad(x_cl, ((0, 0), (0, 0), (1, 1), (1, 1), (1, 1), (0, 0)))
    parts = []
    for kt in range(KSIZE):
        for kh in range(KSIZE):
            for kw in range(KSIZE):
                parts.append(xp[:, :, kt:kt + T, kh:kh + H, kw:kw + W, :])
    # fold the 108 -> 128 contraction pad into the concat (no extra full pass)
    parts.append(jnp.zeros(x_cl.shape[:5] + (K_PAD - K_RAW,), dtype=x.dtype))
    patches = jnp.concatenate(parts, axis=-1)                         # [...,K_PAD]
    return patches.reshape(B, M, THW, K_PAD)


def fused_call(patches, w_conv, b_conv, w_cls, b_cls):
    kern = functools.partial(fused_kernel, inv_spatial=1.0 / THW, inv_m=1.0 / M)
    return pl.pallas_call(
        kern,
        out_shape=(
            jax.ShapeDtypeStruct((B, M, C_OUT), jnp.float32),     # features
            jax.ShapeDtypeStruct((B, M, NC_PAD), jnp.float32),    # per-mod logits
            jax.ShapeDtypeStruct((B, 1, NC_PAD), jnp.float32),    # consensus
        ),
        grid_spec=pltpu.PrefetchScalarGridSpec(
            num_scalar_prefetch=0,
            grid=(B,),
            in_specs=[
                pl.BlockSpec((1, M, THW, K_PAD), lambda b: (b, 0, 0, 0)),
                # constant index maps: modality weights are fetched once and
                # kept resident across the whole (parallel) batch grid.
                pl.BlockSpec((M, K_PAD, C_OUT), lambda b: (0, 0, 0)),
                pl.BlockSpec((M, 1, C_OUT), lambda b: (0, 0, 0)),
                pl.BlockSpec((M, C_OUT, NC_PAD), lambda b: (0, 0, 0)),
                pl.BlockSpec((M, 1, NC_PAD), lambda b: (0, 0, 0)),
            ],
            out_specs=(
                pl.BlockSpec((1, M, C_OUT), lambda b: (b, 0, 0)),
                pl.BlockSpec((1, M, NC_PAD), lambda b: (b, 0, 0)),
                pl.BlockSpec((1, 1, NC_PAD), lambda b: (b, 0, 0)),
            ),
        ),
        compiler_params=pltpu.CompilerParams(
            dimension_semantics=("parallel",)),   # 2-way megacore on v7x
    )(patches, w_conv, b_conv, w_cls, b_cls)


def consensus_module_forward(x, params):
    """x: [B, M, C_IN, T, H, W] (matches the PyTorch 6-D input, mod_aggr='avg').

    Returns (consensus_logits [B, NC], per_modality_logits [M, B, NC],
             per_modality_features [M, B, C_OUT])."""
    # bf16 BEFORE im2col: halves every XLA pass over the patch tensor.
    patches = build_patches(x.astype(jnp.bfloat16))
    feats3, per3, cons3 = fused_call(
        patches,
        params["w_conv"].astype(jnp.bfloat16),
        params["b_conv"],
        params["w_cls"],
        params["b_cls"],
    )
    feats = jnp.transpose(feats3, (1, 0, 2))                      # [M, B, C_OUT]
    per_mod = jnp.transpose(per3[:, :, :NUM_CLASSES], (1, 0, 2))  # [M, B, 249]
    consensus = cons3[:, 0, :NUM_CLASSES]                         # [B, 249]
    return consensus, per_mod, feats


def reference_forward(x, params):
    """Pure-JAX f32 reference for numerical validation."""
    patches = build_patches(x)                                        # f32
    h = jnp.einsum("bmsk,mko->bmso", patches, params["w_conv"])
    h = jnp.maximum(h + params["b_conv"][None, :, :, :], 0.0)
    feat = jnp.mean(h, axis=2)                                        # [B, M, C_OUT]
    logits = jnp.einsum("bmo,mon->bmn", feat, params["w_cls"]) \
        + params["b_cls"][None, :, 0, :]
    logits = logits[..., :NUM_CLASSES]                                # [B, M, NC]
    consensus = jnp.mean(logits, axis=1)
    return consensus, jnp.transpose(logits, (1, 0, 2)), jnp.transpose(feat, (1, 0, 2))


def init_params(key):
    k1, k2, k3, k4 = jax.random.split(key, 4)
    # conv3d weights per modality: [M,3,3,3,C_IN,C_OUT] -> flattened [M,K_PAD,C_OUT]
    w_conv = 0.05 * jax.random.normal(
        k1, (M, KSIZE, KSIZE, KSIZE, C_IN, C_OUT), jnp.float32)
    w_conv = w_conv.reshape(M, K_RAW, C_OUT)
    w_conv = jnp.pad(w_conv, ((0, 0), (0, K_PAD - K_RAW), (0, 0)))   # zero K rows
    b_conv = 0.05 * jax.random.normal(k2, (M, 1, C_OUT), jnp.float32)
    # classifier per modality: Linear(C_OUT -> NUM_CLASSES), padded to 256 classes
    w_cls = 0.05 * jax.random.normal(k3, (M, C_OUT, NUM_CLASSES), jnp.float32)
    w_cls = jnp.pad(w_cls, ((0, 0), (0, 0), (0, NC_PAD - NUM_CLASSES)))
    b_cls = 0.05 * jax.random.normal(k4, (M, 1, NUM_CLASSES), jnp.float32)
    b_cls = jnp.pad(b_cls, ((0, 0), (0, 0), (0, NC_PAD - NUM_CLASSES)))
    return {"w_conv": w_conv, "b_conv": b_conv, "w_cls": w_cls, "b_cls": b_cls}


if __name__ == "__main__":
    key = jax.random.PRNGKey(0)
    kx, kp = jax.random.split(key)
    x = jax.random.normal(kx, (B, M, C_IN, T, H, W), jnp.float32)
    params = init_params(kp)

    fwd = jax.jit(lambda xx: consensus_module_forward(xx, params))
    consensus, per_mod_logits, feats = fwd(x)
    jax.block_until_ready((consensus, per_mod_logits, feats))

    ref_c, ref_p, ref_f = reference_forward(x, params)
    # bf16 conv-input path -> relaxed tolerances vs the f32 reference
    assert jnp.allclose(consensus, ref_c, rtol=1e-2, atol=1e-2)
    assert jnp.allclose(per_mod_logits, ref_p, rtol=1e-2, atol=1e-2)
    assert jnp.allclose(feats, ref_f, rtol=1e-2, atol=1e-2)

    print("KERNEL_OK")
</pallas_src>

<mosaic_0001>
module attributes {stable_mosaic.version = 11 : i64} {
  func.func @fused_kernel(%arg0: i32, %arg1: memref<1x2x2048x128xbf16, #tpu.memory_space<vmem>>, %arg2: memref<2x128x32xbf16, #tpu.memory_space<vmem>>, %arg3: memref<2x1x32xf32, #tpu.memory_space<vmem>>, %arg4: memref<2x32x256xf32, #tpu.memory_space<vmem>>, %arg5: memref<2x1x256xf32, #tpu.memory_space<vmem>>, %arg6: memref<1x2x32xf32, #tpu.memory_space<vmem>>, %arg7: memref<1x2x256xf32, #tpu.memory_space<vmem>>, %arg8: memref<1x1x256xf32, #tpu.memory_space<vmem>>) attributes {dimension_semantics = [#tpu.dimension_semantics<parallel>], iteration_bounds = array<i64: 2>, scalar_prefetch = 0 : i64, scratch_operands = 0 : i64, tpu.core_type = #tpu.core_type<tc>, window_params = [{transform_indices = @transform_0, window_bounds = array<i64: 1, 2, 2048, 128>}, {pipeline_mode = #tpu.pipeline_mode<synchronous>, transform_indices = @transform_1, window_bounds = array<i64: 2, 128, 32>}, {pipeline_mode = #tpu.pipeline_mode<synchronous>, transform_indices = @transform_2, window_bounds = array<i64: 2, 1, 32>}, {pipeline_mode = #tpu.pipeline_mode<synchronous>, transform_indices = @transform_3, window_bounds = array<i64: 2, 32, 256>}, {pipeline_mode = #tpu.pipeline_mode<synchronous>, transform_indices = @transform_4, window_bounds = array<i64: 2, 1, 256>}, {transform_indices = @transform_5, window_bounds = array<i64: 1, 2, 32>}, {transform_indices = @transform_6, window_bounds = array<i64: 1, 2, 256>}, {transform_indices = @transform_7, window_bounds = array<i64: 1, 1, 256>}]} {
    %cst = arith.constant 4.8828125E-4 : f32
    %0 = vector.broadcast %cst : f32 to vector<1x2048xf32>
    %c0 = arith.constant 0 : index
    %c0_0 = arith.constant 0 : index
    %c0_1 = arith.constant 0 : index
    %c0_2 = arith.constant 0 : index
    %1 = vector.load %arg1[%c0, %c0_0, %c0_1, %c0_2] : memref<1x2x2048x128xbf16, #tpu.memory_space<vmem>>, vector<1x1x2048x128xbf16>
    %2 = vector.shape_cast %1 : vector<1x1x2048x128xbf16> to vector<2048x128xbf16>
    %c0_3 = arith.constant 0 : index
    %c0_4 = arith.constant 0 : index
    %c0_5 = arith.constant 0 : index
    %3 = vector.load %arg2[%c0_3, %c0_4, %c0_5] : memref<2x128x32xbf16, #tpu.memory_space<vmem>>, vector<1x128x32xbf16>
    %4 = vector.shape_cast %3 : vector<1x128x32xbf16> to vector<128x32xbf16>
    %cst_6 = arith.constant dense<0.000000e+00> : vector<2048x32xf32>
    %5 = tpu.matmul %2, %4, %cst_6 {dimension_numbers = #tpu.dot_dimension_numbers<[1], [0], [0], [1], [0, 0, 1, 1], [], []>} : vector<2048x128xbf16>, vector<128x32xbf16>, vector<2048x32xf32> -> vector<2048x32xf32>
    %c0_7 = arith.constant 0 : index
    %c0_8 = arith.constant 0 : index
    %c0_9 = arith.constant 0 : index
    %6 = vector.load %arg3[%c0_7, %c0_8, %c0_9] : memref<2x1x32xf32, #tpu.memory_space<vmem>>, vector<1x1x32xf32>
    %7 = vector.shape_cast %6 : vector<1x1x32xf32> to vector<1x32xf32>
    %8 = vector.broadcast %7 : vector<1x32xf32> to vector<2048x32xf32>
    %9 = arith.addf %5, %8 : vector<2048x32xf32>
    %cst_10 = arith.constant 0.000000e+00 : f32
    %10 = vector.broadcast %cst_10 : f32 to vector<2048x32xf32>
    %11 = arith.maximumf %9, %10 : vector<2048x32xf32>
    %cst_11 = arith.constant dense<0.000000e+00> : vector<1x32xf32>
    %12 = tpu.matmul %0, %11, %cst_11 {dimension_numbers = #tpu.dot_dimension_numbers<[1], [0], [0], [1], [0, 0, 1, 1], [], []>} : vector<1x2048xf32>, vector<2048x32xf32>, vector<1x32xf32> -> vector<1x32xf32>
    %c0_12 = arith.constant 0 : index
    %c0_13 = arith.constant 0 : index
    %c0_14 = arith.constant 0 : index
    %13 = vector.load %arg4[%c0_12, %c0_13, %c0_14] : memref<2x32x256xf32, #tpu.memory_space<vmem>>, vector<1x32x256xf32>
    %14 = vector.shape_cast %13 : vector<1x32x256xf32> to vector<32x256xf32>
    %cst_15 = arith.constant dense<0.000000e+00> : vector<1x256xf32>
    %15 = tpu.matmul %12, %14, %cst_15 {dimension_numbers = #tpu.dot_dimension_numbers<[1], [0], [0], [1], [0, 0, 1, 1], [], []>} : vector<1x32xf32>, vector<32x256xf32>, vector<1x256xf32> -> vector<1x256xf32>
    %c0_16 = arith.constant 0 : index
    %c0_17 = arith.constant 0 : index
    %c0_18 = arith.constant 0 : index
    %16 = vector.load %arg5[%c0_16, %c0_17, %c0_18] : memref<2x1x256xf32, #tpu.memory_space<vmem>>, vector<1x1x256xf32>
    %17 = vector.shape_cast %16 : vector<1x1x256xf32> to vector<1x256xf32>
    %18 = arith.addf %15, %17 : vector<1x256xf32>
    %c0_19 = arith.constant 0 : index
    %c1 = arith.constant 1 : index
    %c0_20 = arith.constant 0 : index
    %c0_21 = arith.constant 0 : index
    %19 = vector.load %arg1[%c0_19, %c1, %c0_20, %c0_21] : memref<1x2x2048x128xbf16, #tpu.memory_space<vmem>>, vector<1x1x2048x128xbf16>
    %20 = vector.shape_cast %19 : vector<1x1x2048x128xbf16> to vector<2048x128xbf16>
    %c1_22 = arith.constant 1 : index
    %c0_23 = arith.constant 0 : index
    %c0_24 = arith.constant 0 : index
    %21 = vector.load %arg2[%c1_22, %c0_23, %c0_24] : memref<2x128x32xbf16, #tpu.memory_space<vmem>>, vector<1x128x32xbf16>
    %22 = vector.shape_cast %21 : vector<1x128x32xbf16> to vector<128x32xbf16>
    %cst_25 = arith.constant dense<0.000000e+00> : vector<2048x32xf32>
    %23 = tpu.matmul %20, %22, %cst_25 {dimension_numbers = #tpu.dot_dimension_numbers<[1], [0], [0], [1], [0, 0, 1, 1], [], []>} : vector<2048x128xbf16>, vector<128x32xbf16>, vector<2048x32xf32> -> vector<2048x32xf32>
    %c1_26 = arith.constant 1 : index
    %c0_27 = arith.constant 0 : index
    %c0_28 = arith.constant 0 : index
    %24 = vector.load %arg3[%c1_26, %c0_27, %c0_28] : memref<2x1x32xf32, #tpu.memory_space<vmem>>, vector<1x1x32xf32>
    %25 = vector.shape_cast %24 : vector<1x1x32xf32> to vector<1x32xf32>
    %26 = vector.broadcast %25 : vector<1x32xf32> to vector<2048x32xf32>
    %27 = arith.addf %23, %26 : vector<2048x32xf32>
    %cst_29 = arith.constant 0.000000e+00 : f32
    %28 = vector.broadcast %cst_29 : f32 to vector<2048x32xf32>
    %29 = arith.maximumf %27, %28 : vector<2048x32xf32>
    %cst_30 = arith.constant dense<0.000000e+00> : vector<1x32xf32>
    %30 = tpu.matmul %0, %29, %cst_30 {dimension_numbers = #tpu.dot_dimension_numbers<[1], [0], [0], [1], [0, 0, 1, 1], [], []>} : vector<1x2048xf32>, vector<2048x32xf32>, vector<1x32xf32> -> vector<1x32xf32>
    %c1_31 = arith.constant 1 : index
    %c0_32 = arith.constant 0 : index
    %c0_33 = arith.constant 0 : index
    %31 = vector.load %arg4[%c1_31, %c0_32, %c0_33] : memref<2x32x256xf32, #tpu.memory_space<vmem>>, vector<1x32x256xf32>
    %32 = vector.shape_cast %31 : vector<1x32x256xf32> to vector<32x256xf32>
    %cst_34 = arith.constant dense<0.000000e+00> : vector<1x256xf32>
    %33 = tpu.matmul %30, %32, %cst_34 {dimension_numbers = #tpu.dot_dimension_numbers<[1], [0], [0], [1], [0, 0, 1, 1], [], []>} : vector<1x32xf32>, vector<32x256xf32>, vector<1x256xf32> -> vector<1x256xf32>
    %c1_35 = arith.constant 1 : index
    %c0_36 = arith.constant 0 : index
    %c0_37 = arith.constant 0 : index
    %34 = vector.load %arg5[%c1_35, %c0_36, %c0_37] : memref<2x1x256xf32, #tpu.memory_space<vmem>>, vector<1x1x256xf32>
    %35 = vector.shape_cast %34 : vector<1x1x256xf32> to vector<1x256xf32>
    %36 = arith.addf %33, %35 : vector<1x256xf32>
    %37 = arith.addf %18, %36 : vector<1x256xf32>
    %38 = tpu.concatenate %12, %30 in 0 : vector<1x32xf32>, vector<1x32xf32> -> vector<2x32xf32>
    %c0_38 = arith.constant 0 : index
    %c0_39 = arith.constant 0 : index
    %c0_40 = arith.constant 0 : index
    %39 = vector.load %arg6[%c0_38, %c0_39, %c0_40] : memref<1x2x32xf32, #tpu.memory_space<vmem>>, vector<1x2x32xf32>
    %40 = vector.shape_cast %39 : vector<1x2x32xf32> to vector<2x32xf32>
    %41 = vector.shape_cast %38 : vector<2x32xf32> to vector<1x2x32xf32>
    tpu.vector_store %arg6[%c0_38, %c0_39, %c0_40], %41 {strides = array<i32>} : memref<1x2x32xf32, #tpu.memory_space<vmem>>, vector<1x2x32xf32>,
    %42 = tpu.concatenate %18, %36 in 0 : vector<1x256xf32>, vector<1x256xf32> -> vector<2x256xf32>
    %c0_41 = arith.constant 0 : index
    %c0_42 = arith.constant 0 : index
    %c0_43 = arith.constant 0 : index
    %43 = vector.load %arg7[%c0_41, %c0_42, %c0_43] : memref<1x2x256xf32, #tpu.memory_space<vmem>>, vector<1x2x256xf32>
    %44 = vector.shape_cast %43 : vector<1x2x256xf32> to vector<2x256xf32>
    %45 = vector.shape_cast %42 : vector<2x256xf32> to vector<1x2x256xf32>
    tpu.vector_store %arg7[%c0_41, %c0_42, %c0_43], %45 {strides = array<i32>} : memref<1x2x256xf32, #tpu.memory_space<vmem>>, vector<1x2x256xf32>,
    %cst_44 = arith.constant 5.000000e-01 : f32
    %46 = vector.broadcast %cst_44 : f32 to vector<1x256xf32>
    %47 = arith.mulf %37, %46 : vector<1x256xf32>
    %c0_45 = arith.constant 0 : index
    %c0_46 = arith.constant 0 : index
    %c0_47 = arith.constant 0 : index
    %48 = vector.load %arg8[%c0_45, %c0_46, %c0_47] : memref<1x1x256xf32, #tpu.memory_space<vmem>>, vector<1x1x256xf32>
    %49 = vector.shape_cast %48 : vector<1x1x256xf32> to vector<1x256xf32>
    %50 = vector.shape_cast %47 : vector<1x256xf32> to vector<1x1x256xf32>
    tpu.vector_store %arg8[%c0_45, %c0_46, %c0_47], %50 {strides = array<i32>} : memref<1x1x256xf32, #tpu.memory_space<vmem>>, vector<1x1x256xf32>,
    return
  }
  func.func @transform_0(%arg0: i32) -> (i32, i32, i32, i32) {
    %c0_i32 = arith.constant 0 : i32
    %c0_i32_0 = arith.constant 0 : i32
    %c0_i32_1 = arith.constant 0 : i32
    %c0_i32_2 = arith.constant 0 : i32
    return %arg0, %c0_i32, %c0_i32_0, %c0_i32_1 : i32, i32, i32, i32
  }
  func.func @transform_1(%arg0: i32) -> (i32, i32, i32) {
    %c0_i32 = arith.constant 0 : i32
    %c0_i32_0 = arith.constant 0 : i32
    %c0_i32_1 = arith.constant 0 : i32
    %c0_i32_2 = arith.constant 0 : i32
    return %c0_i32, %c0_i32_0, %c0_i32_1 : i32, i32, i32
  }
  func.func @transform_2(%arg0: i32) -> (i32, i32, i32) {
    %c0_i32 = arith.constant 0 : i32
    %c0_i32_0 = arith.constant 0 : i32
    %c0_i32_1 = arith.constant 0 : i32
    %c0_i32_2 = arith.constant 0 : i32
    return %c0_i32, %c0_i32_0, %c0_i32_1 : i32, i32, i32
  }
  func.func @transform_3(%arg0: i32) -> (i32, i32, i32) {
    %c0_i32 = arith.constant 0 : i32
    %c0_i32_0 = arith.constant 0 : i32
    %c0_i32_1 = arith.constant 0 : i32
    %c0_i32_2 = arith.constant 0 : i32
    return %c0_i32, %c0_i32_0, %c0_i32_1 : i32, i32, i32
  }
  func.func @transform_4(%arg0: i32) -> (i32, i32, i32) {
    %c0_i32 = arith.constant 0 : i32
    %c0_i32_0 = arith.constant 0 : i32
    %c0_i32_1 = arith.constant 0 : i32
    %c0_i32_2 = arith.constant 0 : i32
    return %c0_i32, %c0_i32_0, %c0_i32_1 : i32, i32, i32
  }
  func.func @transform_5(%arg0: i32) -> (i32, i32, i32) {
    %c0_i32 = arith.constant 0 : i32
    %c0_i32_0 = arith.constant 0 : i32
    %c0_i32_1 = arith.constant 0 : i32
    return %arg0, %c0_i32, %c0_i32_0 : i32, i32, i32
  }
  func.func @transform_6(%arg0: i32) -> (i32, i32, i32) {
    %c0_i32 = arith.constant 0 : i32
    %c0_i32_0 = arith.constant 0 : i32
    %c0_i32_1 = arith.constant 0 : i32
    return %arg0, %c0_i32, %c0_i32_0 : i32, i32, i32
  }
  func.func @transform_7(%arg0: i32) -> (i32, i32, i32) {
    %c0_i32 = arith.constant 0 : i32
    %c0_i32_0 = arith.constant 0 : i32
    %c0_i32_1 = arith.constant 0 : i32
    return %arg0, %c0_i32, %c0_i32_0 : i32, i32, i32
  }
}

</mosaic_0001>

<llo_original>
// kernel: _lambda_.1
$region0: #{_lambda_.1}
  #allocation0 [shape = 'u32[]', space=smem, size = 0x4, offset = 0x4, fixed_abs, tag = 'smem constant byte address 0x4 - core index']
  #allocation1 [shape = 'u32[144,128]{1,0:T(1,128)}', space=vmem, size = 0x12000, scoped, tag = 'internal scratch']
  %s0 = inlined_call_operand.hbm [shape: bf16[2,2,2048,128], index: 0, kind: input, shape index: {}]
  %s1 = inlined_call_operand.hbm [shape: bf16[2,128,32], index: 1, kind: input, shape index: {}]
  %s2 = inlined_call_operand.hbm [shape: f32[2,1,32], index: 2, kind: input, shape index: {}]
  %s3 = inlined_call_operand.hbm [shape: f32[2,32,256], index: 3, kind: input, shape index: {}]
  %s4 = inlined_call_operand.hbm [shape: f32[2,1,256], index: 4, kind: input, shape index: {}]
  %s5 = inlined_call_operand.vmem [shape: f32[2,2,32], index: 5, kind: output, shape index: {0}]
  %s6 = inlined_call_operand.vmem [shape: f32[2,2,256], index: 6, kind: output, shape index: {1}]
  %s7 = inlined_call_operand.vmem [shape: f32[2,1,256], index: 7, kind: output, shape index: {2}]
  %8 = xla_tuple %s5, %s6, %s7
  %s9 = sld [smem:[#allocation0]]
  $region89: #{_lambda_.1} parent=0
    _
  %s11 = ssub.s32 1, %s9
  %s12 = scalar_select 0, %s11, %s9
  $region1: #{_lambda_.1} parent=0
    #allocation2 [shape = 'u8[2097152]{0}', space=vmem, size = 0x200000, scoped, tag = 'input window, operand 0']
    #allocation3 [shape = 's32[2]{0}', space=sflag, size = 0x8, scoped, tag = 'scoped memory for _lambda_.1']
    #allocation4 [shape = 'u8[65536]{0}', space=vmem, size = 0x10000, scoped, tag = 'input window, operand 1, single buffered']
    #allocation5 [shape = 's32[1]{0}', space=sflag, size = 0x4, scoped, tag = 'scoped memory for _lambda_.1']
    #allocation6 [shape = 'u8[1024]{0}', space=vmem, size = 0x400, scoped, tag = 'input window, operand 2, single buffered']
    #allocation7 [shape = 'u8[65536]{0}', space=vmem, size = 0x10000, scoped, tag = 'input window, operand 3, single buffered']
    #allocation8 [shape = 's32[1]{0}', space=sflag, size = 0x4, scoped, tag = 'scoped memory for _lambda_.1']
    #allocation9 [shape = 'u8[2048]{0}', space=vmem, size = 0x800, scoped, tag = 'input window, operand 4, single buffered']
    %13 = vsyncpa [#allocation3], 0
    %s14 = scalar_lea.sflag [#allocation3], 1
    %15 = vsyncpa %s14, 0
    %16 = vsyncpa [#allocation5], 0
    %17 = vsyncpa [#allocation8], 0
    loop: start=0, step=1, limit=4
    $region2: #{_lambda_.1} parent=1 // loop_pre_header
      _
    $region3: #{_lambda_.1} parent=1 // loop_header
      %s19 = sphi 0, %s23
      %p20 = scmp.ge.s32.totalorder %s19, 4
      %s29 = sphi 0, %s31
      %s32 = sphi 0, %s29
      %s33 = sphi 0, %s32
      %s49 = sphi 0, %s33
      %s53 = sphi 0, %s53
      %s55 = sphi 0, %s53
      %s56 = sphi 0, %s55
      %s70 = sphi 0, %s56
      %s74 = sphi 0, %s74
      %s76 = sphi 0, %s74
      %s77 = sphi 0, %s76
      %s91 = sphi 0, %s77
      %s95 = sphi 0, %s95
      %s97 = sphi 0, %s95
      %s98 = sphi 0, %s97
      %s112 = sphi 0, %s98
      %s116 = sphi 0, %s116
      %s118 = sphi 0, %s116
      %s119 = sphi 0, %s118
      %s133 = sphi 0, %s119
      %s139 = sphi 0, %s141
      %s142 = sphi 0, %s139
      %s143 = sphi 0, %s142
      %s159 = sphi 0, %s143
      %s165 = sphi 0, %s167
      %s168 = sphi 0, %s165
      %s169 = sphi 0, %s168
      %s185 = sphi 0, %s169
      %s191 = sphi 0, %s193
      %s194 = sphi 0, %s191
      %s195 = sphi 0, %s194
      %s211 = sphi 0, %s195
    $region4: #{_lambda_.1} parent=1 // loop_header_branch
      %22 = sbr.rel (%p20) target = $region8
    $region5: #{_lambda_.1} parent=1 // loop_body
      %s24 = ssub.s32 %s19, 1
      %s25 = ssub.s32 %s19, 2
      %s26 = sadd.s32 %s19, 1
      %s27 = ssub.s32 %s19, %s26
      %p28 = scmp.eq.s32.totalorder %s27, 0
      %s30 = sadd.s32 %s29, 1
      %s31 = scalar_select %p28, %s29, %s30
      %p34 = pneg %p28
      %p35 = scmp.eq.s32.totalorder %s19, 1
      %p36 = por %p34, %p35
      %p37 = scmp.ne.s32.totalorder %s29, %s32
      %p38 = scmp.eq.s32.totalorder %s19, 0
      %p39 = por %p37, %p38
      %p40 = scmp.ne.s32.totalorder %s29, %s32
      %p41 = scmp.eq.s32.totalorder %s24, 1
      %p42 = por %p40, %p41
      %p43 = scmp.ne.s32.totalorder %s32, %s33
      %p44 = scmp.eq.s32.totalorder %s24, 0
      %p45 = por %p43, %p44
      %p46 = scmp.ne.s32.totalorder %s32, %s33
      %p47 = scmp.eq.s32.totalorder %s25, 1
      %p48 = por %p46, %p47
      %p50 = scmp.ne.s32.totalorder %s33, %s49
      %p51 = scmp.eq.s32.totalorder %s25, 0
      %p52 = por %p50, %p51
      %s54 = sadd.s32 %s53, 1
      %p57 = scmp.eq.s32.totalorder %s19, 1
      %p58 = scmp.ne.s32.totalorder %s53, %s55
      %p59 = scmp.eq.s32.totalorder %s19, 0
      %p60 = por %p58, %p59
      %p61 = scmp.ne.s32.totalorder %s53, %s55
      %p62 = scmp.eq.s32.totalorder %s24, 1
      %p63 = por %p61, %p62
      %p64 = scmp.ne.s32.totalorder %s55, %s56
      %p65 = scmp.eq.s32.totalorder %s24, 0
      %p66 = por %p64, %p65
      %p67 = scmp.ne.s32.totalorder %s55, %s56
      %p68 = scmp.eq.s32.totalorder %s25, 1
      %p69 = por %p67, %p68
      %p71 = scmp.ne.s32.totalorder %s56, %s70
      %p72 = scmp.eq.s32.totalorder %s25, 0
      %p73 = por %p71, %p72
      %s75 = sadd.s32 %s74, 1
      %p78 = scmp.eq.s32.totalorder %s19, 1
      %p79 = scmp.ne.s32.totalorder %s74, %s76
      %p80 = scmp.eq.s32.totalorder %s19, 0
      %p81 = por %p79, %p80
      %p82 = scmp.ne.s32.totalorder %s74, %s76
      %p83 = scmp.eq.s32.totalorder %s24, 1
      %p84 = por %p82, %p83
      %p85 = scmp.ne.s32.totalorder %s76, %s77
      %p86 = scmp.eq.s32.totalorder %s24, 0
      %p87 = por %p85, %p86
      %p88 = scmp.ne.s32.totalorder %s76, %s77
      %p89 = scmp.eq.s32.totalorder %s25, 1
      %p90 = por %p88, %p89
      %p92 = scmp.ne.s32.totalorder %s77, %s91
      %p93 = scmp.eq.s32.totalorder %s25, 0
      %p94 = por %p92, %p93
      %s96 = sadd.s32 %s95, 1
      %p99 = scmp.eq.s32.totalorder %s19, 1
      %p100 = scmp.ne.s32.totalorder %s95, %s97
      %p101 = scmp.eq.s32.totalorder %s19, 0
      %p102 = por %p100, %p101
      %p103 = scmp.ne.s32.totalorder %s95, %s97
      %p104 = scmp.eq.s32.totalorder %s24, 1
      %p105 = por %p103, %p104
      %p106 = scmp.ne.s32.totalorder %s97, %s98
      %p107 = scmp.eq.s32.totalorder %s24, 0
      %p108 = por %p106, %p107
      %p109 = scmp.ne.s32.totalorder %s97, %s98
      %p110 = scmp.eq.s32.totalorder %s25, 1
      %p111 = por %p109, %p110
      %p113 = scmp.ne.s32.totalorder %s98, %s112
      %p114 = scmp.eq.s32.totalorder %s25, 0
      %p115 = por %p113, %p114
      %s117 = sadd.s32 %s116, 1
      %p120 = scmp.eq.s32.totalorder %s19, 1
      %p121 = scmp.ne.s32.totalorder %s116, %s118
      %p122 = scmp.eq.s32.totalorder %s19, 0
      %p123 = por %p121, %p122
      %p124 = scmp.ne.s32.totalorder %s116, %s118
      %p125 = scmp.eq.s32.totalorder %s24, 1
      %p126 = por %p124, %p125
      %p127 = scmp.ne.s32.totalorder %s118, %s119
      %p128 = scmp.eq.s32.totalorder %s24, 0
      %p129 = por %p127, %p128
      %p130 = scmp.ne.s32.totalorder %s118, %s119
      %p131 = scmp.eq.s32.totalorder %s25, 1
      %p132 = por %p130, %p131
      %p134 = scmp.ne.s32.totalorder %s119, %s133
      %p135 = scmp.eq.s32.totalorder %s25, 0
      %p136 = por %p134, %p135
      %s137 = ssub.s32 %s19, %s26
      %p138 = scmp.eq.s32.totalorder %s137, 0
      %s140 = sadd.s32 %s139, 1
      %s141 = scalar_select %p138, %s139, %s140
      %p144 = pneg %p138
      %p145 = scmp.eq.s32.totalorder %s19, 1
      %p146 = por %p144, %p145
      %p147 = scmp.ne.s32.totalorder %s139, %s142
      %p148 = scmp.eq.s32.totalorder %s19, 0
      %p149 = por %p147, %p148
      %p150 = scmp.ne.s32.totalorder %s139, %s142
      %p151 = scmp.eq.s32.totalorder %s24, 1
      %p152 = por %p150, %p151
      %p153 = scmp.ne.s32.totalorder %s142, %s143
      %p154 = scmp.eq.s32.totalorder %s24, 0
      %p155 = por %p153, %p154
      %p156 = scmp.ne.s32.totalorder %s142, %s143
      %p157 = scmp.eq.s32.totalorder %s25, 1
      %p158 = por %p156, %p157
      %p160 = scmp.ne.s32.totalorder %s143, %s159
      %p161 = scmp.eq.s32.totalorder %s25, 0
      %p162 = por %p160, %p161
      %s163 = ssub.s32 %s19, %s26
      %p164 = scmp.eq.s32.totalorder %s163, 0
      %s166 = sadd.s32 %s165, 1
      %s167 = scalar_select %p164, %s165, %s166
      %p170 = pneg %p164
      %p171 = scmp.eq.s32.totalorder %s19, 1
      %p172 = por %p170, %p171
      %p173 = scmp.ne.s32.totalorder %s165, %s168
      %p174 = scmp.eq.s32.totalorder %s19, 0
      %p175 = por %p173, %p174
      %p176 = scmp.ne.s32.totalorder %s165, %s168
      %p177 = scmp.eq.s32.totalorder %s24, 1
      %p178 = por %p176, %p177
      %p179 = scmp.ne.s32.totalorder %s168, %s169
      %p180 = scmp.eq.s32.totalorder %s24, 0
      %p181 = por %p179, %p180
      %p182 = scmp.ne.s32.totalorder %s168, %s169
      %p183 = scmp.eq.s32.totalorder %s25, 1
      %p184 = por %p182, %p183
      %p186 = scmp.ne.s32.totalorder %s169, %s185
      %p187 = scmp.eq.s32.totalorder %s25, 0
      %p188 = por %p186, %p187
      %s189 = ssub.s32 %s19, %s26
      %p190 = scmp.eq.s32.totalorder %s189, 0
      %s192 = sadd.s32 %s191, 1
      %s193 = scalar_select %p190, %s191, %s192
      %p196 = pneg %p190
      %p197 = scmp.eq.s32.totalorder %s19, 1
      %p198 = por %p196, %p197
      %p199 = scmp.ne.s32.totalorder %s191, %s194
      %p200 = scmp.eq.s32.totalorder %s19, 0
      %p201 = por %p199, %p200
      %p202 = scmp.ne.s32.totalorder %s191, %s194
      %p203 = scmp.eq.s32.totalorder %s24, 1
      %p204 = por %p202, %p203
      %p205 = scmp.ne.s32.totalorder %s194, %s195
      %p206 = scmp.eq.s32.totalorder %s24, 0
      %p207 = por %p205, %p206
      %p208 = scmp.ne.s32.totalorder %s194, %s195
      %p209 = scmp.eq.s32.totalorder %s25, 1
      %p210 = por %p208, %p209
      %p212 = scmp.ne.s32.totalorder %s195, %s211
      %p213 = scmp.eq.s32.totalorder %s25, 0
      %p214 = por %p212, %p213
      %p215 = scmp.le.s32.totalorder 1, %s19
      %p216 = scmp.lt.s32.totalorder %s19, 3
      %p217 = pnand %p215, %p216
      %p218 = pneg %p217
      // Predicated region
      $region9: #{_lambda_.1} parent=5 // pred_check
        _
      $region10: #{_lambda_.1} parent=5 // pred_check_branch
        %220 = sbr.rel (%p217) target = $region12
      $region11: #{_lambda_.1} parent=5 // pred_region
        %s221 = ssub.s32 %s19, 1
        // Predicated region
        $region13: #{_lambda_.1} parent=11 // pred_check
          %p222 = pneg %p66
        $region14: #{_lambda_.1} parent=11 // pred_check_branch
          %224 = sbr.rel (%p222) target = $region16
        $region15: #{_lambda_.1} parent=11 // pred_region
          %s226 = ssub.s32 2048, 2048
          %227 = vsyncadd [#allocation5], %s226
          %s228 = sshll.u32 [#allocation4], 4
          %s229 = int_to_ptr.vmem [resolvable:$true] %s228
          %234 = dma.hbm_to_vmem [thread:$0]  %s1, 2048, %s229, [#allocation5], 64, 64, 4
        $region16: #{_lambda_.1} parent=11 // pred_fallthru
          _
        // Predicated region
        $region17: #{_lambda_.1} parent=11 // pred_check
          %p235 = pneg %p87
        $region18: #{_lambda_.1} parent=11 // pred_check_branch
          %237 = sbr.rel (%p235) target = $region20
        $region19: #{_lambda_.1} parent=11 // pred_region
          %s239 = ssub.s32 32, 32
          %240 = vsyncadd [#allocation5], %s239
          %s241 = sshll.u32 [#allocation6], 4
          %s242 = int_to_ptr.vmem [resolvable:$true] %s241
          %247 = dma.hbm_to_vmem [thread:$0]  %s2, 32, %s242, [#allocation5], 16, 16, 1
        $region20: #{_lambda_.1} parent=11 // pred_fallthru
          _
        // Predicated region
        $region21: #{_lambda_.1} parent=11 // pred_check
          %p248 = pneg %p108
        $region22: #{_lambda_.1} parent=11 // pred_check_branch
          %250 = sbr.rel (%p248) target = $region24
        $region23: #{_lambda_.1} parent=11 // pred_region
          %s252 = ssub.s32 2048, 2048
          %253 = vsyncadd [#allocation8], %s252
          %s254 = sshll.u32 [#allocation7], 4
          %s255 = int_to_ptr.vmem [resolvable:$true] %s254
          %260 = dma.hbm_to_vmem [thread:$0]  %s3, 2048, %s255, [#allocation8], 256, 256, 16
        $region24: #{_lambda_.1} parent=11 // pred_fallthru
          _
        // Predicated region
        $region25: #{_lambda_.1} parent=11 // pred_check
          %p261 = pneg %p129
        $region26: #{_lambda_.1} parent=11 // pred_check_branch
          %263 = sbr.rel (%p261) target = $region28
        $region27: #{_lambda_.1} parent=11 // pred_region
          %s265 = ssub.s32 64, 64
          %266 = vsyncadd [#allocation8], %s265
          %s267 = sshll.u32 [#allocation9], 4
          %s268 = int_to_ptr.vmem [resolvable:$true] %s267
          %273 = dma.hbm_to_vmem [thread:$0]  %s4, 64, %s268, [#allocation8], 32, 32, 2
        $region28: #{_lambda_.1} parent=11 // pred_fallthru
          _
      $region12: #{_lambda_.1} parent=5 // pred_fallthru
        _
      %p274 = scmp.lt.s32.totalorder %s19, 2
      // Predicated region
      $region29: #{_lambda_.1} parent=5 // pred_check
        %p275 = pneg %p274
      $region30: #{_lambda_.1} parent=5 // pred_check_branch
        %277 = sbr.rel (%p275) target = $region32
      $region31: #{_lambda_.1} parent=5 // pred_region
        // Predicated region
        $region33: #{_lambda_.1} parent=31 // pred_check
          %p278 = pneg %p39
        $region34: #{_lambda_.1} parent=31 // pred_check_branch
          %280 = sbr.rel (%p278) target = $region36
        $region35: #{_lambda_.1} parent=31 // pred_region
          %s281 = sand.u32 %s29, 1
          %s282 = scalar_lea.sflag [#allocation3], %s281
          %s283 = sand.u32 %s29, 1
          %s284 = smul.addr %s283, 2048
          %s285 = scalar_lea.vmem [#allocation2], %s284
          %s287 = ssub.s32 32768, 32768
          %288 = vsyncadd %s282, %s287
          %s289 = smul.addr %s19, 512
          %s290 = smul.addr %s289, 64
          %s291 = scalar_lea.hbm %s0, %s290
          %s292 = sshll.u32 %s285, 4
          %s293 = int_to_ptr.vmem [resolvable:$true] %s292
          %298 = dma.hbm_to_vmem [thread:$0]  %s291, 32768, %s293, %s282, 64, 64, 4
        $region36: #{_lambda_.1} parent=31 // pred_fallthru
          _
      $region32: #{_lambda_.1} parent=5 // pred_fallthru
        _
      %p299 = scmp.le.s32.totalorder 1, %s19
      %p300 = scmp.lt.s32.totalorder %s19, 3
      %p301 = pnand %p299, %p300
      %p302 = pneg %p301
      // Predicated region
      $region37: #{_lambda_.1} parent=5 // pred_check
        _
      $region38: #{_lambda_.1} parent=5 // pred_check_branch
        %304 = sbr.rel (%p301) target = $region40
      $region39: #{_lambda_.1} parent=5 // pred_region
        %s305 = ssub.s32 %s19, 1
        %s306 = sand.u32 %s32, 1
        %s307 = scalar_lea.sflag [#allocation3], %s306
        %s308 = sand.u32 %s32, 1
        %s309 = smul.addr %s308, 2048
        %s310 = scalar_lea.vmem [#allocation2], %s309
        // Predicated region
        $region41: #{_lambda_.1} parent=39 // pred_check
          %p311 = pneg %p45
        $region42: #{_lambda_.1} parent=39 // pred_check_branch
          %313 = sbr.rel (%p311) target = $region44
        $region43: #{_lambda_.1} parent=39 // pred_region
          %314 = dma.done %s307, 32768
        $region44: #{_lambda_.1} parent=39 // pred_fallthru
          _
        // Predicated region
        $region45: #{_lambda_.1} parent=39 // pred_check
          %p315 = pneg %p66
        $region46: #{_lambda_.1} parent=39 // pred_check_branch
          %317 = sbr.rel (%p315) target = $region48
        $region47: #{_lambda_.1} parent=39 // pred_region
          %318 = dma.done [#allocation5], 2048
        $region48: #{_lambda_.1} parent=39 // pred_fallthru
          _
        // Predicated region
        $region49: #{_lambda_.1} parent=39 // pred_check
          %p319 = pneg %p87
        $region50: #{_lambda_.1} parent=39 // pred_check_branch
          %321 = sbr.rel (%p319) target = $region52
        $region51: #{_lambda_.1} parent=39 // pred_region
          %322 = dma.done [#allocation5], 32
        $region52: #{_lambda_.1} parent=39 // pred_fallthru
          _
        // Predicated region
        $region53: #{_lambda_.1} parent=39 // pred_check
          %p323 = pneg %p108
        $region54: #{_lambda_.1} parent=39 // pred_check_branch
          %325 = sbr.rel (%p323) target = $region56
        $region55: #{_lambda_.1} parent=39 // pred_region
          %326 = dma.done [#allocation8], 2048
        $region56: #{_lambda_.1} parent=39 // pred_fallthru
          _
        // Predicated region
        $region57: #{_lambda_.1} parent=39 // pred_check
          %p327 = pneg %p129
        $region58: #{_lambda_.1} parent=39 // pred_check_branch
          %329 = sbr.rel (%p327) target = $region60
        $region59: #{_lambda_.1} parent=39 // pred_region
          %330 = dma.done [#allocation8], 64
        $region60: #{_lambda_.1} parent=39 // pred_fallthru
          _
        %s331 = sand.u32 %s32, 1
        %s332 = scalar_lea.sflag [#allocation3], %s331
        %s333 = sand.u32 %s32, 1
        %s334 = smul.addr %s333, 2048
        %s335 = scalar_lea.vmem [#allocation2], %s334
        %p336 = pneg %p45
        %p337 = pneg %p42
        %p338 = pneg %p66
        %p339 = pneg %p63
        %p340 = pneg %p87
        %p341 = pneg %p84
        %p342 = pneg %p108
        %p343 = pneg %p105
        %p344 = pneg %p129
        %p345 = pneg %p126
        %p346 = pneg %p155
        %p347 = pneg %p152
        %p348 = scmp.lt.s32.totalorder %s24, 1
        %s349 = scalar_select %p348, %s24, 1
        %s350 = smul.addr %s349, 2
        %s351 = scalar_lea.vmem %s5, %s350
        %p352 = pneg %p181
        %p353 = pneg %p178
        %p354 = scmp.lt.s32.totalorder %s24, 1
        %s355 = scalar_select %p354, %s24, 1
        %s356 = smul.addr %s355, 2
        %s357 = smul.addr %s356, 2
        %s358 = scalar_lea.vmem %s6, %s357
        %p359 = pneg %p207
        %p360 = pneg %p204
        %p361 = scmp.lt.s32.totalorder %s24, 1
        %s362 = scalar_select %p361, %s24, 1
        %s363 = smul.addr %s362, 2
        %s364 = scalar_lea.vmem %s7, %s363
        %p365 = scmp.lt.s32.totalorder %s24, 1
        %s366 = scalar_select %p365, %s24, 1
        %s367 = smul.addr %s366, 2
        %s368 = scalar_lea.vmem %s5, %s367
        %p369 = scmp.lt.s32.totalorder %s24, 1
        %s370 = scalar_select %p369, %s24, 1
        %s371 = smul.addr %s370, 2
        %s372 = smul.addr %s371, 2
        %s373 = scalar_lea.vmem %s6, %s372
        %p374 = scmp.lt.s32.totalorder %s24, 1
        %s375 = scalar_select %p374, %s24, 1
        %s376 = smul.addr %s375, 2
        %s377 = scalar_lea.vmem %s7, %s376
        %v379 = vld [vmem:[%s310] sm:$0xf]
        %v380 = vld [vmem:[%s310 + $0x4] sm:$0xf]
        %v381 = vld [vmem:[%s310 + $0x8] sm:$0xf]
        %v382 = vld [vmem:[%s310 + $0xc] sm:$0xf]
        %v383 = vld [vmem:[%s310 + $0x10] sm:$0xf]
        %v384 = vld [vmem:[%s310 + $0x14] sm:$0xf]
        %v385 = vld [vmem:[%s310 + $0x18] sm:$0xf]
        %v386 = vld [vmem:[%s310 + $0x1c] sm:$0xf]
        %v387 = vld [vmem:[%s310 + $0x20] sm:$0xf]
        %v388 = vld [vmem:[%s310 + $0x24] sm:$0xf]
        %v389 = vld [vmem:[%s310 + $0x28] sm:$0xf]
        %v390 = vld [vmem:[%s310 + $0x2c] sm:$0xf]
        %v391 = vld [vmem:[%s310 + $0x30] sm:$0xf]
        %v392 = vld [vmem:[%s310 + $0x34] sm:$0xf]
        %v393 = vld [vmem:[%s310 + $0x38] sm:$0xf]
        %v394 = vld [vmem:[%s310 + $0x3c] sm:$0xf]
        %v395 = vld [vmem:[%s310 + $0x40] sm:$0xf]
        %v396 = vld [vmem:[%s310 + $0x44] sm:$0xf]
        %v397 = vld [vmem:[%s310 + $0x48] sm:$0xf]
        %v398 = vld [vmem:[%s310 + $0x4c] sm:$0xf]
        %v399 = vld [vmem:[%s310 + $0x50] sm:$0xf]
        %v400 = vld [vmem:[%s310 + $0x54] sm:$0xf]
        %v401 = vld [vmem:[%s310 + $0x58] sm:$0xf]
        %v402 = vld [vmem:[%s310 + $0x5c] sm:$0xf]
        %v403 = vld [vmem:[%s310 + $0x60] sm:$0xf]
        %v404 = vld [vmem:[%s310 + $0x64] sm:$0xf]
        %v405 = vld [vmem:[%s310 + $0x68] sm:$0xf]
        %v406 = vld [vmem:[%s310 + $0x6c] sm:$0xf]
        %v407 = vld [vmem:[%s310 + $0x70] sm:$0xf]
        %v408 = vld [vmem:[%s310 + $0x74] sm:$0xf]
        %v409 = vld [vmem:[%s310 + $0x78] sm:$0xf]
        %v410 = vld [vmem:[%s310 + $0x7c] sm:$0xf]
        %v411 = vld [vmem:[%s310 + $0x80] sm:$0xf]
        %v412 = vld [vmem:[%s310 + $0x84] sm:$0xf]
        %v413 = vld [vmem:[%s310 + $0x88] sm:$0xf]
        %v414 = vld [vmem:[%s310 + $0x8c] sm:$0xf]
        %v415 = vld [vmem:[%s310 + $0x90] sm:$0xf]
        %v416 = vld [vmem:[%s310 + $0x94] sm:$0xf]
        %v417 = vld [vmem:[%s310 + $0x98] sm:$0xf]
        %v418 = vld [vmem:[%s310 + $0x9c] sm:$0xf]
        %v419 = vld [vmem:[%s310 + $0xa0] sm:$0xf]
        %v420 = vld [vmem:[%s310 + $0xa4] sm:$0xf]
        %v421 = vld [vmem:[%s310 + $0xa8] sm:$0xf]
        %v422 = vld [vmem:[%s310 + $0xac] sm:$0xf]
        %v423 = vld [vmem:[%s310 + $0xb0] sm:$0xf]
        %v424 = vld [vmem:[%s310 + $0xb4] sm:$0xf]
        %v425 = vld [vmem:[%s310 + $0xb8] sm:$0xf]
        %v426 = vld [vmem:[%s310 + $0xbc] sm:$0xf]
        %v427 = vld [vmem:[%s310 + $0xc0] sm:$0xf]
        %v428 = vld [vmem:[%s310 + $0xc4] sm:$0xf]
        %v429 = vld [vmem:[%s310 + $0xc8] sm:$0xf]
        %v430 = vld [vmem:[%s310 + $0xcc] sm:$0xf]
        %v431 = vld [vmem:[%s310 + $0xd0] sm:$0xf]
        %v432 = vld [vmem:[%s310 + $0xd4] sm:$0xf]
        %v433 = vld [vmem:[%s310 + $0xd8] sm:$0xf]
        %v434 = vld [vmem:[%s310 + $0xdc] sm:$0xf]
        %v435 = vld [vmem:[%s310 + $0xe0] sm:$0xf]
        %v436 = vld [vmem:[%s310 + $0xe4] sm:$0xf]
        %v437 = vld [vmem:[%s310 + $0xe8] sm:$0xf]
        %v438 = vld [vmem:[%s310 + $0xec] sm:$0xf]
        %v439 = vld [vmem:[%s310 + $0xf0] sm:$0xf]
        %v440 = vld [vmem:[%s310 + $0xf4] sm:$0xf]
        %v441 = vld [vmem:[%s310 + $0xf8] sm:$0xf]
        %v442 = vld [vmem:[%s310 + $0xfc] sm:$0xf]
        %v443 = vld [vmem:[%s310 + $0x100] sm:$0xf]
        %v444 = vld [vmem:[%s310 + $0x104] sm:$0xf]
        %v445 = vld [vmem:[%s310 + $0x108] sm:$0xf]
        %v446 = vld [vmem:[%s310 + $0x10c] sm:$0xf]
        %v447 = vld [vmem:[%s310 + $0x110] sm:$0xf]
        %v448 = vld [vmem:[%s310 + $0x114] sm:$0xf]
        %v449 = vld [vmem:[%s310 + $0x118] sm:$0xf]
        %v450 = vld [vmem:[%s310 + $0x11c] sm:$0xf]
        %v451 = vld [vmem:[%s310 + $0x120] sm:$0xf]
        %v452 = vld [vmem:[%s310 + $0x124] sm:$0xf]
        %v453 = vld [vmem:[%s310 + $0x128] sm:$0xf]
        %v454 = vld [vmem:[%s310 + $0x12c] sm:$0xf]
        %v455 = vld [vmem:[%s310 + $0x130] sm:$0xf]
        %v456 = vld [vmem:[%s310 + $0x134] sm:$0xf]
        %v457 = vld [vmem:[%s310 + $0x138] sm:$0xf]
        %v458 = vld [vmem:[%s310 + $0x13c] sm:$0xf]
        %v459 = vld [vmem:[%s310 + $0x140] sm:$0xf]
        %v460 = vld [vmem:[%s310 + $0x144] sm:$0xf]
        %v461 = vld [vmem:[%s310 + $0x148] sm:$0xf]
        %v462 = vld [vmem:[%s310 + $0x14c] sm:$0xf]
        %v463 = vld [vmem:[%s310 + $0x150] sm:$0xf]
        %v464 = vld [vmem:[%s310 + $0x154] sm:$0xf]
        %v465 = vld [vmem:[%s310 + $0x158] sm:$0xf]
        %v466 = vld [vmem:[%s310 + $0x15c] sm:$0xf]
        %v467 = vld [vmem:[%s310 + $0x160] sm:$0xf]
        %v468 = vld [vmem:[%s310 + $0x164] sm:$0xf]
        %v469 = vld [vmem:[%s310 + $0x168] sm:$0xf]
        %v470 = vld [vmem:[%s310 + $0x16c] sm:$0xf]
        %v471 = vld [vmem:[%s310 + $0x170] sm:$0xf]
        %v472 = vld [vmem:[%s310 + $0x174] sm:$0xf]
        %v473 = vld [vmem:[%s310 + $0x178] sm:$0xf]
        %v474 = vld [vmem:[%s310 + $0x17c] sm:$0xf]
        %v475 = vld [vmem:[%s310 + $0x180] sm:$0xf]
        %v476 = vld [vmem:[%s310 + $0x184] sm:$0xf]
        %v477 = vld [vmem:[%s310 + $0x188] sm:$0xf]
        %v478 = vld [vmem:[%s310 + $0x18c] sm:$0xf]
        %v479 = vld [vmem:[%s310 + $0x190] sm:$0xf]
        %v480 = vld [vmem:[%s310 + $0x194] sm:$0xf]
        %v481 = vld [vmem:[%s310 + $0x198] sm:$0xf]
        %v482 = vld [vmem:[%s310 + $0x19c] sm:$0xf]
        %v483 = vld [vmem:[%s310 + $0x1a0] sm:$0xf]
        %v484 = vld [vmem:[%s310 + $0x1a4] sm:$0xf]
        %v485 = vld [vmem:[%s310 + $0x1a8] sm:$0xf]
        %v486 = vld [vmem:[%s310 + $0x1ac] sm:$0xf]
        %v487 = vld [vmem:[%s310 + $0x1b0] sm:$0xf]
        %v488 = vld [vmem:[%s310 + $0x1b4] sm:$0xf]
        %v489 = vld [vmem:[%s310 + $0x1b8] sm:$0xf]
        %v490 = vld [vmem:[%s310 + $0x1bc] sm:$0xf]
        %v491 = vld [vmem:[%s310 + $0x1c0] sm:$0xf]
        %v492 = vld [vmem:[%s310 + $0x1c4] sm:$0xf]
        %v493 = vld [vmem:[%s310 + $0x1c8] sm:$0xf]
        %v494 = vld [vmem:[%s310 + $0x1cc] sm:$0xf]
        %v495 = vld [vmem:[%s310 + $0x1d0] sm:$0xf]
        %v496 = vld [vmem:[%s310 + $0x1d4] sm:$0xf]
        %v497 = vld [vmem:[%s310 + $0x1d8] sm:$0xf]
        %v498 = vld [vmem:[%s310 + $0x1dc] sm:$0xf]
        %v499 = vld [vmem:[%s310 + $0x1e0] sm:$0xf]
        %v500 = vld [vmem:[%s310 + $0x1e4] sm:$0xf]
        %v501 = vld [vmem:[%s310 + $0x1e8] sm:$0xf]
        %v502 = vld [vmem:[%s310 + $0x1ec] sm:$0xf]
        %v503 = vld [vmem:[%s310 + $0x1f0] sm:$0xf]
        %v504 = vld [vmem:[%s310 + $0x1f4] sm:$0xf]
        %v505 = vld [vmem:[%s310 + $0x1f8] sm:$0xf]
        %v506 = vld [vmem:[%s310 + $0x1fc] sm:$0xf]
        %v507 = vld [vmem:[%s310 + $0x200] sm:$0xf]
        %v508 = vld [vmem:[%s310 + $0x204] sm:$0xf]
        %v509 = vld [vmem:[%s310 + $0x208] sm:$0xf]
        %v510 = vld [vmem:[%s310 + $0x20c] sm:$0xf]
        %v511 = vld [vmem:[%s310 + $0x210] sm:$0xf]
        %v512 = vld [vmem:[%s310 + $0x214] sm:$0xf]
        %v513 = vld [vmem:[%s310 + $0x218] sm:$0xf]
        %v514 = vld [vmem:[%s310 + $0x21c] sm:$0xf]
        %v515 = vld [vmem:[%s310 + $0x220] sm:$0xf]
        %v516 = vld [vmem:[%s310 + $0x224] sm:$0xf]
        %v517 = vld [vmem:[%s310 + $0x228] sm:$0xf]
        %v518 = vld [vmem:[%s310 + $0x22c] sm:$0xf]
        %v519 = vld [vmem:[%s310 + $0x230] sm:$0xf]
        %v520 = vld [vmem:[%s310 + $0x234] sm:$0xf]
        %v521 = vld [vmem:[%s310 + $0x238] sm:$0xf]
        %v522 = vld [vmem:[%s310 + $0x23c] sm:$0xf]
        %v523 = vld [vmem:[%s310 + $0x240] sm:$0xf]
        %v524 = vld [vmem:[%s310 + $0x244] sm:$0xf]
        %v525 = vld [vmem:[%s310 + $0x248] sm:$0xf]
        %v526 = vld [vmem:[%s310 + $0x24c] sm:$0xf]
        %v527 = vld [vmem:[%s310 + $0x250] sm:$0xf]
        %v528 = vld [vmem:[%s310 + $0x254] sm:$0xf]
        %v529 = vld [vmem:[%s310 + $0x258] sm:$0xf]
        %v530 = vld [vmem:[%s310 + $0x25c] sm:$0xf]
        %v531 = vld [vmem:[%s310 + $0x260] sm:$0xf]
        %v532 = vld [vmem:[%s310 + $0x264] sm:$0xf]
        %v533 = vld [vmem:[%s310 + $0x268] sm:$0xf]
        %v534 = vld [vmem:[%s310 + $0x26c] sm:$0xf]
        %v535 = vld [vmem:[%s310 + $0x270] sm:$0xf]
        %v536 = vld [vmem:[%s310 + $0x274] sm:$0xf]
        %v537 = vld [vmem:[%s310 + $0x278] sm:$0xf]
        %v538 = vld [vmem:[%s310 + $0x27c] sm:$0xf]
        %v539 = vld [vmem:[%s310 + $0x280] sm:$0xf]
        %v540 = vld [vmem:[%s310 + $0x284] sm:$0xf]
        %v541 = vld [vmem:[%s310 + $0x288] sm:$0xf]
        %v542 = vld [vmem:[%s310 + $0x28c] sm:$0xf]
        %v543 = vld [vmem:[%s310 + $0x290] sm:$0xf]
        %v544 = vld [vmem:[%s310 + $0x294] sm:$0xf]
        %v545 = vld [vmem:[%s310 + $0x298] sm:$0xf]
        %v546 = vld [vmem:[%s310 + $0x29c] sm:$0xf]
        %v547 = vld [vmem:[%s310 + $0x2a0] sm:$0xf]
        %v548 = vld [vmem:[%s310 + $0x2a4] sm:$0xf]
        %v549 = vld [vmem:[%s310 + $0x2a8] sm:$0xf]
        %v550 = vld [vmem:[%s310 + $0x2ac] sm:$0xf]
        %v551 = vld [vmem:[%s310 + $0x2b0] sm:$0xf]
        %v552 = vld [vmem:[%s310 + $0x2b4] sm:$0xf]
        %v553 = vld [vmem:[%s310 + $0x2b8] sm:$0xf]
        %v554 = vld [vmem:[%s310 + $0x2bc] sm:$0xf]
        %v555 = vld [vmem:[%s310 + $0x2c0] sm:$0xf]
        %v556 = vld [vmem:[%s310 + $0x2c4] sm:$0xf]
        %v557 = vld [vmem:[%s310 + $0x2c8] sm:$0xf]
        %v558 = vld [vmem:[%s310 + $0x2cc] sm:$0xf]
        %v559 = vld [vmem:[%s310 + $0x2d0] sm:$0xf]
        %v560 = vld [vmem:[%s310 + $0x2d4] sm:$0xf]
        %v561 = vld [vmem:[%s310 + $0x2d8] sm:$0xf]
        %v562 = vld [vmem:[%s310 + $0x2dc] sm:$0xf]
        %v563 = vld [vmem:[%s310 + $0x2e0] sm:$0xf]
        %v564 = vld [vmem:[%s310 + $0x2e4] sm:$0xf]
        %v565 = vld [vmem:[%s310 + $0x2e8] sm:$0xf]
        %v566 = vld [vmem:[%s310 + $0x2ec] sm:$0xf]
        %v567 = vld [vmem:[%s310 + $0x2f0] sm:$0xf]
        %v568 = vld [vmem:[%s310 + $0x2f4] sm:$0xf]
        %v569 = vld [vmem:[%s310 + $0x2f8] sm:$0xf]
        %v570 = vld [vmem:[%s310 + $0x2fc] sm:$0xf]
        %v571 = vld [vmem:[%s310 + $0x300] sm:$0xf]
        %v572 = vld [vmem:[%s310 + $0x304] sm:$0xf]
        %v573 = vld [vmem:[%s310 + $0x308] sm:$0xf]
        %v574 = vld [vmem:[%s310 + $0x30c] sm:$0xf]
        %v575 = vld [vmem:[%s310 + $0x310] sm:$0xf]
        %v576 = vld [vmem:[%s310 + $0x314] sm:$0xf]
        %v577 = vld [vmem:[%s310 + $0x318] sm:$0xf]
        %v578 = vld [vmem:[%s310 + $0x31c] sm:$0xf]
        %v579 = vld [vmem:[%s310 + $0x320] sm:$0xf]
        %v580 = vld [vmem:[%s310 + $0x324] sm:$0xf]
        %v581 = vld [vmem:[%s310 + $0x328] sm:$0xf]
        %v582 = vld [vmem:[%s310 + $0x32c] sm:$0xf]
        %v583 = vld [vmem:[%s310 + $0x330] sm:$0xf]
        %v584 = vld [vmem:[%s310 + $0x334] sm:$0xf]
        %v585 = vld [vmem:[%s310 + $0x338] sm:$0xf]
        %v586 = vld [vmem:[%s310 + $0x33c] sm:$0xf]
        %v587 = vld [vmem:[%s310 + $0x340] sm:$0xf]
        %v588 = vld [vmem:[%s310 + $0x344] sm:$0xf]
        %v589 = vld [vmem:[%s310 + $0x348] sm:$0xf]
        %v590 = vld [vmem:[%s310 + $0x34c] sm:$0xf]
        %v591 = vld [vmem:[%s310 + $0x350] sm:$0xf]
        %v592 = vld [vmem:[%s310 + $0x354] sm:$0xf]
        %v593 = vld [vmem:[%s310 + $0x358] sm:$0xf]
        %v594 = vld [vmem:[%s310 + $0x35c] sm:$0xf]
        %v595 = vld [vmem:[%s310 + $0x360] sm:$0xf]
        %v596 = vld [vmem:[%s310 + $0x364] sm:$0xf]
        %v597 = vld [vmem:[%s310 + $0x368] sm:$0xf]
        %v598 = vld [vmem:[%s310 + $0x36c] sm:$0xf]
        %v599 = vld [vmem:[%s310 + $0x370] sm:$0xf]
        %v600 = vld [vmem:[%s310 + $0x374] sm:$0xf]
        %v601 = vld [vmem:[%s310 + $0x378] sm:$0xf]
        %v602 = vld [vmem:[%s310 + $0x37c] sm:$0xf]
        %v603 = vld [vmem:[%s310 + $0x380] sm:$0xf]
        %v604 = vld [vmem:[%s310 + $0x384] sm:$0xf]
        %v605 = vld [vmem:[%s310 + $0x388] sm:$0xf]
        %v606 = vld [vmem:[%s310 + $0x38c] sm:$0xf]
        %v607 = vld [vmem:[%s310 + $0x390] sm:$0xf]
        %v608 = vld [vmem:[%s310 + $0x394] sm:$0xf]
        %v609 = vld [vmem:[%s310 + $0x398] sm:$0xf]
        %v610 = vld [vmem:[%s310 + $0x39c] sm:$0xf]
        %v611 = vld [vmem:[%s310 + $0x3a0] sm:$0xf]
        %v612 = vld [vmem:[%s310 + $0x3a4] sm:$0xf]
        %v613 = vld [vmem:[%s310 + $0x3a8] sm:$0xf]
        %v614 = vld [vmem:[%s310 + $0x3ac] sm:$0xf]
        %v615 = vld [vmem:[%s310 + $0x3b0] sm:$0xf]
        %v616 = vld [vmem:[%s310 + $0x3b4] sm:$0xf]
        %v617 = vld [vmem:[%s310 + $0x3b8] sm:$0xf]
        %v618 = vld [vmem:[%s310 + $0x3bc] sm:$0xf]
        %v619 = vld [vmem:[%s310 + $0x3c0] sm:$0xf]
        %v620 = vld [vmem:[%s310 + $0x3c4] sm:$0xf]
        %v621 = vld [vmem:[%s310 + $0x3c8] sm:$0xf]
        %v622 = vld [vmem:[%s310 + $0x3cc] sm:$0xf]
        %v623 = vld [vmem:[%s310 + $0x3d0] sm:$0xf]
        %v624 = vld [vmem:[%s310 + $0x3d4] sm:$0xf]
        %v625 = vld [vmem:[%s310 + $0x3d8] sm:$0xf]
        %v626 = vld [vmem:[%s310 + $0x3dc] sm:$0xf]
        %v627 = vld [vmem:[%s310 + $0x3e0] sm:$0xf]
        %v628 = vld [vmem:[%s310 + $0x3e4] sm:$0xf]
        %v629 = vld [vmem:[%s310 + $0x3e8] sm:$0xf]
        %v630 = vld [vmem:[%s310 + $0x3ec] sm:$0xf]
        %v631 = vld [vmem:[%s310 + $0x3f0] sm:$0xf]
        %v632 = vld [vmem:[%s310 + $0x3f4] sm:$0xf]
        %v633 = vld [vmem:[%s310 + $0x3f8] sm:$0xf]
        %v634 = vld [vmem:[%s310 + $0x3fc] sm:$0xf]
        %v635 = vld [vmem:[#allocation4] sm:$0xf]
        %v636 = vld [vmem:[#allocation4 + $0x4] sm:$0xf]
        %v637 = vld [vmem:[#allocation4 + $0x8] sm:$0xf]
        %v638 = vld [vmem:[#allocation4 + $0xc] sm:$0xf]
        %v639 = vld [vmem:[#allocation4 + $0x10] sm:$0xf]
        %v640 = vld [vmem:[#allocation4 + $0x14] sm:$0xf]
        %v641 = vld [vmem:[#allocation4 + $0x18] sm:$0xf]
        %v642 = vld [vmem:[#allocation4 + $0x1c] sm:$0xf]
        %v643 = vld [vmem:[#allocation4 + $0x20] sm:$0xf]
        %v644 = vld [vmem:[#allocation4 + $0x24] sm:$0xf]
        %v645 = vld [vmem:[#allocation4 + $0x28] sm:$0xf]
        %v646 = vld [vmem:[#allocation4 + $0x2c] sm:$0xf]
        %v647 = vld [vmem:[#allocation4 + $0x30] sm:$0xf]
        %v648 = vld [vmem:[#allocation4 + $0x34] sm:$0xf]
        %v649 = vld [vmem:[#allocation4 + $0x38] sm:$0xf]
        %v650 = vld [vmem:[#allocation4 + $0x3c] sm:$0xf]
        %v651 = vld [vmem:[#allocation6] sm:$0x1]
        %v653 = vlaneseq
        %v654 = vshrl.u32 %v653, 7
        %v655 = vsub.s32 0, %v654
        %v656 = vrot.slane %v651, %v655
        %v914 = vunpack.c.l.b16 %v379
        %v915 = vunpack.c.l.b16 %v380
        %v916 = vunpack.c.l.b16 %v381
        %v917 = vunpack.c.l.b16 %v382
        %v918 = vunpack.c.l.b16 %v383
        %v919 = vunpack.c.l.b16 %v384
        %v920 = vunpack.c.l.b16 %v385
        %v921 = vunpack.c.l.b16 %v386
        %v922 = vunpack.c.l.b16 %v387
        %v923 = vunpack.c.l.b16 %v388
        %v924 = vunpack.c.l.b16 %v389
        %v925 = vunpack.c.l.b16 %v390
        %v926 = vunpack.c.l.b16 %v391
        %v927 = vunpack.c.l.b16 %v392
        %v928 = vunpack.c.l.b16 %v393
        %v929 = vunpack.c.l.b16 %v394
        %v930 = vunpack.c.l.b16 %v395
        %v931 = vunpack.c.l.b16 %v396
        %v932 = vunpack.c.l.b16 %v397
        %v933 = vunpack.c.l.b16 %v398
        %v934 = vunpack.c.l.b16 %v399
        %v935 = vunpack.c.l.b16 %v400
        %v936 = vunpack.c.l.b16 %v401
        %v937 = vunpack.c.l.b16 %v402
        %v938 = vunpack.c.l.b16 %v403
        %v939 = vunpack.c.l.b16 %v404
        %v940 = vunpack.c.l.b16 %v405
        %v941 = vunpack.c.l.b16 %v406
        %v942 = vunpack.c.l.b16 %v407
        %v943 = vunpack.c.l.b16 %v408
        %v944 = vunpack.c.l.b16 %v409
        %v945 = vunpack.c.l.b16 %v410
        %v946 = vunpack.c.l.b16 %v411
        %v947 = vunpack.c.l.b16 %v412
        %v948 = vunpack.c.l.b16 %v413
        %v949 = vunpack.c.l.b16 %v414
        %v950 = vunpack.c.l.b16 %v415
        %v951 = vunpack.c.l.b16 %v416
        %v952 = vunpack.c.l.b16 %v417
        %v953 = vunpack.c.l.b16 %v418
        %v954 = vunpack.c.l.b16 %v419
        %v955 = vunpack.c.l.b16 %v420
        %v956 = vunpack.c.l.b16 %v421
        %v957 = vunpack.c.l.b16 %v422
        %v958 = vunpack.c.l.b16 %v423
        %v959 = vunpack.c.l.b16 %v424
        %v960 = vunpack.c.l.b16 %v425
        %v961 = vunpack.c.l.b16 %v426
        %v962 = vunpack.c.l.b16 %v427
        %v963 = vunpack.c.l.b16 %v428
        %v964 = vunpack.c.l.b16 %v429
        %v965 = vunpack.c.l.b16 %v430
        %v966 = vunpack.c.l.b16 %v431
        %v967 = vunpack.c.l.b16 %v432
        %v968 = vunpack.c.l.b16 %v433
        %v969 = vunpack.c.l.b16 %v434
        %v970 = vunpack.c.l.b16 %v435
        %v971 = vunpack.c.l.b16 %v436
        %v972 = vunpack.c.l.b16 %v437
        %v973 = vunpack.c.l.b16 %v438
        %v974 = vunpack.c.l.b16 %v439
        %v975 = vunpack.c.l.b16 %v440
        %v976 = vunpack.c.l.b16 %v441
        %v977 = vunpack.c.l.b16 %v442
        %v978 = vunpack.c.l.b16 %v443
        %v979 = vunpack.c.l.b16 %v444
        %v980 = vunpack.c.l.b16 %v445
        %v981 = vunpack.c.l.b16 %v446
        %v982 = vunpack.c.l.b16 %v447
        %v983 = vunpack.c.l.b16 %v448
        %v984 = vunpack.c.l.b16 %v449
        %v985 = vunpack.c.l.b16 %v450
        %v986 = vunpack.c.l.b16 %v451
        %v987 = vunpack.c.l.b16 %v452
        %v988 = vunpack.c.l.b16 %v453
        %v989 = vunpack.c.l.b16 %v454
        %v990 = vunpack.c.l.b16 %v455
        %v991 = vunpack.c.l.b16 %v456
        %v992 = vunpack.c.l.b16 %v457
        %v993 = vunpack.c.l.b16 %v458
        %v994 = vunpack.c.l.b16 %v459
        %v995 = vunpack.c.l.b16 %v460
        %v996 = vunpack.c.l.b16 %v461
        %v997 = vunpack.c.l.b16 %v462
        %v998 = vunpack.c.l.b16 %v463
        %v999 = vunpack.c.l.b16 %v464
        %v1000 = vunpack.c.l.b16 %v465
        %v1001 = vunpack.c.l.b16 %v466
        %v1002 = vunpack.c.l.b16 %v467
        %v1003 = vunpack.c.l.b16 %v468
        %v1004 = vunpack.c.l.b16 %v469
        %v1005 = vunpack.c.l.b16 %v470
        %v1006 = vunpack.c.l.b16 %v471
        %v1007 = vunpack.c.l.b16 %v472
        %v1008 = vunpack.c.l.b16 %v473
        %v1009 = vunpack.c.l.b16 %v474
        %v1010 = vunpack.c.l.b16 %v475
        %v1011 = vunpack.c.l.b16 %v476
        %v1012 = vunpack.c.l.b16 %v477
        %v1013 = vunpack.c.l.b16 %v478
        %v1014 = vunpack.c.l.b16 %v479
        %v1015 = vunpack.c.l.b16 %v480
        %v1016 = vunpack.c.l.b16 %v481
        %v1017 = vunpack.c.l.b16 %v482
        %v1018 = vunpack.c.l.b16 %v483
        %v1019 = vunpack.c.l.b16 %v484
        %v1020 = vunpack.c.l.b16 %v485
        %v1021 = vunpack.c.l.b16 %v486
        %v1022 = vunpack.c.l.b16 %v487
        %v1023 = vunpack.c.l.b16 %v488
        %v1024 = vunpack.c.l.b16 %v489
        %v1025 = vunpack.c.l.b16 %v490
        %v1026 = vunpack.c.l.b16 %v491
        %v1027 = vunpack.c.l.b16 %v492
        %v1028 = vunpack.c.l.b16 %v493
        %v1029 = vunpack.c.l.b16 %v494
        %v1030 = vunpack.c.l.b16 %v495
        %v1031 = vunpack.c.l.b16 %v496
        %v1032 = vunpack.c.l.b16 %v497
        %v1033 = vunpack.c.l.b16 %v498
        %v1034 = vunpack.c.l.b16 %v499
        %v1035 = vunpack.c.l.b16 %v500
        %v1036 = vunpack.c.l.b16 %v501
        %v1037 = vunpack.c.l.b16 %v502
        %v1038 = vunpack.c.l.b16 %v503
        %v1039 = vunpack.c.l.b16 %v504
        %v1040 = vunpack.c.l.b16 %v505
        %v1041 = vunpack.c.l.b16 %v506
        %v1042 = vunpack.c.l.b16 %v507
        %v1043 = vunpack.c.l.b16 %v508
        %v1044 = vunpack.c.l.b16 %v509
        %v1045 = vunpack.c.l.b16 %v510
        %v1046 = vunpack.c.l.b16 %v511
        %v1047 = vunpack.c.l.b16 %v512
        %v1048 = vunpack.c.l.b16 %v513
        %v1049 = vunpack.c.l.b16 %v514
        %v1050 = vunpack.c.l.b16 %v515
        %v1051 = vunpack.c.l.b16 %v516
        %v1052 = vunpack.c.l.b16 %v517
        %v1053 = vunpack.c.l.b16 %v518
        %v1054 = vunpack.c.l.b16 %v519
        %v1055 = vunpack.c.l.b16 %v520
        %v1056 = vunpack.c.l.b16 %v521
        %v1057 = vunpack.c.l.b16 %v522
        %v1058 = vunpack.c.l.b16 %v523
        %v1059 = vunpack.c.l.b16 %v524
        %v1060 = vunpack.c.l.b16 %v525
        %v1061 = vunpack.c.l.b16 %v526
        %v1062 = vunpack.c.l.b16 %v527
        %v1063 = vunpack.c.l.b16 %v528
        %v1064 = vunpack.c.l.b16 %v529
        %v1065 = vunpack.c.l.b16 %v530
        %v1066 = vunpack.c.l.b16 %v531
        %v1067 = vunpack.c.l.b16 %v532
        %v1068 = vunpack.c.l.b16 %v533
        %v1069 = vunpack.c.l.b16 %v534
        %v1070 = vunpack.c.l.b16 %v535
        %v1071 = vunpack.c.l.b16 %v536
        %v1072 = vunpack.c.l.b16 %v537
        %v1073 = vunpack.c.l.b16 %v538
        %v1074 = vunpack.c.l.b16 %v539
        %v1075 = vunpack.c.l.b16 %v540
        %v1076 = vunpack.c.l.b16 %v541
        %v1077 = vunpack.c.l.b16 %v542
        %v1078 = vunpack.c.l.b16 %v543
        %v1079 = vunpack.c.l.b16 %v544
        %v1080 = vunpack.c.l.b16 %v545
        %v1081 = vunpack.c.l.b16 %v546
        %v1082 = vunpack.c.l.b16 %v547
        %v1083 = vunpack.c.l.b16 %v548
        %v1084 = vunpack.c.l.b16 %v549
        %v1085 = vunpack.c.l.b16 %v550
        %v1086 = vunpack.c.l.b16 %v551
        %v1087 = vunpack.c.l.b16 %v552
        %v1088 = vunpack.c.l.b16 %v553
        %v1089 = vunpack.c.l.b16 %v554
        %v1090 = vunpack.c.l.b16 %v555
        %v1091 = vunpack.c.l.b16 %v556
        %v1092 = vunpack.c.l.b16 %v557
        %v1093 = vunpack.c.l.b16 %v558
        %v1094 = vunpack.c.l.b16 %v559
        %v1095 = vunpack.c.l.b16 %v560
        %v1096 = vunpack.c.l.b16 %v561
        %v1097 = vunpack.c.l.b16 %v562
        %v1098 = vunpack.c.l.b16 %v563
        %v1099 = vunpack.c.l.b16 %v564
        %v1100 = vunpack.c.l.b16 %v565
        %v1101 = vunpack.c.l.b16 %v566
        %v1102 = vunpack.c.l.b16 %v567
        %v1103 = vunpack.c.l.b16 %v568
        %v1104 = vunpack.c.l.b16 %v569
        %v1105 = vunpack.c.l.b16 %v570
        %v1106 = vunpack.c.l.b16 %v571
        %v1107 = vunpack.c.l.b16 %v572
        %v1108 = vunpack.c.l.b16 %v573
        %v1109 = vunpack.c.l.b16 %v574
        %v1110 = vunpack.c.l.b16 %v575
        %v1111 = vunpack.c.l.b16 %v576
        %v1112 = vunpack.c.l.b16 %v577
        %v1113 = vunpack.c.l.b16 %v578
        %v1114 = vunpack.c.l.b16 %v579
        %v1115 = vunpack.c.l.b16 %v580
        %v1116 = vunpack.c.l.b16 %v581
        %v1117 = vunpack.c.l.b16 %v582
        %v1118 = vunpack.c.l.b16 %v583
        %v1119 = vunpack.c.l.b16 %v584
        %v1120 = vunpack.c.l.b16 %v585
        %v1121 = vunpack.c.l.b16 %v586
        %v1122 = vunpack.c.l.b16 %v587
        %v1123 = vunpack.c.l.b16 %v588
        %v1124 = vunpack.c.l.b16 %v589
        %v1125 = vunpack.c.l.b16 %v590
        %v1126 = vunpack.c.l.b16 %v591
        %v1127 = vunpack.c.l.b16 %v592
        %v1128 = vunpack.c.l.b16 %v593
        %v1129 = vunpack.c.l.b16 %v594
        %v1130 = vunpack.c.l.b16 %v595
        %v1131 = vunpack.c.l.b16 %v596
        %v1132 = vunpack.c.l.b16 %v597
        %v1133 = vunpack.c.l.b16 %v598
        %v1134 = vunpack.c.l.b16 %v599
        %v1135 = vunpack.c.l.b16 %v600
        %v1136 = vunpack.c.l.b16 %v601
        %v1137 = vunpack.c.l.b16 %v602
        %v1138 = vunpack.c.l.b16 %v603
        %v1139 = vunpack.c.l.b16 %v604
        %v1140 = vunpack.c.l.b16 %v605
        %v1141 = vunpack.c.l.b16 %v606
        %v1142 = vunpack.c.l.b16 %v607
        %v1143 = vunpack.c.l.b16 %v608
        %v1144 = vunpack.c.l.b16 %v609
        %v1145 = vunpack.c.l.b16 %v610
        %v1146 = vunpack.c.l.b16 %v611
        %v1147 = vunpack.c.l.b16 %v612
        %v1148 = vunpack.c.l.b16 %v613
        %v1149 = vunpack.c.l.b16 %v614
        %v1150 = vunpack.c.l.b16 %v615
        %v1151 = vunpack.c.l.b16 %v616
        %v1152 = vunpack.c.l.b16 %v617
        %v1153 = vunpack.c.l.b16 %v618
        %v1154 = vunpack.c.l.b16 %v619
        %v1155 = vunpack.c.l.b16 %v620
        %v1156 = vunpack.c.l.b16 %v621
        %v1157 = vunpack.c.l.b16 %v622
        %v1158 = vunpack.c.l.b16 %v623
        %v1159 = vunpack.c.l.b16 %v624
        %v1160 = vunpack.c.l.b16 %v625
        %v1161 = vunpack.c.l.b16 %v626
        %v1162 = vunpack.c.l.b16 %v627
        %v1163 = vunpack.c.l.b16 %v628
        %v1164 = vunpack.c.l.b16 %v629
        %v1165 = vunpack.c.l.b16 %v630
        %v1166 = vunpack.c.l.b16 %v631
        %v1167 = vunpack.c.l.b16 %v632
        %v1168 = vunpack.c.l.b16 %v633
        %v1169 = vunpack.c.l.b16 %v634
        %v1170 = vpack.c.b16 %v915, %v914
        %v1171 = vpack.c.b16 %v917, %v916
        %v1172 = vpack.c.b16 %v919, %v918
        %v1173 = vpack.c.b16 %v921, %v920
        %v1174 = vpack.c.b16 %v923, %v922
        %v1175 = vpack.c.b16 %v925, %v924
        %v1176 = vpack.c.b16 %v927, %v926
        %v1177 = vpack.c.b16 %v929, %v928
        %v1178 = vpack.c.b16 %v931, %v930
        %v1179 = vpack.c.b16 %v933, %v932
        %v1180 = vpack.c.b16 %v935, %v934
        %v1181 = vpack.c.b16 %v937, %v936
        %v1182 = vpack.c.b16 %v939, %v938
        %v1183 = vpack.c.b16 %v941, %v940
        %v1184 = vpack.c.b16 %v943, %v942
        %v1185 = vpack.c.b16 %v945, %v944
        %v1186 = vpack.c.b16 %v947, %v946
        %v1187 = vpack.c.b16 %v949, %v948
        %v1188 = vpack.c.b16 %v951, %v950
        %v1189 = vpack.c.b16 %v953, %v952
        %v1190 = vpack.c.b16 %v955, %v954
        %v1191 = vpack.c.b16 %v957, %v956
        %v1192 = vpack.c.b16 %v959, %v958
        %v1193 = vpack.c.b16 %v961, %v960
        %v1194 = vpack.c.b16 %v963, %v962
        %v1195 = vpack.c.b16 %v965, %v964
        %v1196 = vpack.c.b16 %v967, %v966
        %v1197 = vpack.c.b16 %v969, %v968
        %v1198 = vpack.c.b16 %v971, %v970
        %v1199 = vpack.c.b16 %v973, %v972
        %v1200 = vpack.c.b16 %v975, %v974
        %v1201 = vpack.c.b16 %v977, %v976
        %v1202 = vpack.c.b16 %v979, %v978
        %v1203 = vpack.c.b16 %v981, %v980
        %v1204 = vpack.c.b16 %v983, %v982
        %v1205 = vpack.c.b16 %v985, %v984
        %v1206 = vpack.c.b16 %v987, %v986
        %v1207 = vpack.c.b16 %v989, %v988
        %v1208 = vpack.c.b16 %v991, %v990
        %v1209 = vpack.c.b16 %v993, %v992
        %v1210 = vpack.c.b16 %v995, %v994
        %v1211 = vpack.c.b16 %v997, %v996
        %v1212 = vpack.c.b16 %v999, %v998
        %v1213 = vpack.c.b16 %v1001, %v1000
        %v1214 = vpack.c.b16 %v1003, %v1002
        %v1215 = vpack.c.b16 %v1005, %v1004
        %v1216 = vpack.c.b16 %v1007, %v1006
        %v1217 = vpack.c.b16 %v1009, %v1008
        %v1218 = vpack.c.b16 %v1011, %v1010
        %v1219 = vpack.c.b16 %v1013, %v1012
        %v1220 = vpack.c.b16 %v1015, %v1014
        %v1221 = vpack.c.b16 %v1017, %v1016
        %v1222 = vpack.c.b16 %v1019, %v1018
        %v1223 = vpack.c.b16 %v1021, %v1020
        %v1224 = vpack.c.b16 %v1023, %v1022
        %v1225 = vpack.c.b16 %v1025, %v1024
        %v1226 = vpack.c.b16 %v1027, %v1026
        %v1227 = vpack.c.b16 %v1029, %v1028
        %v1228 = vpack.c.b16 %v1031, %v1030
        %v1229 = vpack.c.b16 %v1033, %v1032
        %v1230 = vpack.c.b16 %v1035, %v1034
        %v1231 = vpack.c.b16 %v1037, %v1036
        %v1232 = vpack.c.b16 %v1039, %v1038
        %v1233 = vpack.c.b16 %v1041, %v1040
        %v1234 = vpack.c.b16 %v1043, %v1042
        %v1235 = vpack.c.b16 %v1045, %v1044
        %v1236 = vpack.c.b16 %v1047, %v1046
        %v1237 = vpack.c.b16 %v1049, %v1048
        %v1238 = vpack.c.b16 %v1051, %v1050
        %v1239 = vpack.c.b16 %v1053, %v1052
        %v1240 = vpack.c.b16 %v1055, %v1054
        %v1241 = vpack.c.b16 %v1057, %v1056
        %v1242 = vpack.c.b16 %v1059, %v1058
        %v1243 = vpack.c.b16 %v1061, %v1060
        %v1244 = vpack.c.b16 %v1063, %v1062
        %v1245 = vpack.c.b16 %v1065, %v1064
        %v1246 = vpack.c.b16 %v1067, %v1066
        %v1247 = vpack.c.b16 %v1069, %v1068
        %v1248 = vpack.c.b16 %v1071, %v1070
        %v1249 = vpack.c.b16 %v1073, %v1072
        %v1250 = vpack.c.b16 %v1075, %v1074
        %v1251 = vpack.c.b16 %v1077, %v1076
        %v1252 = vpack.c.b16 %v1079, %v1078
        %v1253 = vpack.c.b16 %v1081, %v1080
        %v1254 = vpack.c.b16 %v1083, %v1082
        %v1255 = vpack.c.b16 %v1085, %v1084
        %v1256 = vpack.c.b16 %v1087, %v1086
        %v1257 = vpack.c.b16 %v1089, %v1088
        %v1258 = vpack.c.b16 %v1091, %v1090
        %v1259 = vpack.c.b16 %v1093, %v1092
        %v1260 = vpack.c.b16 %v1095, %v1094
        %v1261 = vpack.c.b16 %v1097, %v1096
        %v1262 = vpack.c.b16 %v1099, %v1098
        %v1263 = vpack.c.b16 %v1101, %v1100
        %v1264 = vpack.c.b16 %v1103, %v1102
        %v1265 = vpack.c.b16 %v1105, %v1104
        %v1266 = vpack.c.b16 %v1107, %v1106
        %v1267 = vpack.c.b16 %v1109, %v1108
        %v1268 = vpack.c.b16 %v1111, %v1110
        %v1269 = vpack.c.b16 %v1113, %v1112
        %v1270 = vpack.c.b16 %v1115, %v1114
        %v1271 = vpack.c.b16 %v1117, %v1116
        %v1272 = vpack.c.b16 %v1119, %v1118
        %v1273 = vpack.c.b16 %v1121, %v1120
        %v1274 = vpack.c.b16 %v1123, %v1122
        %v1275 = vpack.c.b16 %v1125, %v1124
        %v1276 = vpack.c.b16 %v1127, %v1126
        %v1277 = vpack.c.b16 %v1129, %v1128
        %v1278 = vpack.c.b16 %v1131, %v1130
        %v1279 = vpack.c.b16 %v1133, %v1132
        %v1280 = vpack.c.b16 %v1135, %v1134
        %v1281 = vpack.c.b16 %v1137, %v1136
        %v1282 = vpack.c.b16 %v1139, %v1138
        %v1283 = vpack.c.b16 %v1141, %v1140
        %v1284 = vpack.c.b16 %v1143, %v1142
        %v1285 = vpack.c.b16 %v1145, %v1144
        %v1286 = vpack.c.b16 %v1147, %v1146
        %v1287 = vpack.c.b16 %v1149, %v1148
        %v1288 = vpack.c.b16 %v1151, %v1150
        %v1289 = vpack.c.b16 %v1153, %v1152
        %v1290 = vpack.c.b16 %v1155, %v1154
        %v1291 = vpack.c.b16 %v1157, %v1156
        %v1292 = vpack.c.b16 %v1159, %v1158
        %v1293 = vpack.c.b16 %v1161, %v1160
        %v1294 = vpack.c.b16 %v1163, %v1162
        %v1295 = vpack.c.b16 %v1165, %v1164
        %v1296 = vpack.c.b16 %v1167, %v1166
        %v1297 = vpack.c.b16 %v1169, %v1168
        %v1442 = vunpack.c.l.b16 %v635
        %v1443 = vunpack.c.l.b16 %v636
        %v1444 = vunpack.c.l.b16 %v637
        %v1445 = vunpack.c.l.b16 %v638
        %v1446 = vunpack.c.l.b16 %v639
        %v1447 = vunpack.c.l.b16 %v640
        %v1448 = vunpack.c.l.b16 %v641
        %v1449 = vunpack.c.l.b16 %v642
        %v1450 = vunpack.c.l.b16 %v643
        %v1451 = vunpack.c.l.b16 %v644
        %v1452 = vunpack.c.l.b16 %v645
        %v1453 = vunpack.c.l.b16 %v646
        %v1454 = vunpack.c.l.b16 %v647
        %v1455 = vunpack.c.l.b16 %v648
        %v1456 = vunpack.c.l.b16 %v649
        %v1457 = vunpack.c.l.b16 %v650
        %v1458 = vpack.c.b16 %v1443, %v1442
        %v1459 = vpack.c.b16 %v1445, %v1444
        %v1460 = vpack.c.b16 %v1447, %v1446
        %v1461 = vpack.c.b16 %v1449, %v1448
        %v1462 = vpack.c.b16 %v1451, %v1450
        %v1463 = vpack.c.b16 %v1453, %v1452
        %v1464 = vpack.c.b16 %v1455, %v1454
        %v1465 = vpack.c.b16 %v1457, %v1456
        %1474 = vmatprep.subr.bf16.mxu0 0
        %1475 = vmatpush1.bf16.msra.mxu0 %v1458
        %1476 = vmatprep.subr.bf16.mxu0 0
        %1477 = vmatpush1.bf16.msra.mxu0 %v1459
        %1478 = vmatprep.subr.bf16.mxu0 0
        %1479 = vmatpush1.bf16.msra.mxu0 %v1460
        %1480 = vmatprep.subr.bf16.mxu0 0
        %1481 = vmatpush1.bf16.msra.mxu0 %v1461
        %1482 = vmatprep.subr.bf16.mxu0 0
        %1483 = vmatpush1.bf16.msra.mxu0 %v1462
        %1484 = vmatprep.subr.bf16.mxu0 0
        %1485 = vmatpush1.bf16.msra.mxu0 %v1463
        %1486 = vmatprep.subr.bf16.mxu0 0
        %1487 = vmatpush1.bf16.msra.mxu0 %v1464
        %1488 = vmatprep.subr.bf16.mxu0 0
        %1489 = vmatpush1.bf16.msra.mxu0 %v1465
        %1490 = vmatprep.subr.bf16.mxu0 0
        %1491 = vmatpush1.bf16.msra.mxu0 0
        %1492 = vmatprep.subr.bf16.mxu0 0
        %1493 = vmatpush1.bf16.msra.mxu0 0
        %1494 = vmatprep.subr.bf16.mxu0 0
        %1495 = vmatpush1.bf16.msra.mxu0 0
        %1496 = vmatprep.subr.bf16.mxu0 0
        %1497 = vmatpush1.bf16.msra.mxu0 0
        %1498 = vmatprep.subr.bf16.mxu0 0
        %1499 = vmatpush1.bf16.msra.mxu0 0
        %1500 = vmatprep.subr.bf16.mxu0 0
        %1501 = vmatpush1.bf16.msra.mxu0 0
        %1502 = vmatprep.subr.bf16.mxu0 0
        %1503 = vmatpush1.bf16.msra.mxu0 0
        %1504 = vmatprep.subr.bf16.mxu0 0
        %1505 = vmatpush1.bf16.msra.mxu0 0
        %1506 = vmatprep.mubr.bf16.mxu0 0
        %1507 = vmatmul.mubr.bf16.gmra.mrb[0].mxu0 %v1170
        %v1508 = vpop.f32.mrb[0].mxu0
        %v1509 = vadd.f32 %v656, %v1508
        %v1510 = vpop.f32.mrb[0].mxu0
        %v1511 = vpop.f32.mrb[0].mxu0
        %v1512 = vadd.f32 %v656, %v1511
        %v1513 = vpop.f32.mrb[0].mxu0
        %1514 = vmatprep.mubr.bf16.mxu0 0
        %1515 = vmatmul.mubr.bf16.gmra.mrb[0].mxu0 %v1171
        %v1516 = vpop.f32.mrb[0].mxu0
        %v1517 = vadd.f32 %v656, %v1516
        %v1518 = vpop.f32.mrb[0].mxu0
        %v1519 = vpop.f32.mrb[0].mxu0
        %v1520 = vadd.f32 %v656, %v1519
        %v1521 = vpop.f32.mrb[0].mxu0
        %1522 = vmatprep.mubr.bf16.mxu0 0
        %1523 = vmatmul.mubr.bf16.gmra.mrb[0].mxu0 %v1172
        %v1524 = vpop.f32.mrb[0].mxu0
        %v1525 = vadd.f32 %v656, %v1524
        %v1526 = vpop.f32.mrb[0].mxu0
        %v1527 = vpop.f32.mrb[0].mxu0
        %v1528 = vadd.f32 %v656, %v1527
        %v1529 = vpop.f32.mrb[0].mxu0
        %1530 = vmatprep.mubr.bf16.mxu0 0
        %1531 = vmatmul.mubr.bf16.gmra.mrb[0].mxu0 %v1173
        %v1532 = vpop.f32.mrb[0].mxu0
        %v1533 = vadd.f32 %v656, %v1532
        %v1534 = vpop.f32.mrb[0].mxu0
        %v1535 = vpop.f32.mrb[0].mxu0
        %v1536 = vadd.f32 %v656, %v1535
        %v1537 = vpop.f32.mrb[0].mxu0
        %1538 = vmatprep.mubr.bf16.mxu0 0
        %1539 = vmatmul.mubr.bf16.gmra.mrb[0].mxu0 %v1174
        %v1540 = vpop.f32.mrb[0].mxu0
        %v1541 = vadd.f32 %v656, %v1540
        %v1542 = vpop.f32.mrb[0].mxu0
        %v1543 = vpop.f32.mrb[0].mxu0
        %v1544 = vadd.f32 %v656, %v1543
        %v1545 = vpop.f32.mrb[0].mxu0
        %1546 = vmatprep.mubr.bf16.mxu0 0
        %1547 = vmatmul.mubr.bf16.gmra.mrb[0].mxu0 %v1175
        %v1548 = vpop.f32.mrb[0].mxu0
        %v1549 = vadd.f32 %v656, %v1548
        %v1550 = vpop.f32.mrb[0].mxu0
        %v1551 = vpop.f32.mrb[0].mxu0
        %v1552 = vadd.f32 %v656, %v1551
        %v1553 = vpop.f32.mrb[0].mxu0
        %1554 = vmatprep.mubr.bf16.mxu0 0
        %1555 = vmatmul.mubr.bf16.gmra.mrb[0].mxu0 %v1176
        %v1556 = vpop.f32.mrb[0].mxu0
        %v1557 = vadd.f32 %v656, %v1556
        %v1558 = vpop.f32.mrb[0].mxu0
        %v1559 = vpop.f32.mrb[0].mxu0
        %v1560 = vadd.f32 %v656, %v1559
        %v1561 = vpop.f32.mrb[0].mxu0
        %1562 = vmatprep.mubr.bf16.mxu0 0
        %1563 = vmatmul.mubr.bf16.gmra.mrb[0].mxu0 %v1177
        %v1564 = vpop.f32.mrb[0].mxu0
        %v1565 = vadd.f32 %v656, %v1564
        %v1566 = vpop.f32.mrb[0].mxu0
        %v1567 = vpop.f32.mrb[0].mxu0
        %v1568 = vadd.f32 %v656, %v1567
        %v1569 = vpop.f32.mrb[0].mxu0
        %1570 = vmatprep.mubr.bf16.mxu0 0
        %1571 = vmatmul.mubr.bf16.gmra.mrb[0].mxu0 %v1178
        %v1572 = vpop.f32.mrb[0].mxu0
        %v1573 = vadd.f32 %v656, %v1572
        %v1574 = vpop.f32.mrb[0].mxu0
        %v1575 = vpop.f32.mrb[0].mxu0
        %v1576 = vadd.f32 %v656, %v1575
        %v1577 = vpop.f32.mrb[0].mxu0
        %1578 = vmatprep.mubr.bf16.mxu0 0
        %1579 = vmatmul.mubr.bf16.gmra.mrb[0].mxu0 %v1179
        %v1580 = vpop.f32.mrb[0].mxu0
        %v1581 = vadd.f32 %v656, %v1580
        %v1582 = vpop.f32.mrb[0].mxu0
        %v1583 = vpop.f32.mrb[0].mxu0
        %v1584 = vadd.f32 %v656, %v1583
        %v1585 = vpop.f32.mrb[0].mxu0
        %1586 = vmatprep.mubr.bf16.mxu0 0
        %1587 = vmatmul.mubr.bf16.gmra.mrb[0].mxu0 %v1180
        %v1588 = vpop.f32.mrb[0].mxu0
        %v1589 = vadd.f32 %v656, %v1588
        %v1590 = vpop.f32.mrb[0].mxu0
        %v1591 = vpop.f32.mrb[0].mxu0
        %v1592 = vadd.f32 %v656, %v1591
        %v1593 = vpop.f32.mrb[0].mxu0
        %1594 = vmatprep.mubr.bf16.mxu0 0
        %1595 = vmatmul.mubr.bf16.gmra.mrb[0].mxu0 %v1181
        %v1596 = vpop.f32.mrb[0].mxu0
        %v1597 = vadd.f32 %v656, %v1596
        %v1598 = vpop.f32.mrb[0].mxu0
        %v1599 = vpop.f32.mrb[0].mxu0
        %v1600 = vadd.f32 %v656, %v1599
        %v1601 = vpop.f32.mrb[0].mxu0
        %1602 = vmatprep.mubr.bf16.mxu0 0
        %1603 = vmatmul.mubr.bf16.gmra.mrb[0].mxu0 %v1182
        %v1604 = vpop.f32.mrb[0].mxu0
        %v1605 = vadd.f32 %v656, %v1604
        %v1606 = vpop.f32.mrb[0].mxu0
        %v1607 = vpop.f32.mrb[0].mxu0
        %v1608 = vadd.f32 %v656, %v1607
        %v1609 = vpop.f32.mrb[0].mxu0
        %1610 = vmatprep.mubr.bf16.mxu0 0
        %1611 = vmatmul.mubr.bf16.gmra.mrb[0].mxu0 %v1183
        %v1612 = vpop.f32.mrb[0].mxu0
        %v1613 = vadd.f32 %v656, %v1612
        %v1614 = vpop.f32.mrb[0].mxu0
        %v1615 = vpop.f32.mrb[0].mxu0
        %v1616 = vadd.f32 %v656, %v1615
        %v1617 = vpop.f32.mrb[0].mxu0
        %1618 = vmatprep.mubr.bf16.mxu0 0
        %1619 = vmatmul.mubr.bf16.gmra.mrb[0].mxu0 %v1184
        %v1620 = vpop.f32.mrb[0].mxu0
        %v1621 = vadd.f32 %v656, %v1620
        %v1622 = vpop.f32.mrb[0].mxu0
        %v1623 = vpop.f32.mrb[0].mxu0
        %v1624 = vadd.f32 %v656, %v1623
        %v1625 = vpop.f32.mrb[0].mxu0
        %1626 = vmatprep.mubr.bf16.mxu0 0
        %1627 = vmatmul.mubr.bf16.gmra.mrb[0].mxu0 %v1185
        %v1628 = vpop.f32.mrb[0].mxu0
        %v1629 = vadd.f32 %v656, %v1628
        %v1630 = vpop.f32.mrb[0].mxu0
        %v1631 = vpop.f32.mrb[0].mxu0
        %v1632 = vadd.f32 %v656, %v1631
        %v1633 = vpop.f32.mrb[0].mxu0
        %1634 = vmatprep.mubr.bf16.mxu0 0
        %1635 = vmatmul.mubr.bf16.gmra.mrb[0].mxu0 %v1186
        %v1636 = vpop.f32.mrb[0].mxu0
        %v1637 = vadd.f32 %v656, %v1636
        %v1638 = vpop.f32.mrb[0].mxu0
        %v1639 = vpop.f32.mrb[0].mxu0
        %v1640 = vadd.f32 %v656, %v1639
        %v1641 = vpop.f32.mrb[0].mxu0
        %1642 = vmatprep.mubr.bf16.mxu0 0
        %1643 = vmatmul.mubr.bf16.gmra.mrb[0].mxu0 %v1187
        %v1644 = vpop.f32.mrb[0].mxu0
        %v1645 = vadd.f32 %v656, %v1644
        %v1646 = vpop.f32.mrb[0].mxu0
        %v1647 = vpop.f32.mrb[0].mxu0
        %v1648 = vadd.f32 %v656, %v1647
        %v1649 = vpop.f32.mrb[0].mxu0
        %1650 = vmatprep.mubr.bf16.mxu0 0
        %1651 = vmatmul.mubr.bf16.gmra.mrb[0].mxu0 %v1188
        %v1652 = vpop.f32.mrb[0].mxu0
        %v1653 = vadd.f32 %v656, %v1652
        %v1654 = vpop.f32.mrb[0].mxu0
        %v1655 = vpop.f32.mrb[0].mxu0
        %v1656 = vadd.f32 %v656, %v1655
        %v1657 = vpop.f32.mrb[0].mxu0
        %1658 = vmatprep.mubr.bf16.mxu0 0
        %1659 = vmatmul.mubr.bf16.gmra.mrb[0].mxu0 %v1189
        %v1660 = vpop.f32.mrb[0].mxu0
        %v1661 = vadd.f32 %v656, %v1660
        %v1662 = vpop.f32.mrb[0].mxu0
        %v1663 = vpop.f32.mrb[0].mxu0
        %v1664 = vadd.f32 %v656, %v1663
        %v1665 = vpop.f32.mrb[0].mxu0
        %1666 = vmatprep.mubr.bf16.mxu0 0
        %1667 = vmatmul.mubr.bf16.gmra.mrb[0].mxu0 %v1190
        %v1668 = vpop.f32.mrb[0].mxu0
        %v1669 = vadd.f32 %v656, %v1668
        %v1670 = vpop.f32.mrb[0].mxu0
        %v1671 = vpop.f32.mrb[0].mxu0
        %v1672 = vadd.f32 %v656, %v1671
        %v1673 = vpop.f32.mrb[0].mxu0
        %1674 = vmatprep.mubr.bf16.mxu0 0
        %1675 = vmatmul.mubr.bf16.gmra.mrb[0].mxu0 %v1191
        %v1676 = vpop.f32.mrb[0].mxu0
        %v1677 = vadd.f32 %v656, %v1676
        %v1678 = vpop.f32.mrb[0].mxu0
        %v1679 = vpop.f32.mrb[0].mxu0
        %v1680 = vadd.f32 %v656, %v1679
        %v1681 = vpop.f32.mrb[0].mxu0
        %1682 = vmatprep.mubr.bf16.mxu0 0
        %1683 = vmatmul.mubr.bf16.gmra.mrb[0].mxu0 %v1192
        %v1684 = vpop.f32.mrb[0].mxu0
        %v1685 = vadd.f32 %v656, %v1684
        %v1686 = vpop.f32.mrb[0].mxu0
        %v1687 = vpop.f32.mrb[0].mxu0
        %v1688 = vadd.f32 %v656, %v1687
        %v1689 = vpop.f32.mrb[0].mxu0
        %1690 = vmatprep.mubr.bf16.mxu0 0
        %1691 = vmatmul.mubr.bf16.gmra.mrb[0].mxu0 %v1193
        %v1692 = vpop.f32.mrb[0].mxu0
        %v1693 = vadd.f32 %v656, %v1692
        %v1694 = vpop.f32.mrb[0].mxu0
        %v1695 = vpop.f32.mrb[0].mxu0
        %v1696 = vadd.f32 %v656, %v1695
        %v1697 = vpop.f32.mrb[0].mxu0
        %1698 = vmatprep.mubr.bf16.mxu0 0
        %1699 = vmatmul.mubr.bf16.gmra.mrb[0].mxu0 %v1194
        %v1700 = vpop.f32.mrb[0].mxu0
        %v1701 = vadd.f32 %v656, %v1700
        %v1702 = vpop.f32.mrb[0].mxu0
        %v1703 = vpop.f32.mrb[0].mxu0
        %v1704 = vadd.f32 %v656, %v1703
        %v1705 = vpop.f32.mrb[0].mxu0
        %1706 = vmatprep.mubr.bf16.mxu0 0
        %1707 = vmatmul.mubr.bf16.gmra.mrb[0].mxu0 %v1195
        %v1708 = vpop.f32.mrb[0].mxu0
        %v1709 = vadd.f32 %v656, %v1708
        %v1710 = vpop.f32.mrb[0].mxu0
        %v1711 = vpop.f32.mrb[0].mxu0
        %v1712 = vadd.f32 %v656, %v1711
        %v1713 = vpop.f32.mrb[0].mxu0
        %1714 = vmatprep.mubr.bf16.mxu0 0
        %1715 = vmatmul.mubr.bf16.gmra.mrb[0].mxu0 %v1196
        %v1716 = vpop.f32.mrb[0].mxu0
        %v1717 = vadd.f32 %v656, %v1716
        %v1718 = vpop.f32.mrb[0].mxu0
        %v1719 = vpop.f32.mrb[0].mxu0
        %v1720 = vadd.f32 %v656, %v1719
        %v1721 = vpop.f32.mrb[0].mxu0
        %1722 = vmatprep.mubr.bf16.mxu0 0
        %1723 = vmatmul.mubr.bf16.gmra.mrb[0].mxu0 %v1197
        %v1724 = vpop.f32.mrb[0].mxu0
        %v1725 = vadd.f32 %v656, %v1724
        %v1726 = vpop.f32.mrb[0].mxu0
        %v1727 = vpop.f32.mrb[0].mxu0
        %v1728 = vadd.f32 %v656, %v1727
        %v1729 = vpop.f32.mrb[0].mxu0
        %1730 = vmatprep.mubr.bf16.mxu0 0
        %1731 = vmatmul.mubr.bf16.gmra.mrb[0].mxu0 %v1198
        %v1732 = vpop.f32.mrb[0].mxu0
        %v1733 = vadd.f32 %v656, %v1732
        %v1734 = vpop.f32.mrb[0].mxu0
        %v1735 = vpop.f32.mrb[0].mxu0
        %v1736 = vadd.f32 %v656, %v1735
        %v1737 = vpop.f32.mrb[0].mxu0
        %1738 = vmatprep.mubr.bf16.mxu0 0
        %1739 = vmatmul.mubr.bf16.gmra.mrb[0].mxu0 %v1199
        %v1740 = vpop.f32.mrb[0].mxu0
        %v1741 = vadd.f32 %v656, %v1740
        %v1742 = vpop.f32.mrb[0].mxu0
        %v1743 = vpop.f32.mrb[0].mxu0
        %v1744 = vadd.f32 %v656, %v1743
        %v1745 = vpop.f32.mrb[0].mxu0
        %1746 = vmatprep.mubr.bf16.mxu0 0
        %1747 = vmatmul.mubr.bf16.gmra.mrb[0].mxu0 %v1200
        %v1748 = vpop.f32.mrb[0].mxu0
        %v1749 = vadd.f32 %v656, %v1748
        %v1750 = vpop.f32.mrb[0].mxu0
        %v1751 = vpop.f32.mrb[0].mxu0
        %v1752 = vadd.f32 %v656, %v1751
        %v1753 = vpop.f32.mrb[0].mxu0
        %1754 = vmatprep.mubr.bf16.mxu0 0
        %1755 = vmatmul.mubr.bf16.gmra.mrb[0].mxu0 %v1201
        %v1756 = vpop.f32.mrb[0].mxu0
        %v1757 = vadd.f32 %v656, %v1756
        %v1758 = vpop.f32.mrb[0].mxu0
        %v1759 = vpop.f32.mrb[0].mxu0
        %v1760 = vadd.f32 %v656, %v1759
        %v1761 = vpop.f32.mrb[0].mxu0
        %1762 = vmatprep.mubr.bf16.mxu0 0
        %1763 = vmatmul.mubr.bf16.gmra.mrb[0].mxu0 %v1202
        %v1764 = vpop.f32.mrb[0].mxu0
        %v1765 = vadd.f32 %v656, %v1764
        %v1766 = vpop.f32.mrb[0].mxu0
        %v1767 = vpop.f32.mrb[0].mxu0
        %v1768 = vadd.f32 %v656, %v1767
        %v1769 = vpop.f32.mrb[0].mxu0
        %1770 = vmatprep.mubr.bf16.mxu0 0
        %1771 = vmatmul.mubr.bf16.gmra.mrb[0].mxu0 %v1203
        %v1772 = vpop.f32.mrb[0].mxu0
        %v1773 = vadd.f32 %v656, %v1772
        %v1774 = vpop.f32.mrb[0].mxu0
        %v1775 = vpop.f32.mrb[0].mxu0
        %v1776 = vadd.f32 %v656, %v1775
        %v1777 = vpop.f32.mrb[0].mxu0
        %1778 = vmatprep.mubr.bf16.mxu0 0
        %1779 = vmatmul.mubr.bf16.gmra.mrb[0].mxu0 %v1204
        %v1780 = vpop.f32.mrb[0].mxu0
        %v1781 = vadd.f32 %v656, %v1780
        %v1782 = vpop.f32.mrb[0].mxu0
        %v1783 = vpop.f32.mrb[0].mxu0
        %v1784 = vadd.f32 %v656, %v1783
        %v1785 = vpop.f32.mrb[0].mxu0
        %1786 = vmatprep.mubr.bf16.mxu0 0
        %1787 = vmatmul.mubr.bf16.gmra.mrb[0].mxu0 %v1205
        %v1788 = vpop.f32.mrb[0].mxu0
        %v1789 = vadd.f32 %v656, %v1788
        %v1790 = vpop.f32.mrb[0].mxu0
        %v1791 = vpop.f32.mrb[0].mxu0
        %v1792 = vadd.f32 %v656, %v1791
        %v1793 = vpop.f32.mrb[0].mxu0
        %1794 = vmatprep.mubr.bf16.mxu0 0
        %1795 = vmatmul.mubr.bf16.gmra.mrb[0].mxu0 %v1206
        %v1796 = vpop.f32.mrb[0].mxu0
        %v1797 = vadd.f32 %v656, %v1796
        %v1798 = vpop.f32.mrb[0].mxu0
        %v1799 = vpop.f32.mrb[0].mxu0
        %v1800 = vadd.f32 %v656, %v1799
        %v1801 = vpop.f32.mrb[0].mxu0
        %1802 = vmatprep.mubr.bf16.mxu0 0
        %1803 = vmatmul.mubr.bf16.gmra.mrb[0].mxu0 %v1207
        %v1804 = vpop.f32.mrb[0].mxu0
        %v1805 = vadd.f32 %v656, %v1804
        %v1806 = vpop.f32.mrb[0].mxu0
        %v1807 = vpop.f32.mrb[0].mxu0
        %v1808 = vadd.f32 %v656, %v1807
        %v1809 = vpop.f32.mrb[0].mxu0
        %1810 = vmatprep.mubr.bf16.mxu0 0
        %1811 = vmatmul.mubr.bf16.gmra.mrb[0].mxu0 %v1208
        %v1812 = vpop.f32.mrb[0].mxu0
        %v1813 = vadd.f32 %v656, %v1812
        %v1814 = vpop.f32.mrb[0].mxu0
        %v1815 = vpop.f32.mrb[0].mxu0
        %v1816 = vadd.f32 %v656, %v1815
        %v1817 = vpop.f32.mrb[0].mxu0
        %1818 = vmatprep.mubr.bf16.mxu0 0
        %1819 = vmatmul.mubr.bf16.gmra.mrb[0].mxu0 %v1209
        %v1820 = vpop.f32.mrb[0].mxu0
        %v1821 = vadd.f32 %v656, %v1820
        %v1822 = vpop.f32.mrb[0].mxu0
        %v1823 = vpop.f32.mrb[0].mxu0
        %v1824 = vadd.f32 %v656, %v1823
        %v1825 = vpop.f32.mrb[0].mxu0
        %1826 = vmatprep.mubr.bf16.mxu0 0
        %1827 = vmatmul.mubr.bf16.gmra.mrb[0].mxu0 %v1210
        %v1828 = vpop.f32.mrb[0].mxu0
        %v1829 = vadd.f32 %v656, %v1828
        %v1830 = vpop.f32.mrb[0].mxu0
        %v1831 = vpop.f32.mrb[0].mxu0
        %v1832 = vadd.f32 %v656, %v1831
        %v1833 = vpop.f32.mrb[0].mxu0
        %1834 = vmatprep.mubr.bf16.mxu0 0
        %1835 = vmatmul.mubr.bf16.gmra.mrb[0].mxu0 %v1211
        %v1836 = vpop.f32.mrb[0].mxu0
        %v1837 = vadd.f32 %v656, %v1836
        %v1838 = vpop.f32.mrb[0].mxu0
        %v1839 = vpop.f32.mrb[0].mxu0
        %v1840 = vadd.f32 %v656, %v1839
        %v1841 = vpop.f32.mrb[0].mxu0
        %1842 = vmatprep.mubr.bf16.mxu0 0
        %1843 = vmatmul.mubr.bf16.gmra.mrb[0].mxu0 %v1212
        %v1844 = vpop.f32.mrb[0].mxu0
        %v1845 = vadd.f32 %v656, %v1844
        %v1846 = vpop.f32.mrb[0].mxu0
        %v1847 = vpop.f32.mrb[0].mxu0
        %v1848 = vadd.f32 %v656, %v1847
        %v1849 = vpop.f32.mrb[0].mxu0
        %1850 = vmatprep.mubr.bf16.mxu0 0
        %1851 = vmatmul.mubr.bf16.gmra.mrb[0].mxu0 %v1213
        %v1852 = vpop.f32.mrb[0].mxu0
        %v1853 = vadd.f32 %v656, %v1852
        %v1854 = vpop.f32.mrb[0].mxu0
        %v1855 = vpop.f32.mrb[0].mxu0
        %v1856 = vadd.f32 %v656, %v1855
        %v1857 = vpop.f32.mrb[0].mxu0
        %1858 = vmatprep.mubr.bf16.mxu0 0
        %1859 = vmatmul.mubr.bf16.gmra.mrb[0].mxu0 %v1214
        %v1860 = vpop.f32.mrb[0].mxu0
        %v1861 = vadd.f32 %v656, %v1860
        %v1862 = vpop.f32.mrb[0].mxu0
        %v1863 = vpop.f32.mrb[0].mxu0
        %v1864 = vadd.f32 %v656, %v1863
        %v1865 = vpop.f32.mrb[0].mxu0
        %1866 = vmatprep.mubr.bf16.mxu0 0
        %1867 = vmatmul.mubr.bf16.gmra.mrb[0].mxu0 %v1215
        %v1868 = vpop.f32.mrb[0].mxu0
        %v1869 = vadd.f32 %v656, %v1868
        %v1870 = vpop.f32.mrb[0].mxu0
        %v1871 = vpop.f32.mrb[0].mxu0
        %v1872 = vadd.f32 %v656, %v1871
        %v1873 = vpop.f32.mrb[0].mxu0
        %1874 = vmatprep.mubr.bf16.mxu0 0
        %1875 = vmatmul.mubr.bf16.gmra.mrb[0].mxu0 %v1216
        %v1876 = vpop.f32.mrb[0].mxu0
        %v1877 = vadd.f32 %v656, %v1876
        %v1878 = vpop.f32.mrb[0].mxu0
        %v1879 = vpop.f32.mrb[0].mxu0
        %v1880 = vadd.f32 %v656, %v1879
        %v1881 = vpop.f32.mrb[0].mxu0
        %1882 = vmatprep.mubr.bf16.mxu0 0
        %1883 = vmatmul.mubr.bf16.gmra.mrb[0].mxu0 %v1217
        %v1884 = vpop.f32.mrb[0].mxu0
        %v1885 = vadd.f32 %v656, %v1884
        %v1886 = vpop.f32.mrb[0].mxu0
        %v1887 = vpop.f32.mrb[0].mxu0
        %v1888 = vadd.f32 %v656, %v1887
        %v1889 = vpop.f32.mrb[0].mxu0
        %1890 = vmatprep.mubr.bf16.mxu0 0
        %1891 = vmatmul.mubr.bf16.gmra.mrb[0].mxu0 %v1218
        %v1892 = vpop.f32.mrb[0].mxu0
        %v1893 = vadd.f32 %v656, %v1892
        %v1894 = vpop.f32.mrb[0].mxu0
        %v1895 = vpop.f32.mrb[0].mxu0
        %v1896 = vadd.f32 %v656, %v1895
        %v1897 = vpop.f32.mrb[0].mxu0
        %1898 = vmatprep.mubr.bf16.mxu0 0
        %1899 = vmatmul.mubr.bf16.gmra.mrb[0].mxu0 %v1219
        %v1900 = vpop.f32.mrb[0].mxu0
        %v1901 = vadd.f32 %v656, %v1900
        %v1902 = vpop.f32.mrb[0].mxu0
        %v1903 = vpop.f32.mrb[0].mxu0
        %v1904 = vadd.f32 %v656, %v1903
        %v1905 = vpop.f32.mrb[0].mxu0
        %1906 = vmatprep.mubr.bf16.mxu0 0
        %1907 = vmatmul.mubr.bf16.gmra.mrb[0].mxu0 %v1220
        %v1908 = vpop.f32.mrb[0].mxu0
        %v1909 = vadd.f32 %v656, %v1908
        %v1910 = vpop.f32.mrb[0].mxu0
        %v1911 = vpop.f32.mrb[0].mxu0
        %v1912 = vadd.f32 %v656, %v1911
        %v1913 = vpop.f32.mrb[0].mxu0
        %1914 = vmatprep.mubr.bf16.mxu0 0
        %1915 = vmatmul.mubr.bf16.gmra.mrb[0].mxu0 %v1221
        %v1916 = vpop.f32.mrb[0].mxu0
        %v1917 = vadd.f32 %v656, %v1916
        %v1918 = vpop.f32.mrb[0].mxu0
        %v1919 = vpop.f32.mrb[0].mxu0
        %v1920 = vadd.f32 %v656, %v1919
        %v1921 = vpop.f32.mrb[0].mxu0
        %1922 = vmatprep.mubr.bf16.mxu0 0
        %1923 = vmatmul.mubr.bf16.gmra.mrb[0].mxu0 %v1222
        %v1924 = vpop.f32.mrb[0].mxu0
        %v1925 = vadd.f32 %v656, %v1924
        %v1926 = vpop.f32.mrb[0].mxu0
        %v1927 = vpop.f32.mrb[0].mxu0
        %v1928 = vadd.f32 %v656, %v1927
        %v1929 = vpop.f32.mrb[0].mxu0
        %1930 = vmatprep.mubr.bf16.mxu0 0
        %1931 = vmatmul.mubr.bf16.gmra.mrb[0].mxu0 %v1223
        %v1932 = vpop.f32.mrb[0].mxu0
        %v1933 = vadd.f32 %v656, %v1932
        %v1934 = vpop.f32.mrb[0].mxu0
        %v1935 = vpop.f32.mrb[0].mxu0
        %v1936 = vadd.f32 %v656, %v1935
        %v1937 = vpop.f32.mrb[0].mxu0
        %1938 = vmatprep.mubr.bf16.mxu0 0
        %1939 = vmatmul.mubr.bf16.gmra.mrb[0].mxu0 %v1224
        %v1940 = vpop.f32.mrb[0].mxu0
        %v1941 = vadd.f32 %v656, %v1940
        %v1942 = vpop.f32.mrb[0].mxu0
        %v1943 = vpop.f32.mrb[0].mxu0
        %v1944 = vadd.f32 %v656, %v1943
        %v1945 = vpop.f32.mrb[0].mxu0
        %1946 = vmatprep.mubr.bf16.mxu0 0
        %1947 = vmatmul.mubr.bf16.gmra.mrb[0].mxu0 %v1225
        %v1948 = vpop.f32.mrb[0].mxu0
        %v1949 = vadd.f32 %v656, %v1948
        %v1950 = vpop.f32.mrb[0].mxu0
        %v1951 = vpop.f32.mrb[0].mxu0
        %v1952 = vadd.f32 %v656, %v1951
        %v1953 = vpop.f32.mrb[0].mxu0
        %1954 = vmatprep.mubr.bf16.mxu0 0
        %1955 = vmatmul.mubr.bf16.gmra.mrb[0].mxu0 %v1226
        %v1956 = vpop.f32.mrb[0].mxu0
        %v1957 = vadd.f32 %v656, %v1956
        %v1958 = vpop.f32.mrb[0].mxu0
        %v1959 = vpop.f32.mrb[0].mxu0
        %v1960 = vadd.f32 %v656, %v1959
        %v1961 = vpop.f32.mrb[0].mxu0
        %1962 = vmatprep.mubr.bf16.mxu0 0
        %1963 = vmatmul.mubr.bf16.gmra.mrb[0].mxu0 %v1227
        %v1964 = vpop.f32.mrb[0].mxu0
        %v1965 = vadd.f32 %v656, %v1964
        %v1966 = vpop.f32.mrb[0].mxu0
        %v1967 = vpop.f32.mrb[0].mxu0
        %v1968 = vadd.f32 %v656, %v1967
        %v1969 = vpop.f32.mrb[0].mxu0
        %1970 = vmatprep.mubr.bf16.mxu0 0
        %1971 = vmatmul.mubr.bf16.gmra.mrb[0].mxu0 %v1228
        %v1972 = vpop.f32.mrb[0].mxu0
        %v1973 = vadd.f32 %v656, %v1972
        %v1974 = vpop.f32.mrb[0].mxu0
        %v1975 = vpop.f32.mrb[0].mxu0
        %v1976 = vadd.f32 %v656, %v1975
        %v1977 = vpop.f32.mrb[0].mxu0
        %1978 = vmatprep.mubr.bf16.mxu0 0
        %1979 = vmatmul.mubr.bf16.gmra.mrb[0].mxu0 %v1229
        %v1980 = vpop.f32.mrb[0].mxu0
        %v1981 = vadd.f32 %v656, %v1980
        %v1982 = vpop.f32.mrb[0].mxu0
        %v1983 = vpop.f32.mrb[0].mxu0
        %v1984 = vadd.f32 %v656, %v1983
        %v1985 = vpop.f32.mrb[0].mxu0
        %1986 = vmatprep.mubr.bf16.mxu0 0
        %1987 = vmatmul.mubr.bf16.gmra.mrb[0].mxu0 %v1230
        %v1988 = vpop.f32.mrb[0].mxu0
        %v1989 = vadd.f32 %v656, %v1988
        %v1990 = vpop.f32.mrb[0].mxu0
        %v1991 = vpop.f32.mrb[0].mxu0
        %v1992 = vadd.f32 %v656, %v1991
        %v1993 = vpop.f32.mrb[0].mxu0
        %1994 = vmatprep.mubr.bf16.mxu0 0
        %1995 = vmatmul.mubr.bf16.gmra.mrb[0].mxu0 %v1231
        %v1996 = vpop.f32.mrb[0].mxu0
        %v1997 = vadd.f32 %v656, %v1996
        %v1998 = vpop.f32.mrb[0].mxu0
        %v1999 = vpop.f32.mrb[0].mxu0
        %v2000 = vadd.f32 %v656, %v1999
        %v2001 = vpop.f32.mrb[0].mxu0
        %2002 = vmatprep.mubr.bf16.mxu0 0
        %2003 = vmatmul.mubr.bf16.gmra.mrb[0].mxu0 %v1232
        %v2004 = vpop.f32.mrb[0].mxu0
        %v2005 = vadd.f32 %v656, %v2004
        %v2006 = vpop.f32.mrb[0].mxu0
        %v2007 = vpop.f32.mrb[0].mxu0
        %v2008 = vadd.f32 %v656, %v2007
        %v2009 = vpop.f32.mrb[0].mxu0
        %2010 = vmatprep.mubr.bf16.mxu0 0
        %2011 = vmatmul.mubr.bf16.gmra.mrb[0].mxu0 %v1233
        %v2012 = vpop.f32.mrb[0].mxu0
        %v2013 = vadd.f32 %v656, %v2012
        %v2014 = vpop.f32.mrb[0].mxu0
        %v2015 = vpop.f32.mrb[0].mxu0
        %v2016 = vadd.f32 %v656, %v2015
        %v2017 = vpop.f32.mrb[0].mxu0
        %2018 = vmatprep.mubr.bf16.mxu0 0
        %2019 = vmatmul.mubr.bf16.gmra.mrb[0].mxu0 %v1234
        %v2020 = vpop.f32.mrb[0].mxu0
        %v2021 = vadd.f32 %v656, %v2020
        %v2022 = vpop.f32.mrb[0].mxu0
        %v2023 = vpop.f32.mrb[0].mxu0
        %v2024 = vadd.f32 %v656, %v2023
        %v2025 = vpop.f32.mrb[0].mxu0
        %2026 = vmatprep.mubr.bf16.mxu0 0
        %2027 = vmatmul.mubr.bf16.gmra.mrb[0].mxu0 %v1235
        %v2028 = vpop.f32.mrb[0].mxu0
        %v2029 = vadd.f32 %v656, %v2028
        %v2030 = vpop.f32.mrb[0].mxu0
        %v2031 = vpop.f32.mrb[0].mxu0
        %v2032 = vadd.f32 %v656, %v2031
        %v2033 = vpop.f32.mrb[0].mxu0
        %2034 = vmatprep.mubr.bf16.mxu0 0
        %2035 = vmatmul.mubr.bf16.gmra.mrb[0].mxu0 %v1236
        %v2036 = vpop.f32.mrb[0].mxu0
        %v2037 = vadd.f32 %v656, %v2036
        %v2038 = vpop.f32.mrb[0].mxu0
        %v2039 = vpop.f32.mrb[0].mxu0
        %v2040 = vadd.f32 %v656, %v2039
        %v2041 = vpop.f32.mrb[0].mxu0
        %2042 = vmatprep.mubr.bf16.mxu0 0
        %2043 = vmatmul.mubr.bf16.gmra.mrb[0].mxu0 %v1237
        %v2044 = vpop.f32.mrb[0].mxu0
        %v2045 = vadd.f32 %v656, %v2044
        %v2046 = vpop.f32.mrb[0].mxu0
        %v2047 = vpop.f32.mrb[0].mxu0
        %v2048 = vadd.f32 %v656, %v2047
        %v2049 = vpop.f32.mrb[0].mxu0
        %2050 = vmatprep.mubr.bf16.mxu0 0
        %2051 = vmatmul.mubr.bf16.gmra.mrb[0].mxu0 %v1238
        %v2052 = vpop.f32.mrb[0].mxu0
        %v2053 = vadd.f32 %v656, %v2052
        %v2054 = vpop.f32.mrb[0].mxu0
        %v2055 = vpop.f32.mrb[0].mxu0
        %v2056 = vadd.f32 %v656, %v2055
        %v2057 = vpop.f32.mrb[0].mxu0
        %2058 = vmatprep.mubr.bf16.mxu0 0
        %2059 = vmatmul.mubr.bf16.gmra.mrb[0].mxu0 %v1239
        %v2060 = vpop.f32.mrb[0].mxu0
        %v2061 = vadd.f32 %v656, %v2060
        %v2062 = vpop.f32.mrb[0].mxu0
        %v2063 = vpop.f32.mrb[0].mxu0
        %v2064 = vadd.f32 %v656, %v2063
        %v2065 = vpop.f32.mrb[0].mxu0
        %2066 = vmatprep.mubr.bf16.mxu0 0
        %2067 = vmatmul.mubr.bf16.gmra.mrb[0].mxu0 %v1240
        %v2068 = vpop.f32.mrb[0].mxu0
        %v2069 = vadd.f32 %v656, %v2068
        %v2070 = vpop.f32.mrb[0].mxu0
        %v2071 = vpop.f32.mrb[0].mxu0
        %v2072 = vadd.f32 %v656, %v2071
        %v2073 = vpop.f32.mrb[0].mxu0
        %2074 = vmatprep.mubr.bf16.mxu0 0
        %2075 = vmatmul.mubr.bf16.gmra.mrb[0].mxu0 %v1241
        %v2076 = vpop.f32.mrb[0].mxu0
        %v2077 = vadd.f32 %v656, %v2076
        %v2078 = vpop.f32.mrb[0].mxu0
        %v2079 = vpop.f32.mrb[0].mxu0
        %v2080 = vadd.f32 %v656, %v2079
        %v2081 = vpop.f32.mrb[0].mxu0
        %2082 = vmatprep.mubr.bf16.mxu0 0
        %2083 = vmatmul.mubr.bf16.gmra.mrb[0].mxu0 %v1242
        %v2084 = vpop.f32.mrb[0].mxu0
        %v2085 = vadd.f32 %v656, %v2084
        %v2086 = vpop.f32.mrb[0].mxu0
        %v2087 = vpop.f32.mrb[0].mxu0
        %v2088 = vadd.f32 %v656, %v2087
        %v2089 = vpop.f32.mrb[0].mxu0
        %2090 = vmatprep.mubr.bf16.mxu0 0
        %2091 = vmatmul.mubr.bf16.gmra.mrb[0].mxu0 %v1243
        %v2092 = vpop.f32.mrb[0].mxu0
        %v2093 = vadd.f32 %v656, %v2092
        %v2094 = vpop.f32.mrb[0].mxu0
        %v2095 = vpop.f32.mrb[0].mxu0
        %v2096 = vadd.f32 %v656, %v2095
        %v2097 = vpop.f32.mrb[0].mxu0
        %2098 = vmatprep.mubr.bf16.mxu0 0
        %2099 = vmatmul.mubr.bf16.gmra.mrb[0].mxu0 %v1244
        %v2100 = vpop.f32.mrb[0].mxu0
        %v2101 = vadd.f32 %v656, %v2100
        %v2102 = vpop.f32.mrb[0].mxu0
        %v2103 = vpop.f32.mrb[0].mxu0
        %v2104 = vadd.f32 %v656, %v2103
        %v2105 = vpop.f32.mrb[0].mxu0
        %2106 = vmatprep.mubr.bf16.mxu0 0
        %2107 = vmatmul.mubr.bf16.gmra.mrb[0].mxu0 %v1245
        %v2108 = vpop.f32.mrb[0].mxu0
        %v2109 = vadd.f32 %v656, %v2108
        %v2110 = vpop.f32.mrb[0].mxu0
        %v2111 = vpop.f32.mrb[0].mxu0
        %v2112 = vadd.f32 %v656, %v2111
        %v2113 = vpop.f32.mrb[0].mxu0
        %2114 = vmatprep.mubr.bf16.mxu0 0
        %2115 = vmatmul.mubr.bf16.gmra.mrb[0].mxu0 %v1246
        %v2116 = vpop.f32.mrb[0].mxu0
        %v2117 = vadd.f32 %v656, %v2116
        %v2118 = vpop.f32.mrb[0].mxu0
        %v2119 = vpop.f32.mrb[0].mxu0
        %v2120 = vadd.f32 %v656, %v2119
        %v2121 = vpop.f32.mrb[0].mxu0
        %2122 = vmatprep.mubr.bf16.mxu0 0
        %2123 = vmatmul.mubr.bf16.gmra.mrb[0].mxu0 %v1247
        %v2124 = vpop.f32.mrb[0].mxu0
        %v2125 = vadd.f32 %v656, %v2124
        %v2126 = vpop.f32.mrb[0].mxu0
        %v2127 = vpop.f32.mrb[0].mxu0
        %v2128 = vadd.f32 %v656, %v2127
        %v2129 = vpop.f32.mrb[0].mxu0
        %2130 = vmatprep.mubr.bf16.mxu0 0
        %2131 = vmatmul.mubr.bf16.gmra.mrb[0].mxu0 %v1248
        %v2132 = vpop.f32.mrb[0].mxu0
        %v2133 = vadd.f32 %v656, %v2132
        %v2134 = vpop.f32.mrb[0].mxu0
        %v2135 = vpop.f32.mrb[0].mxu0
        %v2136 = vadd.f32 %v656, %v2135
        %v2137 = vpop.f32.mrb[0].mxu0
        %2138 = vmatprep.mubr.bf16.mxu0 0
        %2139 = vmatmul.mubr.bf16.gmra.mrb[0].mxu0 %v1249
        %v2140 = vpop.f32.mrb[0].mxu0
        %v2141 = vadd.f32 %v656, %v2140
        %v2142 = vpop.f32.mrb[0].mxu0
        %v2143 = vpop.f32.mrb[0].mxu0
        %v2144 = vadd.f32 %v656, %v2143
        %v2145 = vpop.f32.mrb[0].mxu0
        %2146 = vmatprep.mubr.bf16.mxu0 0
        %2147 = vmatmul.mubr.bf16.gmra.mrb[0].mxu0 %v1250
        %v2148 = vpop.f32.mrb[0].mxu0
        %v2149 = vadd.f32 %v656, %v2148
        %v2150 = vpop.f32.mrb[0].mxu0
        %v2151 = vpop.f32.mrb[0].mxu0
        %v2152 = vadd.f32 %v656, %v2151
        %v2153 = vpop.f32.mrb[0].mxu0
        %2154 = vmatprep.mubr.bf16.mxu0 0
        %2155 = vmatmul.mubr.bf16.gmra.mrb[0].mxu0 %v1251
        %v2156 = vpop.f32.mrb[0].mxu0
        %v2157 = vadd.f32 %v656, %v2156
        %v2158 = vpop.f32.mrb[0].mxu0
        %v2159 = vpop.f32.mrb[0].mxu0
        %v2160 = vadd.f32 %v656, %v2159
        %v2161 = vpop.f32.mrb[0].mxu0
        %2162 = vmatprep.mubr.bf16.mxu0 0
        %2163 = vmatmul.mubr.bf16.gmra.mrb[0].mxu0 %v1252
        %v2164 = vpop.f32.mrb[0].mxu0
        %v2165 = vadd.f32 %v656, %v2164
        %v2166 = vpop.f32.mrb[0].mxu0
        %v2167 = vpop.f32.mrb[0].mxu0
        %v2168 = vadd.f32 %v656, %v2167
        %v2169 = vpop.f32.mrb[0].mxu0
        %2170 = vmatprep.mubr.bf16.mxu0 0
        %2171 = vmatmul.mubr.bf16.gmra.mrb[0].mxu0 %v1253
        %v2172 = vpop.f32.mrb[0].mxu0
        %v2173 = vadd.f32 %v656, %v2172
        %v2174 = vpop.f32.mrb[0].mxu0
        %v2175 = vpop.f32.mrb[0].mxu0
        %v2176 = vadd.f32 %v656, %v2175
        %v2177 = vpop.f32.mrb[0].mxu0
        %2178 = vmatprep.mubr.bf16.mxu0 0
        %2179 = vmatmul.mubr.bf16.gmra.mrb[0].mxu0 %v1254
        %v2180 = vpop.f32.mrb[0].mxu0
        %v2181 = vadd.f32 %v656, %v2180
        %v2182 = vpop.f32.mrb[0].mxu0
        %v2183 = vpop.f32.mrb[0].mxu0
        %v2184 = vadd.f32 %v656, %v2183
        %v2185 = vpop.f32.mrb[0].mxu0
        %2186 = vmatprep.mubr.bf16.mxu0 0
        %2187 = vmatmul.mubr.bf16.gmra.mrb[0].mxu0 %v1255
        %v2188 = vpop.f32.mrb[0].mxu0
        %v2189 = vadd.f32 %v656, %v2188
        %v2190 = vpop.f32.mrb[0].mxu0
        %v2191 = vpop.f32.mrb[0].mxu0
        %v2192 = vadd.f32 %v656, %v2191
        %v2193 = vpop.f32.mrb[0].mxu0
        %2194 = vmatprep.mubr.bf16.mxu0 0
        %2195 = vmatmul.mubr.bf16.gmra.mrb[0].mxu0 %v1256
        %v2196 = vpop.f32.mrb[0].mxu0
        %v2197 = vadd.f32 %v656, %v2196
        %v2198 = vpop.f32.mrb[0].mxu0
        %v2199 = vpop.f32.mrb[0].mxu0
        %v2200 = vadd.f32 %v656, %v2199
        %v2201 = vpop.f32.mrb[0].mxu0
        %2202 = vmatprep.mubr.bf16.mxu0 0
        %2203 = vmatmul.mubr.bf16.gmra.mrb[0].mxu0 %v1257
        %v2204 = vpop.f32.mrb[0].mxu0
        %v2205 = vadd.f32 %v656, %v2204
        %v2206 = vpop.f32.mrb[0].mxu0
        %v2207 = vpop.f32.mrb[0].mxu0
        %v2208 = vadd.f32 %v656, %v2207
        %v2209 = vpop.f32.mrb[0].mxu0
        %2210 = vmatprep.mubr.bf16.mxu0 0
        %2211 = vmatmul.mubr.bf16.gmra.mrb[0].mxu0 %v1258
        %v2212 = vpop.f32.mrb[0].mxu0
        %v2213 = vadd.f32 %v656, %v2212
        %v2214 = vpop.f32.mrb[0].mxu0
        %v2215 = vpop.f32.mrb[0].mxu0
        %v2216 = vadd.f32 %v656, %v2215
        %v2217 = vpop.f32.mrb[0].mxu0
        %2218 = vmatprep.mubr.bf16.mxu0 0
        %2219 = vmatmul.mubr.bf16.gmra.mrb[0].mxu0 %v1259
        %v2220 = vpop.f32.mrb[0].mxu0
        %v2221 = vadd.f32 %v656, %v2220
        %v2222 = vpop.f32.mrb[0].mxu0
        %v2223 = vpop.f32.mrb[0].mxu0
        %v2224 = vadd.f32 %v656, %v2223
        %v2225 = vpop.f32.mrb[0].mxu0
        %2226 = vmatprep.mubr.bf16.mxu0 0
        %2227 = vmatmul.mubr.bf16.gmra.mrb[0].mxu0 %v1260
        %v2228 = vpop.f32.mrb[0].mxu0
        %v2229 = vadd.f32 %v656, %v2228
        %v2230 = vpop.f32.mrb[0].mxu0
        %v2231 = vpop.f32.mrb[0].mxu0
        %v2232 = vadd.f32 %v656, %v2231
        %v2233 = vpop.f32.mrb[0].mxu0
        %2234 = vmatprep.mubr.bf16.mxu0 0
        %2235 = vmatmul.mubr.bf16.gmra.mrb[0].mxu0 %v1261
        %v2236 = vpop.f32.mrb[0].mxu0
        %v2237 = vadd.f32 %v656, %v2236
        %v2238 = vpop.f32.mrb[0].mxu0
        %v2239 = vpop.f32.mrb[0].mxu0
        %v2240 = vadd.f32 %v656, %v2239
        %v2241 = vpop.f32.mrb[0].mxu0
        %2242 = vmatprep.mubr.bf16.mxu0 0
        %2243 = vmatmul.mubr.bf16.gmra.mrb[0].mxu0 %v1262
        %v2244 = vpop.f32.mrb[0].mxu0
        %v2245 = vadd.f32 %v656, %v2244
        %v2246 = vpop.f32.mrb[0].mxu0
        %v2247 = vpop.f32.mrb[0].mxu0
        %v2248 = vadd.f32 %v656, %v2247
        %v2249 = vpop.f32.mrb[0].mxu0
        %2250 = vmatprep.mubr.bf16.mxu0 0
        %2251 = vmatmul.mubr.bf16.gmra.mrb[0].mxu0 %v1263
        %v2252 = vpop.f32.mrb[0].mxu0
        %v2253 = vadd.f32 %v656, %v2252
        %v2254 = vpop.f32.mrb[0].mxu0
        %v2255 = vpop.f32.mrb[0].mxu0
        %v2256 = vadd.f32 %v656, %v2255
        %v2257 = vpop.f32.mrb[0].mxu0
        %2258 = vmatprep.mubr.bf16.mxu0 0
        %2259 = vmatmul.mubr.bf16.gmra.mrb[0].mxu0 %v1264
        %v2260 = vpop.f32.mrb[0].mxu0
        %v2261 = vadd.f32 %v656, %v2260
        %v2262 = vpop.f32.mrb[0].mxu0
        %v2263 = vpop.f32.mrb[0].mxu0
        %v2264 = vadd.f32 %v656, %v2263
        %v2265 = vpop.f32.mrb[0].mxu0
        %2266 = vmatprep.mubr.bf16.mxu0 0
        %2267 = vmatmul.mubr.bf16.gmra.mrb[0].mxu0 %v1265
        %v2268 = vpop.f32.mrb[0].mxu0
        %v2269 = vadd.f32 %v656, %v2268
        %v2270 = vpop.f32.mrb[0].mxu0
        %v2271 = vpop.f32.mrb[0].mxu0
        %v2272 = vadd.f32 %v656, %v2271
        %v2273 = vpop.f32.mrb[0].mxu0
        %2274 = vmatprep.mubr.bf16.mxu0 0
        %2275 = vmatmul.mubr.bf16.gmra.mrb[0].mxu0 %v1266
        %v2276 = vpop.f32.mrb[0].mxu0
        %v2277 = vadd.f32 %v656, %v2276
        %v2278 = vpop.f32.mrb[0].mxu0
        %v2279 = vpop.f32.mrb[0].mxu0
        %v2280 = vadd.f32 %v656, %v2279
        %v2281 = vpop.f32.mrb[0].mxu0
        %2282 = vmatprep.mubr.bf16.mxu0 0
        %2283 = vmatmul.mubr.bf16.gmra.mrb[0].mxu0 %v1267
        %v2284 = vpop.f32.mrb[0].mxu0
        %v2285 = vadd.f32 %v656, %v2284
        %v2286 = vpop.f32.mrb[0].mxu0
        %v2287 = vpop.f32.mrb[0].mxu0
        %v2288 = vadd.f32 %v656, %v2287
        %v2289 = vpop.f32.mrb[0].mxu0
        %2290 = vmatprep.mubr.bf16.mxu0 0
        %2291 = vmatmul.mubr.bf16.gmra.mrb[0].mxu0 %v1268
        %v2292 = vpop.f32.mrb[0].mxu0
        %v2293 = vadd.f32 %v656, %v2292
        %v2294 = vpop.f32.mrb[0].mxu0
        %v2295 = vpop.f32.mrb[0].mxu0
        %v2296 = vadd.f32 %v656, %v2295
        %v2297 = vpop.f32.mrb[0].mxu0
        %2298 = vmatprep.mubr.bf16.mxu0 0
        %2299 = vmatmul.mubr.bf16.gmra.mrb[0].mxu0 %v1269
        %v2300 = vpop.f32.mrb[0].mxu0
        %v2301 = vadd.f32 %v656, %v2300
        %v2302 = vpop.f32.mrb[0].mxu0
        %v2303 = vpop.f32.mrb[0].mxu0
        %v2304 = vadd.f32 %v656, %v2303
        %v2305 = vpop.f32.mrb[0].mxu0
        %2306 = vmatprep.mubr.bf16.mxu0 0
        %2307 = vmatmul.mubr.bf16.gmra.mrb[0].mxu0 %v1270
        %v2308 = vpop.f32.mrb[0].mxu0
        %v2309 = vadd.f32 %v656, %v2308
        %v2310 = vpop.f32.mrb[0].mxu0
        %v2311 = vpop.f32.mrb[0].mxu0
        %v2312 = vadd.f32 %v656, %v2311
        %v2313 = vpop.f32.mrb[0].mxu0
        %2314 = vmatprep.mubr.bf16.mxu0 0
        %2315 = vmatmul.mubr.bf16.gmra.mrb[0].mxu0 %v1271
        %v2316 = vpop.f32.mrb[0].mxu0
        %v2317 = vadd.f32 %v656, %v2316
        %v2318 = vpop.f32.mrb[0].mxu0
        %v2319 = vpop.f32.mrb[0].mxu0
        %v2320 = vadd.f32 %v656, %v2319
        %v2321 = vpop.f32.mrb[0].mxu0
        %2322 = vmatprep.mubr.bf16.mxu0 0
        %2323 = vmatmul.mubr.bf16.gmra.mrb[0].mxu0 %v1272
        %v2324 = vpop.f32.mrb[0].mxu0
        %v2325 = vadd.f32 %v656, %v2324
        %v2326 = vpop.f32.mrb[0].mxu0
        %v2327 = vpop.f32.mrb[0].mxu0
        %v2328 = vadd.f32 %v656, %v2327
        %v2329 = vpop.f32.mrb[0].mxu0
        %2330 = vmatprep.mubr.bf16.mxu0 0
        %2331 = vmatmul.mubr.bf16.gmra.mrb[0].mxu0 %v1273
        %v2332 = vpop.f32.mrb[0].mxu0
        %v2333 = vadd.f32 %v656, %v2332
        %v2334 = vpop.f32.mrb[0].mxu0
        %v2335 = vpop.f32.mrb[0].mxu0
        %v2336 = vadd.f32 %v656, %v2335
        %v2337 = vpop.f32.mrb[0].mxu0
        %2338 = vmatprep.mubr.bf16.mxu0 0
        %2339 = vmatmul.mubr.bf16.gmra.mrb[0].mxu0 %v1274
        %v2340 = vpop.f32.mrb[0].mxu0
        %v2341 = vadd.f32 %v656, %v2340
        %v2342 = vpop.f32.mrb[0].mxu0
        %v2343 = vpop.f32.mrb[0].mxu0
        %v2344 = vadd.f32 %v656, %v2343
        %v2345 = vpop.f32.mrb[0].mxu0
        %2346 = vmatprep.mubr.bf16.mxu0 0
        %2347 = vmatmul.mubr.bf16.gmra.mrb[0].mxu0 %v1275
        %v2348 = vpop.f32.mrb[0].mxu0
        %v2349 = vadd.f32 %v656, %v2348
        %v2350 = vpop.f32.mrb[0].mxu0
        %v2351 = vpop.f32.mrb[0].mxu0
        %v2352 = vadd.f32 %v656, %v2351
        %v2353 = vpop.f32.mrb[0].mxu0
        %2354 = vmatprep.mubr.bf16.mxu0 0
        %2355 = vmatmul.mubr.bf16.gmra.mrb[0].mxu0 %v1276
        %v2356 = vpop.f32.mrb[0].mxu0
        %v2357 = vadd.f32 %v656, %v2356
        %v2358 = vpop.f32.mrb[0].mxu0
        %v2359 = vpop.f32.mrb[0].mxu0
        %v2360 = vadd.f32 %v656, %v2359
        %v2361 = vpop.f32.mrb[0].mxu0
        %2362 = vmatprep.mubr.bf16.mxu0 0
        %2363 = vmatmul.mubr.bf16.gmra.mrb[0].mxu0 %v1277
        %v2364 = vpop.f32.mrb[0].mxu0
        %v2365 = vadd.f32 %v656, %v2364
        %v2366 = vpop.f32.mrb[0].mxu0
        %v2367 = vpop.f32.mrb[0].mxu0
        %v2368 = vadd.f32 %v656, %v2367
        %v2369 = vpop.f32.mrb[0].mxu0
        %2370 = vmatprep.mubr.bf16.mxu0 0
        %2371 = vmatmul.mubr.bf16.gmra.mrb[0].mxu0 %v1278
        %v2372 = vpop.f32.mrb[0].mxu0
        %v2373 = vadd.f32 %v656, %v2372
        %v2374 = vpop.f32.mrb[0].mxu0
        %v2375 = vpop.f32.mrb[0].mxu0
        %v2376 = vadd.f32 %v656, %v2375
        %v2377 = vpop.f32.mrb[0].mxu0
        %2378 = vmatprep.mubr.bf16.mxu0 0
        %2379 = vmatmul.mubr.bf16.gmra.mrb[0].mxu0 %v1279
        %v2380 = vpop.f32.mrb[0].mxu0
        %v2381 = vadd.f32 %v656, %v2380
        %v2382 = vpop.f32.mrb[0].mxu0
        %v2383 = vpop.f32.mrb[0].mxu0
        %v2384 = vadd.f32 %v656, %v2383
        %v2385 = vpop.f32.mrb[0].mxu0
        %2386 = vmatprep.mubr.bf16.mxu0 0
        %2387 = vmatmul.mubr.bf16.gmra.mrb[0].mxu0 %v1280
        %v2388 = vpop.f32.mrb[0].mxu0
        %v2389 = vadd.f32 %v656, %v2388
        %v2390 = vpop.f32.mrb[0].mxu0
        %v2391 = vpop.f32.mrb[0].mxu0
        %v2392 = vadd.f32 %v656, %v2391
        %v2393 = vpop.f32.mrb[0].mxu0
        %2394 = vmatprep.mubr.bf16.mxu0 0
        %2395 = vmatmul.mubr.bf16.gmra.mrb[0].mxu0 %v1281
        %v2396 = vpop.f32.mrb[0].mxu0
        %v2397 = vadd.f32 %v656, %v2396
        %v2398 = vpop.f32.mrb[0].mxu0
        %v2399 = vpop.f32.mrb[0].mxu0
        %v2400 = vadd.f32 %v656, %v2399
        %v2401 = vpop.f32.mrb[0].mxu0
        %2402 = vmatprep.mubr.bf16.mxu0 0
        %2403 = vmatmul.mubr.bf16.gmra.mrb[0].mxu0 %v1282
        %v2404 = vpop.f32.mrb[0].mxu0
        %v2405 = vadd.f32 %v656, %v2404
        %v2406 = vpop.f32.mrb[0].mxu0
        %v2407 = vpop.f32.mrb[0].mxu0
        %v2408 = vadd.f32 %v656, %v2407
        %v2409 = vpop.f32.mrb[0].mxu0
        %2410 = vmatprep.mubr.bf16.mxu0 0
        %2411 = vmatmul.mubr.bf16.gmra.mrb[0].mxu0 %v1283
        %v2412 = vpop.f32.mrb[0].mxu0
        %v2413 = vadd.f32 %v656, %v2412
        %v2414 = vpop.f32.mrb[0].mxu0
        %v2415 = vpop.f32.mrb[0].mxu0
        %v2416 = vadd.f32 %v656, %v2415
        %v2417 = vpop.f32.mrb[0].mxu0
        %2418 = vmatprep.mubr.bf16.mxu0 0
        %2419 = vmatmul.mubr.bf16.gmra.mrb[0].mxu0 %v1284
        %v2420 = vpop.f32.mrb[0].mxu0
        %v2421 = vadd.f32 %v656, %v2420
        %v2422 = vpop.f32.mrb[0].mxu0
        %v2423 = vpop.f32.mrb[0].mxu0
        %v2424 = vadd.f32 %v656, %v2423
        %v2425 = vpop.f32.mrb[0].mxu0
        %2426 = vmatprep.mubr.bf16.mxu0 0
        %2427 = vmatmul.mubr.bf16.gmra.mrb[0].mxu0 %v1285
        %v2428 = vpop.f32.mrb[0].mxu0
        %v2429 = vadd.f32 %v656, %v2428
        %v2430 = vpop.f32.mrb[0].mxu0
        %v2431 = vpop.f32.mrb[0].mxu0
        %v2432 = vadd.f32 %v656, %v2431
        %v2433 = vpop.f32.mrb[0].mxu0
        %2434 = vmatprep.mubr.bf16.mxu0 0
        %2435 = vmatmul.mubr.bf16.gmra.mrb[0].mxu0 %v1286
        %v2436 = vpop.f32.mrb[0].mxu0
        %v2437 = vadd.f32 %v656, %v2436
        %v2438 = vpop.f32.mrb[0].mxu0
        %v2439 = vpop.f32.mrb[0].mxu0
        %v2440 = vadd.f32 %v656, %v2439
        %v2441 = vpop.f32.mrb[0].mxu0
        %2442 = vmatprep.mubr.bf16.mxu0 0
        %2443 = vmatmul.mubr.bf16.gmra.mrb[0].mxu0 %v1287
        %v2444 = vpop.f32.mrb[0].mxu0
        %v2445 = vadd.f32 %v656, %v2444
        %v2446 = vpop.f32.mrb[0].mxu0
        %v2447 = vpop.f32.mrb[0].mxu0
        %v2448 = vadd.f32 %v656, %v2447
        %v2449 = vpop.f32.mrb[0].mxu0
        %2450 = vmatprep.mubr.bf16.mxu0 0
        %2451 = vmatmul.mubr.bf16.gmra.mrb[0].mxu0 %v1288
        %v2452 = vpop.f32.mrb[0].mxu0
        %v2453 = vadd.f32 %v656, %v2452
        %v2454 = vpop.f32.mrb[0].mxu0
        %v2455 = vpop.f32.mrb[0].mxu0
        %v2456 = vadd.f32 %v656, %v2455
        %v2457 = vpop.f32.mrb[0].mxu0
        %2458 = vmatprep.mubr.bf16.mxu0 0
        %2459 = vmatmul.mubr.bf16.gmra.mrb[0].mxu0 %v1289
        %v2460 = vpop.f32.mrb[0].mxu0
        %v2461 = vadd.f32 %v656, %v2460
        %v2462 = vpop.f32.mrb[0].mxu0
        %v2463 = vpop.f32.mrb[0].mxu0
        %v2464 = vadd.f32 %v656, %v2463
        %v2465 = vpop.f32.mrb[0].mxu0
        %2466 = vmatprep.mubr.bf16.mxu0 0
        %2467 = vmatmul.mubr.bf16.gmra.mrb[0].mxu0 %v1290
        %v2468 = vpop.f32.mrb[0].mxu0
        %v2469 = vadd.f32 %v656, %v2468
        %v2470 = vpop.f32.mrb[0].mxu0
        %v2471 = vpop.f32.mrb[0].mxu0
        %v2472 = vadd.f32 %v656, %v2471
        %v2473 = vpop.f32.mrb[0].mxu0
        %2474 = vmatprep.mubr.bf16.mxu0 0
        %2475 = vmatmul.mubr.bf16.gmra.mrb[0].mxu0 %v1291
        %v2476 = vpop.f32.mrb[0].mxu0
        %v2477 = vadd.f32 %v656, %v2476
        %v2478 = vpop.f32.mrb[0].mxu0
        %v2479 = vpop.f32.mrb[0].mxu0
        %v2480 = vadd.f32 %v656, %v2479
        %v2481 = vpop.f32.mrb[0].mxu0
        %2482 = vmatprep.mubr.bf16.mxu0 0
        %2483 = vmatmul.mubr.bf16.gmra.mrb[0].mxu0 %v1292
        %v2484 = vpop.f32.mrb[0].mxu0
        %v2485 = vadd.f32 %v656, %v2484
        %v2486 = vpop.f32.mrb[0].mxu0
        %v2487 = vpop.f32.mrb[0].mxu0
        %v2488 = vadd.f32 %v656, %v2487
        %v2489 = vpop.f32.mrb[0].mxu0
        %2490 = vmatprep.mubr.bf16.mxu0 0
        %2491 = vmatmul.mubr.bf16.gmra.mrb[0].mxu0 %v1293
        %v2492 = vpop.f32.mrb[0].mxu0
        %v2493 = vadd.f32 %v656, %v2492
        %v2494 = vpop.f32.mrb[0].mxu0
        %v2495 = vpop.f32.mrb[0].mxu0
        %v2496 = vadd.f32 %v656, %v2495
        %v2497 = vpop.f32.mrb[0].mxu0
        %2498 = vmatprep.mubr.bf16.mxu0 0
        %2499 = vmatmul.mubr.bf16.gmra.mrb[0].mxu0 %v1294
        %v2500 = vpop.f32.mrb[0].mxu0
        %v2501 = vadd.f32 %v656, %v2500
        %v2502 = vpop.f32.mrb[0].mxu0
        %v2503 = vpop.f32.mrb[0].mxu0
        %v2504 = vadd.f32 %v656, %v2503
        %v2505 = vpop.f32.mrb[0].mxu0
        %2506 = vmatprep.mubr.bf16.mxu0 0
        %2507 = vmatmul.mubr.bf16.gmra.mrb[0].mxu0 %v1295
        %v2508 = vpop.f32.mrb[0].mxu0
        %v2509 = vadd.f32 %v656, %v2508
        %v2510 = vpop.f32.mrb[0].mxu0
        %v2511 = vpop.f32.mrb[0].mxu0
        %v2512 = vadd.f32 %v656, %v2511
        %v2513 = vpop.f32.mrb[0].mxu0
        %2514 = vmatprep.mubr.bf16.mxu0 0
        %2515 = vmatmul.mubr.bf16.gmra.mrb[0].mxu0 %v1296
        %v2516 = vpop.f32.mrb[0].mxu0
        %v2517 = vadd.f32 %v656, %v2516
        %v2518 = vpop.f32.mrb[0].mxu0
        %v2519 = vpop.f32.mrb[0].mxu0
        %v2520 = vadd.f32 %v656, %v2519
        %v2521 = vpop.f32.mrb[0].mxu0
        %2522 = vmatprep.mubr.bf16.mxu0 0
        %2523 = vmatmul.mubr.bf16.gmra.mrb[0].mxu0 %v1297
        %v2524 = vpop.f32.mrb[0].mxu0
        %v2525 = vadd.f32 %v656, %v2524
        %v2526 = vpop.f32.mrb[0].mxu0
        %v2527 = vpop.f32.mrb[0].mxu0
        %v2528 = vadd.f32 %v656, %v2527
        %v2529 = vpop.f32.mrb[0].mxu0
        %2530 = vdwg.mxu0
        %v2531 = vmax.f32 %v1509, 0.0
        %v2532 = vmax.f32 %v1512, 0.0
        %v2533 = vmax.f32 %v1517, 0.0
        %v2534 = vmax.f32 %v1520, 0.0
        %v2535 = vmax.f32 %v1525, 0.0
        %v2536 = vmax.f32 %v1528, 0.0
        %v2537 = vmax.f32 %v1533, 0.0
        %v2538 = vmax.f32 %v1536, 0.0
        %v2539 = vmax.f32 %v1541, 0.0
        %v2540 = vmax.f32 %v1544, 0.0
        %v2541 = vmax.f32 %v1549, 0.0
        %v2542 = vmax.f32 %v1552, 0.0
        %v2543 = vmax.f32 %v1557, 0.0
        %v2544 = vmax.f32 %v1560, 0.0
        %v2545 = vmax.f32 %v1565, 0.0
        %v2546 = vmax.f32 %v1568, 0.0
        %v2547 = vmax.f32 %v1573, 0.0
        %v2548 = vmax.f32 %v1576, 0.0
        %v2549 = vmax.f32 %v1581, 0.0
        %v2550 = vmax.f32 %v1584, 0.0
        %v2551 = vmax.f32 %v1589, 0.0
        %v2552 = vmax.f32 %v1592, 0.0
        %v2553 = vmax.f32 %v1597, 0.0
        %v2554 = vmax.f32 %v1600, 0.0
        %v2555 = vmax.f32 %v1605, 0.0
        %v2556 = vmax.f32 %v1608, 0.0
        %v2557 = vmax.f32 %v1613, 0.0
        %v2558 = vmax.f32 %v1616, 0.0
        %v2559 = vmax.f32 %v1621, 0.0
        %v2560 = vmax.f32 %v1624, 0.0
        %v2561 = vmax.f32 %v1629, 0.0
        %v2562 = vmax.f32 %v1632, 0.0
        %v2563 = vmax.f32 %v1637, 0.0
        %v2564 = vmax.f32 %v1640, 0.0
        %v2565 = vmax.f32 %v1645, 0.0
        %v2566 = vmax.f32 %v1648, 0.0
        %v2567 = vmax.f32 %v1653, 0.0
        %v2568 = vmax.f32 %v1656, 0.0
        %v2569 = vmax.f32 %v1661, 0.0
        %v2570 = vmax.f32 %v1664, 0.0
        %v2571 = vmax.f32 %v1669, 0.0
        %v2572 = vmax.f32 %v1672, 0.0
        %v2573 = vmax.f32 %v1677, 0.0
        %v2574 = vmax.f32 %v1680, 0.0
        %v2575 = vmax.f32 %v1685, 0.0
        %v2576 = vmax.f32 %v1688, 0.0
        %v2577 = vmax.f32 %v1693, 0.0
        %v2578 = vmax.f32 %v1696, 0.0
        %v2579 = vmax.f32 %v1701, 0.0
        %v2580 = vmax.f32 %v1704, 0.0
        %v2581 = vmax.f32 %v1709, 0.0
        %v2582 = vmax.f32 %v1712, 0.0
        %v2583 = vmax.f32 %v1717, 0.0
        %v2584 = vmax.f32 %v1720, 0.0
        %v2585 = vmax.f32 %v1725, 0.0
        %v2586 = vmax.f32 %v1728, 0.0
        %v2587 = vmax.f32 %v1733, 0.0
        %v2588 = vmax.f32 %v1736, 0.0
        %v2589 = vmax.f32 %v1741, 0.0
        %v2590 = vmax.f32 %v1744, 0.0
        %v2591 = vmax.f32 %v1749, 0.0
        %v2592 = vmax.f32 %v1752, 0.0
        %v2593 = vmax.f32 %v1757, 0.0
        %v2594 = vmax.f32 %v1760, 0.0
        %v2595 = vmax.f32 %v1765, 0.0
        %v2596 = vmax.f32 %v1768, 0.0
        %v2597 = vmax.f32 %v1773, 0.0
        %v2598 = vmax.f32 %v1776, 0.0
        %v2599 = vmax.f32 %v1781, 0.0
        %v2600 = vmax.f32 %v1784, 0.0
        %v2601 = vmax.f32 %v1789, 0.0
        %v2602 = vmax.f32 %v1792, 0.0
        %v2603 = vmax.f32 %v1797, 0.0
        %v2604 = vmax.f32 %v1800, 0.0
        %v2605 = vmax.f32 %v1805, 0.0
        %v2606 = vmax.f32 %v1808, 0.0
        %v2607 = vmax.f32 %v1813, 0.0
        %v2608 = vmax.f32 %v1816, 0.0
        %v2609 = vmax.f32 %v1821, 0.0
        %v2610 = vmax.f32 %v1824, 0.0
        %v2611 = vmax.f32 %v1829, 0.0
        %v2612 = vmax.f32 %v1832, 0.0
        %v2613 = vmax.f32 %v1837, 0.0
        %v2614 = vmax.f32 %v1840, 0.0
        %v2615 = vmax.f32 %v1845, 0.0
        %v2616 = vmax.f32 %v1848, 0.0
        %v2617 = vmax.f32 %v1853, 0.0
        %v2618 = vmax.f32 %v1856, 0.0
        %v2619 = vmax.f32 %v1861, 0.0
        %v2620 = vmax.f32 %v1864, 0.0
        %v2621 = vmax.f32 %v1869, 0.0
        %v2622 = vmax.f32 %v1872, 0.0
        %v2623 = vmax.f32 %v1877, 0.0
        %v2624 = vmax.f32 %v1880, 0.0
        %v2625 = vmax.f32 %v1885, 0.0
        %v2626 = vmax.f32 %v1888, 0.0
        %v2627 = vmax.f32 %v1893, 0.0
        %v2628 = vmax.f32 %v1896, 0.0
        %v2629 = vmax.f32 %v1901, 0.0
        %v2630 = vmax.f32 %v1904, 0.0
        %v2631 = vmax.f32 %v1909, 0.0
        %v2632 = vmax.f32 %v1912, 0.0
        %v2633 = vmax.f32 %v1917, 0.0
        %v2634 = vmax.f32 %v1920, 0.0
        %v2635 = vmax.f32 %v1925, 0.0
        %v2636 = vmax.f32 %v1928, 0.0
        %v2637 = vmax.f32 %v1933, 0.0
        %v2638 = vmax.f32 %v1936, 0.0
        %v2639 = vmax.f32 %v1941, 0.0
        %v2640 = vmax.f32 %v1944, 0.0
        %v2641 = vmax.f32 %v1949, 0.0
        %v2642 = vmax.f32 %v1952, 0.0
        %v2643 = vmax.f32 %v1957, 0.0
        %v2644 = vmax.f32 %v1960, 0.0
        %v2645 = vmax.f32 %v1965, 0.0
        %v2646 = vmax.f32 %v1968, 0.0
        %v2647 = vmax.f32 %v1973, 0.0
        %v2648 = vmax.f32 %v1976, 0.0
        %v2649 = vmax.f32 %v1981, 0.0
        %v2650 = vmax.f32 %v1984, 0.0
        %v2651 = vmax.f32 %v1989, 0.0
        %v2652 = vmax.f32 %v1992, 0.0
        %v2653 = vmax.f32 %v1997, 0.0
        %v2654 = vmax.f32 %v2000, 0.0
        %v2655 = vmax.f32 %v2005, 0.0
        %v2656 = vmax.f32 %v2008, 0.0
        %v2657 = vmax.f32 %v2013, 0.0
        %v2658 = vmax.f32 %v2016, 0.0
        %v2659 = vmax.f32 %v2021, 0.0
        %v2660 = vmax.f32 %v2024, 0.0
        %v2661 = vmax.f32 %v2029, 0.0
        %v2662 = vmax.f32 %v2032, 0.0
        %v2663 = vmax.f32 %v2037, 0.0
        %v2664 = vmax.f32 %v2040, 0.0
        %v2665 = vmax.f32 %v2045, 0.0
        %v2666 = vmax.f32 %v2048, 0.0
        %v2667 = vmax.f32 %v2053, 0.0
        %v2668 = vmax.f32 %v2056, 0.0
        %v2669 = vmax.f32 %v2061, 0.0
        %v2670 = vmax.f32 %v2064, 0.0
        %v2671 = vmax.f32 %v2069, 0.0
        %v2672 = vmax.f32 %v2072, 0.0
        %v2673 = vmax.f32 %v2077, 0.0
        %v2674 = vmax.f32 %v2080, 0.0
        %v2675 = vmax.f32 %v2085, 0.0
        %v2676 = vmax.f32 %v2088, 0.0
        %v2677 = vmax.f32 %v2093, 0.0
        %v2678 = vmax.f32 %v2096, 0.0
        %v2679 = vmax.f32 %v2101, 0.0
        %v2680 = vmax.f32 %v2104, 0.0
        %v2681 = vmax.f32 %v2109, 0.0
        %v2682 = vmax.f32 %v2112, 0.0
        %v2683 = vmax.f32 %v2117, 0.0
        %v2684 = vmax.f32 %v2120, 0.0
        %v2685 = vmax.f32 %v2125, 0.0
        %v2686 = vmax.f32 %v2128, 0.0
        %v2687 = vmax.f32 %v2133, 0.0
        %v2688 = vmax.f32 %v2136, 0.0
        %v2689 = vmax.f32 %v2141, 0.0
        %v2690 = vmax.f32 %v2144, 0.0
        %v2691 = vmax.f32 %v2149, 0.0
        %v2692 = vmax.f32 %v2152, 0.0
        %v2693 = vmax.f32 %v2157, 0.0
        %v2694 = vmax.f32 %v2160, 0.0
        %v2695 = vmax.f32 %v2165, 0.0
        %v2696 = vmax.f32 %v2168, 0.0
        %v2697 = vmax.f32 %v2173, 0.0
        %v2698 = vmax.f32 %v2176, 0.0
        %v2699 = vmax.f32 %v2181, 0.0
        %v2700 = vmax.f32 %v2184, 0.0
        %v2701 = vmax.f32 %v2189, 0.0
        %v2702 = vmax.f32 %v2192, 0.0
        %v2703 = vmax.f32 %v2197, 0.0
        %v2704 = vmax.f32 %v2200, 0.0
        %v2705 = vmax.f32 %v2205, 0.0
        %v2706 = vmax.f32 %v2208, 0.0
        %v2707 = vmax.f32 %v2213, 0.0
        %v2708 = vmax.f32 %v2216, 0.0
        %v2709 = vmax.f32 %v2221, 0.0
        %v2710 = vmax.f32 %v2224, 0.0
        %v2711 = vmax.f32 %v2229, 0.0
        %v2712 = vmax.f32 %v2232, 0.0
        %v2713 = vmax.f32 %v2237, 0.0
        %v2714 = vmax.f32 %v2240, 0.0
        %v2715 = vmax.f32 %v2245, 0.0
        %v2716 = vmax.f32 %v2248, 0.0
        %v2717 = vmax.f32 %v2253, 0.0
        %v2718 = vmax.f32 %v2256, 0.0
        %v2719 = vmax.f32 %v2261, 0.0
        %v2720 = vmax.f32 %v2264, 0.0
        %v2721 = vmax.f32 %v2269, 0.0
        %v2722 = vmax.f32 %v2272, 0.0
        %v2723 = vmax.f32 %v2277, 0.0
        %v2724 = vmax.f32 %v2280, 0.0
        %v2725 = vmax.f32 %v2285, 0.0
        %v2726 = vmax.f32 %v2288, 0.0
        %v2727 = vmax.f32 %v2293, 0.0
        %v2728 = vmax.f32 %v2296, 0.0
        %v2729 = vmax.f32 %v2301, 0.0
        %v2730 = vmax.f32 %v2304, 0.0
        %v2731 = vmax.f32 %v2309, 0.0
        %v2732 = vmax.f32 %v2312, 0.0
        %v2733 = vmax.f32 %v2317, 0.0
        %v2734 = vmax.f32 %v2320, 0.0
        %v2735 = vmax.f32 %v2325, 0.0
        %v2736 = vmax.f32 %v2328, 0.0
        %v2737 = vmax.f32 %v2333, 0.0
        %v2738 = vmax.f32 %v2336, 0.0
        %v2739 = vmax.f32 %v2341, 0.0
        %v2740 = vmax.f32 %v2344, 0.0
        %v2741 = vmax.f32 %v2349, 0.0
        %v2742 = vmax.f32 %v2352, 0.0
        %v2743 = vmax.f32 %v2357, 0.0
        %v2744 = vmax.f32 %v2360, 0.0
        %v2745 = vmax.f32 %v2365, 0.0
        %v2746 = vmax.f32 %v2368, 0.0
        %v2747 = vmax.f32 %v2373, 0.0
        %v2748 = vmax.f32 %v2376, 0.0
        %v2749 = vmax.f32 %v2381, 0.0
        %v2750 = vmax.f32 %v2384, 0.0
        %v2751 = vmax.f32 %v2389, 0.0
        %v2752 = vmax.f32 %v2392, 0.0
        %v2753 = vmax.f32 %v2397, 0.0
        %v2754 = vmax.f32 %v2400, 0.0
        %v2755 = vmax.f32 %v2405, 0.0
        %v2756 = vmax.f32 %v2408, 0.0
        %v2757 = vmax.f32 %v2413, 0.0
        %v2758 = vmax.f32 %v2416, 0.0
        %v2759 = vmax.f32 %v2421, 0.0
        %v2760 = vmax.f32 %v2424, 0.0
        %v2761 = vmax.f32 %v2429, 0.0
        %v2762 = vmax.f32 %v2432, 0.0
        %v2763 = vmax.f32 %v2437, 0.0
        %v2764 = vmax.f32 %v2440, 0.0
        %v2765 = vmax.f32 %v2445, 0.0
        %v2766 = vmax.f32 %v2448, 0.0
        %v2767 = vmax.f32 %v2453, 0.0
        %v2768 = vmax.f32 %v2456, 0.0
        %v2769 = vmax.f32 %v2461, 0.0
        %v2770 = vmax.f32 %v2464, 0.0
        %v2771 = vmax.f32 %v2469, 0.0
        %v2772 = vmax.f32 %v2472, 0.0
        %v2773 = vmax.f32 %v2477, 0.0
        %v2774 = vmax.f32 %v2480, 0.0
        %v2775 = vmax.f32 %v2485, 0.0
        %v2776 = vmax.f32 %v2488, 0.0
        %v2777 = vmax.f32 %v2493, 0.0
        %v2778 = vmax.f32 %v2496, 0.0
        %v2779 = vmax.f32 %v2501, 0.0
        %v2780 = vmax.f32 %v2504, 0.0
        %v2781 = vmax.f32 %v2509, 0.0
        %v2782 = vmax.f32 %v2512, 0.0
        %v2783 = vmax.f32 %v2517, 0.0
        %v2784 = vmax.f32 %v2520, 0.0
        %v2785 = vmax.f32 %v2525, 0.0
        %v2786 = vmax.f32 %v2528, 0.0
        %2787 = vmatprep.subr.mxu0 0.0
        %2788 = vmatpush1.msra.mxu0 %v2531
        %2789 = vmatprep.subr.mxu0 0.0
        %2790 = vmatpush1.msra.mxu0 %v2532
        %2791 = vmatprep.subr.mxu0 0.0
        %2792 = vmatpush1.msra.mxu0 %v2533
        %2793 = vmatprep.subr.mxu0 0.0
        %2794 = vmatpush1.msra.mxu0 %v2534
        %2795 = vmatprep.subr.mxu0 0.0
        %2796 = vmatpush1.msra.mxu0 %v2535
        %2797 = vmatprep.subr.mxu0 0.0
        %2798 = vmatpush1.msra.mxu0 %v2536
        %2799 = vmatprep.subr.mxu0 0.0
        %2800 = vmatpush1.msra.mxu0 %v2537
        %2801 = vmatprep.subr.mxu0 0.0
        %2802 = vmatpush1.msra.mxu0 %v2538
        %2803 = vmatprep.subr.mxu0 0.0
        %2804 = vmatpush1.msra.mxu0 %v2539
        %2805 = vmatprep.subr.mxu0 0.0
        %2806 = vmatpush1.msra.mxu0 %v2540
        %2807 = vmatprep.subr.mxu0 0.0
        %2808 = vmatpush1.msra.mxu0 %v2541
        %2809 = vmatprep.subr.mxu0 0.0
        %2810 = vmatpush1.msra.mxu0 %v2542
        %2811 = vmatprep.subr.mxu0 0.0
        %2812 = vmatpush1.msra.mxu0 %v2543
        %2813 = vmatprep.subr.mxu0 0.0
        %2814 = vmatpush1.msra.mxu0 %v2544
        %2815 = vmatprep.subr.mxu0 0.0
        %2816 = vmatpush1.msra.mxu0 %v2545
        %2817 = vmatprep.subr.mxu0 0.0
        %2818 = vmatpush1.msra.mxu0 %v2546
        %2819 = vmatprep.subr.mxu0 0.0
        %2820 = vmatpush1.msra.mxu0 %v2547
        %2821 = vmatprep.subr.mxu0 0.0
        %2822 = vmatpush1.msra.mxu0 %v2548
        %2823 = vmatprep.subr.mxu0 0.0
        %2824 = vmatpush1.msra.mxu0 %v2549
        %2825 = vmatprep.subr.mxu0 0.0
        %2826 = vmatpush1.msra.mxu0 %v2550
        %2827 = vmatprep.subr.mxu0 0.0
        %2828 = vmatpush1.msra.mxu0 %v2551
        %2829 = vmatprep.subr.mxu0 0.0
        %2830 = vmatpush1.msra.mxu0 %v2552
        %2831 = vmatprep.subr.mxu0 0.0
        %2832 = vmatpush1.msra.mxu0 %v2553
        %2833 = vmatprep.subr.mxu0 0.0
        %2834 = vmatpush1.msra.mxu0 %v2554
        %2835 = vmatprep.subr.mxu0 0.0
        %2836 = vmatpush1.msra.mxu0 %v2555
        %2837 = vmatprep.subr.mxu0 0.0
        %2838 = vmatpush1.msra.mxu0 %v2556
        %2839 = vmatprep.subr.mxu0 0.0
        %2840 = vmatpush1.msra.mxu0 %v2557
        %2841 = vmatprep.subr.mxu0 0.0
        %2842 = vmatpush1.msra.mxu0 %v2558
        %2843 = vmatprep.subr.mxu0 0.0
        %2844 = vmatpush1.msra.mxu0 %v2559
        %2845 = vmatprep.subr.mxu0 0.0
        %2846 = vmatpush1.msra.mxu0 %v2560
        %2847 = vmatprep.subr.mxu0 0.0
        %2848 = vmatpush1.msra.mxu0 %v2561
        %2849 = vmatprep.subr.mxu0 0.0
        %2850 = vmatpush1.msra.mxu0 %v2562
        %2851 = vmatprep.mubr.f32.mxu0 0.00048828125
        %2852 = vmatmul.mubr.f32.gmra.mrb[0].mxu0 0.00048828125
        %v2853 = vpop.f32.mrb[0].mxu0
        %v2854 = vadd.f32 0.0, %v2853
        %v2855 = vpop.f32.mrb[0].mxu0
        %2856 = vdwg.mxu0
        %2857 = vmatprep.subr.mxu0 0.0
        %2858 = vmatpush1.msra.mxu0 %v2563
        %2859 = vmatprep.subr.mxu0 0.0
        %2860 = vmatpush1.msra.mxu0 %v2564
        %2861 = vmatprep.subr.mxu0 0.0
        %2862 = vmatpush1.msra.mxu0 %v2565
        %2863 = vmatprep.subr.mxu0 0.0
        %2864 = vmatpush1.msra.mxu0 %v2566
        %2865 = vmatprep.subr.mxu0 0.0
        %2866 = vmatpush1.msra.mxu0 %v2567
        %2867 = vmatprep.subr.mxu0 0.0
        %2868 = vmatpush1.msra.mxu0 %v2568
        %2869 = vmatprep.subr.mxu0 0.0
        %2870 = vmatpush1.msra.mxu0 %v2569
        %2871 = vmatprep.subr.mxu0 0.0
        %2872 = vmatpush1.msra.mxu0 %v2570
        %2873 = vmatprep.subr.mxu0 0.0
        %2874 = vmatpush1.msra.mxu0 %v2571
        %2875 = vmatprep.subr.mxu0 0.0
        %2876 = vmatpush1.msra.mxu0 %v2572
        %2877 = vmatprep.subr.mxu0 0.0
        %2878 = vmatpush1.msra.mxu0 %v2573
        %2879 = vmatprep.subr.mxu0 0.0
        %2880 = vmatpush1.msra.mxu0 %v2574
        %2881 = vmatprep.subr.mxu0 0.0
        %2882 = vmatpush1.msra.mxu0 %v2575
        %2883 = vmatprep.subr.mxu0 0.0
        %2884 = vmatpush1.msra.mxu0 %v2576
        %2885 = vmatprep.subr.mxu0 0.0
        %2886 = vmatpush1.msra.mxu0 %v2577
        %2887 = vmatprep.subr.mxu0 0.0
        %2888 = vmatpush1.msra.mxu0 %v2578
        %2889 = vmatprep.subr.mxu0 0.0
        %2890 = vmatpush1.msra.mxu0 %v2579
        %2891 = vmatprep.subr.mxu0 0.0
        %2892 = vmatpush1.msra.mxu0 %v2580
        %2893 = vmatprep.subr.mxu0 0.0
        %2894 = vmatpush1.msra.mxu0 %v2581
        %2895 = vmatprep.subr.mxu0 0.0
        %2896 = vmatpush1.msra.mxu0 %v2582
        %2897 = vmatprep.subr.mxu0 0.0
        %2898 = vmatpush1.msra.mxu0 %v2583
        %2899 = vmatprep.subr.mxu0 0.0
        %2900 = vmatpush1.msra.mxu0 %v2584
        %2901 = vmatprep.subr.mxu0 0.0
        %2902 = vmatpush1.msra.mxu0 %v2585
        %2903 = vmatprep.subr.mxu0 0.0
        %2904 = vmatpush1.msra.mxu0 %v2586
        %2905 = vmatprep.subr.mxu0 0.0
        %2906 = vmatpush1.msra.mxu0 %v2587
        %2907 = vmatprep.subr.mxu0 0.0
        %2908 = vmatpush1.msra.mxu0 %v2588
        %2909 = vmatprep.subr.mxu0 0.0
        %2910 = vmatpush1.msra.mxu0 %v2589
        %2911 = vmatprep.subr.mxu0 0.0
        %2912 = vmatpush1.msra.mxu0 %v2590
        %2913 = vmatprep.subr.mxu0 0.0
        %2914 = vmatpush1.msra.mxu0 %v2591
        %2915 = vmatprep.subr.mxu0 0.0
        %2916 = vmatpush1.msra.mxu0 %v2592
        %2917 = vmatprep.subr.mxu0 0.0
        %2918 = vmatpush1.msra.mxu0 %v2593
        %2919 = vmatprep.subr.mxu0 0.0
        %2920 = vmatpush1.msra.mxu0 %v2594
        %2921 = vmatprep.mubr.f32.mxu0 0.00048828125
        %2922 = vmatmul.mubr.f32.gmra.mrb[0].mxu0 0.00048828125
        %v2923 = vpop.f32.mrb[0].mxu0
        %v2924 = vadd.f32 %v2854, %v2923
        %v2925 = vpop.f32.mrb[0].mxu0
        %2926 = vdwg.mxu0
        %2927 = vmatprep.subr.mxu0 0.0
        %2928 = vmatpush1.msra.mxu0 %v2595
        %2929 = vmatprep.subr.mxu0 0.0
        %2930 = vmatpush1.msra.mxu0 %v2596
        %2931 = vmatprep.subr.mxu0 0.0
        %2932 = vmatpush1.msra.mxu0 %v2597
        %2933 = vmatprep.subr.mxu0 0.0
        %2934 = vmatpush1.msra.mxu0 %v2598
        %2935 = vmatprep.subr.mxu0 0.0
        %2936 = vmatpush1.msra.mxu0 %v2599
        %2937 = vmatprep.subr.mxu0 0.0
        %2938 = vmatpush1.msra.mxu0 %v2600
        %2939 = vmatprep.subr.mxu0 0.0
        %2940 = vmatpush1.msra.mxu0 %v2601
        %2941 = vmatprep.subr.mxu0 0.0
        %2942 = vmatpush1.msra.mxu0 %v2602
        %2943 = vmatprep.subr.mxu0 0.0
        %2944 = vmatpush1.msra.mxu0 %v2603
        %2945 = vmatprep.subr.mxu0 0.0
        %2946 = vmatpush1.msra.mxu0 %v2604
        %2947 = vmatprep.subr.mxu0 0.0
        %2948 = vmatpush1.msra.mxu0 %v2605
        %2949 = vmatprep.subr.mxu0 0.0
        %2950 = vmatpush1.msra.mxu0 %v2606
        %2951 = vmatprep.subr.mxu0 0.0
        %2952 = vmatpush1.msra.mxu0 %v2607
        %2953 = vmatprep.subr.mxu0 0.0
        %2954 = vmatpush1.msra.mxu0 %v2608
        %2955 = vmatprep.subr.mxu0 0.0
        %2956 = vmatpush1.msra.mxu0 %v2609
        %2957 = vmatprep.subr.mxu0 0.0
        %2958 = vmatpush1.msra.mxu0 %v2610
        %2959 = vmatprep.subr.mxu0 0.0
        %2960 = vmatpush1.msra.mxu0 %v2611
        %2961 = vmatprep.subr.mxu0 0.0
        %2962 = vmatpush1.msra.mxu0 %v2612
        %2963 = vmatprep.subr.mxu0 0.0
        %2964 = vmatpush1.msra.mxu0 %v2613
        %2965 = vmatprep.subr.mxu0 0.0
        %2966 = vmatpush1.msra.mxu0 %v2614
        %2967 = vmatprep.subr.mxu0 0.0
        %2968 = vmatpush1.msra.mxu0 %v2615
        %2969 = vmatprep.subr.mxu0 0.0
        %2970 = vmatpush1.msra.mxu0 %v2616
        %2971 = vmatprep.subr.mxu0 0.0
        %2972 = vmatpush1.msra.mxu0 %v2617
        %2973 = vmatprep.subr.mxu0 0.0
        %2974 = vmatpush1.msra.mxu0 %v2618
        %2975 = vmatprep.subr.mxu0 0.0
        %2976 = vmatpush1.msra.mxu0 %v2619
        %2977 = vmatprep.subr.mxu0 0.0
        %2978 = vmatpush1.msra.mxu0 %v2620
        %2979 = vmatprep.subr.mxu0 0.0
        %2980 = vmatpush1.msra.mxu0 %v2621
        %2981 = vmatprep.subr.mxu0 0.0
        %2982 = vmatpush1.msra.mxu0 %v2622
        %2983 = vmatprep.subr.mxu0 0.0
        %2984 = vmatpush1.msra.mxu0 %v2623
        %2985 = vmatprep.subr.mxu0 0.0
        %2986 = vmatpush1.msra.mxu0 %v2624
        %2987 = vmatprep.subr.mxu0 0.0
        %2988 = vmatpush1.msra.mxu0 %v2625
        %2989 = vmatprep.subr.mxu0 0.0
        %2990 = vmatpush1.msra.mxu0 %v2626
        %2991 = vmatprep.mubr.f32.mxu0 0.00048828125
        %2992 = vmatmul.mubr.f32.gmra.mrb[0].mxu0 0.00048828125
        %v2993 = vpop.f32.mrb[0].mxu0
        %v2994 = vadd.f32 %v2924, %v2993
        %v2995 = vpop.f32.mrb[0].mxu0
        %2996 = vdwg.mxu0
        %2997 = vmatprep.subr.mxu0 0.0
        %2998 = vmatpush1.msra.mxu0 %v2627
        %2999 = vmatprep.subr.mxu0 0.0
        %3000 = vmatpush1.msra.mxu0 %v2628
        %3001 = vmatprep.subr.mxu0 0.0
        %3002 = vmatpush1.msra.mxu0 %v2629
        %3003 = vmatprep.subr.mxu0 0.0
        %3004 = vmatpush1.msra.mxu0 %v2630
        %3005 = vmatprep.subr.mxu0 0.0
        %3006 = vmatpush1.msra.mxu0 %v2631
        %3007 = vmatprep.subr.mxu0 0.0
        %3008 = vmatpush1.msra.mxu0 %v2632
        %3009 = vmatprep.subr.mxu0 0.0
        %3010 = vmatpush1.msra.mxu0 %v2633
        %3011 = vmatprep.subr.mxu0 0.0
        %3012 = vmatpush1.msra.mxu0 %v2634
        %3013 = vmatprep.subr.mxu0 0.0
        %3014 = vmatpush1.msra.mxu0 %v2635
        %3015 = vmatprep.subr.mxu0 0.0
        %3016 = vmatpush1.msra.mxu0 %v2636
        %3017 = vmatprep.subr.mxu0 0.0
        %3018 = vmatpush1.msra.mxu0 %v2637
        %3019 = vmatprep.subr.mxu0 0.0
        %3020 = vmatpush1.msra.mxu0 %v2638
        %3021 = vmatprep.subr.mxu0 0.0
        %3022 = vmatpush1.msra.mxu0 %v2639
        %3023 = vmatprep.subr.mxu0 0.0
        %3024 = vmatpush1.msra.mxu0 %v2640
        %3025 = vmatprep.subr.mxu0 0.0
        %3026 = vmatpush1.msra.mxu0 %v2641
        %3027 = vmatprep.subr.mxu0 0.0
        %3028 = vmatpush1.msra.mxu0 %v2642
        %3029 = vmatprep.subr.mxu0 0.0
        %3030 = vmatpush1.msra.mxu0 %v2643
        %3031 = vmatprep.subr.mxu0 0.0
        %3032 = vmatpush1.msra.mxu0 %v2644
        %3033 = vmatprep.subr.mxu0 0.0
        %3034 = vmatpush1.msra.mxu0 %v2645
        %3035 = vmatprep.subr.mxu0 0.0
        %3036 = vmatpush1.msra.mxu0 %v2646
        %3037 = vmatprep.subr.mxu0 0.0
        %3038 = vmatpush1.msra.mxu0 %v2647
        %3039 = vmatprep.subr.mxu0 0.0
        %3040 = vmatpush1.msra.mxu0 %v2648
        %3041 = vmatprep.subr.mxu0 0.0
        %3042 = vmatpush1.msra.mxu0 %v2649
        %3043 = vmatprep.subr.mxu0 0.0
        %3044 = vmatpush1.msra.mxu0 %v2650
        %3045 = vmatprep.subr.mxu0 0.0
        %3046 = vmatpush1.msra.mxu0 %v2651
        %3047 = vmatprep.subr.mxu0 0.0
        %3048 = vmatpush1.msra.mxu0 %v2652
        %3049 = vmatprep.subr.mxu0 0.0
        %3050 = vmatpush1.msra.mxu0 %v2653
        %3051 = vmatprep.subr.mxu0 0.0
        %3052 = vmatpush1.msra.mxu0 %v2654
        %3053 = vmatprep.subr.mxu0 0.0
        %3054 = vmatpush1.msra.mxu0 %v2655
        %3055 = vmatprep.subr.mxu0 0.0
        %3056 = vmatpush1.msra.mxu0 %v2656
        %3057 = vmatprep.subr.mxu0 0.0
        %3058 = vmatpush1.msra.mxu0 %v2657
        %3059 = vmatprep.subr.mxu0 0.0
        %3060 = vmatpush1.msra.mxu0 %v2658
        %3061 = vmatprep.mubr.f32.mxu0 0.00048828125
        %3062 = vmatmul.mubr.f32.gmra.mrb[0].mxu0 0.00048828125
        %v3063 = vpop.f32.mrb[0].mxu0
        %v3064 = vadd.f32 %v2994, %v3063
        %v3065 = vpop.f32.mrb[0].mxu0
        %3066 = vdwg.mxu0
        %3067 = vmatprep.subr.mxu0 0.0
        %3068 = vmatpush1.msra.mxu0 %v2659
        %3069 = vmatprep.subr.mxu0 0.0
        %3070 = vmatpush1.msra.mxu0 %v2660
        %3071 = vmatprep.subr.mxu0 0.0
        %3072 = vmatpush1.msra.mxu0 %v2661
        %3073 = vmatprep.subr.mxu0 0.0
        %3074 = vmatpush1.msra.mxu0 %v2662
        %3075 = vmatprep.subr.mxu0 0.0
        %3076 = vmatpush1.msra.mxu0 %v2663
        %3077 = vmatprep.subr.mxu0 0.0
        %3078 = vmatpush1.msra.mxu0 %v2664
        %3079 = vmatprep.subr.mxu0 0.0
        %3080 = vmatpush1.msra.mxu0 %v2665
        %3081 = vmatprep.subr.mxu0 0.0
        %3082 = vmatpush1.msra.mxu0 %v2666
        %3083 = vmatprep.subr.mxu0 0.0
        %3084 = vmatpush1.msra.mxu0 %v2667
        %3085 = vmatprep.subr.mxu0 0.0
        %3086 = vmatpush1.msra.mxu0 %v2668
        %3087 = vmatprep.subr.mxu0 0.0
        %3088 = vmatpush1.msra.mxu0 %v2669
        %3089 = vmatprep.subr.mxu0 0.0
        %3090 = vmatpush1.msra.mxu0 %v2670
        %3091 = vmatprep.subr.mxu0 0.0
        %3092 = vmatpush1.msra.mxu0 %v2671
        %3093 = vmatprep.subr.mxu0 0.0
        %3094 = vmatpush1.msra.mxu0 %v2672
        %3095 = vmatprep.subr.mxu0 0.0
        %3096 = vmatpush1.msra.mxu0 %v2673
        %3097 = vmatprep.subr.mxu0 0.0
        %3098 = vmatpush1.msra.mxu0 %v2674
        %3099 = vmatprep.subr.mxu0 0.0
        %3100 = vmatpush1.msra.mxu0 %v2675
        %3101 = vmatprep.subr.mxu0 0.0
        %3102 = vmatpush1.msra.mxu0 %v2676
        %3103 = vmatprep.subr.mxu0 0.0
        %3104 = vmatpush1.msra.mxu0 %v2677
        %3105 = vmatprep.subr.mxu0 0.0
        %3106 = vmatpush1.msra.mxu0 %v2678
        %3107 = vmatprep.subr.mxu0 0.0
        %3108 = vmatpush1.msra.mxu0 %v2679
        %3109 = vmatprep.subr.mxu0 0.0
        %3110 = vmatpush1.msra.mxu0 %v2680
        %3111 = vmatprep.subr.mxu0 0.0
        %3112 = vmatpush1.msra.mxu0 %v2681
        %3113 = vmatprep.subr.mxu0 0.0
        %3114 = vmatpush1.msra.mxu0 %v2682
        %3115 = vmatprep.subr.mxu0 0.0
        %3116 = vmatpush1.msra.mxu0 %v2683
        %3117 = vmatprep.subr.mxu0 0.0
        %3118 = vmatpush1.msra.mxu0 %v2684
        %3119 = vmatprep.subr.mxu0 0.0
        %3120 = vmatpush1.msra.mxu0 %v2685
        %3121 = vmatprep.subr.mxu0 0.0
        %3122 = vmatpush1.msra.mxu0 %v2686
        %3123 = vmatprep.subr.mxu0 0.0
        %3124 = vmatpush1.msra.mxu0 %v2687
        %3125 = vmatprep.subr.mxu0 0.0
        %3126 = vmatpush1.msra.mxu0 %v2688
        %3127 = vmatprep.subr.mxu0 0.0
        %3128 = vmatpush1.msra.mxu0 %v2689
        %3129 = vmatprep.subr.mxu0 0.0
        %3130 = vmatpush1.msra.mxu0 %v2690
        %3131 = vmatprep.mubr.f32.mxu0 0.00048828125
        %3132 = vmatmul.mubr.f32.gmra.mrb[0].mxu0 0.00048828125
        %v3133 = vpop.f32.mrb[0].mxu0
        %v3134 = vadd.f32 %v3064, %v3133
        %v3135 = vpop.f32.mrb[0].mxu0
        %3136 = vdwg.mxu0
        %3137 = vmatprep.subr.mxu0 0.0
        %3138 = vmatpush1.msra.mxu0 %v2691
        %3139 = vmatprep.subr.mxu0 0.0
        %3140 = vmatpush1.msra.mxu0 %v2692
        %3141 = vmatprep.subr.mxu0 0.0
        %3142 = vmatpush1.msra.mxu0 %v2693
        %3143 = vmatprep.subr.mxu0 0.0
        %3144 = vmatpush1.msra.mxu0 %v2694
        %3145 = vmatprep.subr.mxu0 0.0
        %3146 = vmatpush1.msra.mxu0 %v2695
        %3147 = vmatprep.subr.mxu0 0.0
        %3148 = vmatpush1.msra.mxu0 %v2696
        %3149 = vmatprep.subr.mxu0 0.0
        %3150 = vmatpush1.msra.mxu0 %v2697
        %3151 = vmatprep.subr.mxu0 0.0
        %3152 = vmatpush1.msra.mxu0 %v2698
        %3153 = vmatprep.subr.mxu0 0.0
        %3154 = vmatpush1.msra.mxu0 %v2699
        %3155 = vmatprep.subr.mxu0 0.0
        %3156 = vmatpush1.msra.mxu0 %v2700
        %3157 = vmatprep.subr.mxu0 0.0
        %3158 = vmatpush1.msra.mxu0 %v2701
        %3159 = vmatprep.subr.mxu0 0.0
        %3160 = vmatpush1.msra.mxu0 %v2702
        %3161 = vmatprep.subr.mxu0 0.0
        %3162 = vmatpush1.msra.mxu0 %v2703
        %3163 = vmatprep.subr.mxu0 0.0
        %3164 = vmatpush1.msra.mxu0 %v2704
        %3165 = vmatprep.subr.mxu0 0.0
        %3166 = vmatpush1.msra.mxu0 %v2705
        %3167 = vmatprep.subr.mxu0 0.0
        %3168 = vmatpush1.msra.mxu0 %v2706
        %3169 = vmatprep.subr.mxu0 0.0
        %3170 = vmatpush1.msra.mxu0 %v2707
        %3171 = vmatprep.subr.mxu0 0.0
        %3172 = vmatpush1.msra.mxu0 %v2708
        %3173 = vmatprep.subr.mxu0 0.0
        %3174 = vmatpush1.msra.mxu0 %v2709
        %3175 = vmatprep.subr.mxu0 0.0
        %3176 = vmatpush1.msra.mxu0 %v2710
        %3177 = vmatprep.subr.mxu0 0.0
        %3178 = vmatpush1.msra.mxu0 %v2711
        %3179 = vmatprep.subr.mxu0 0.0
        %3180 = vmatpush1.msra.mxu0 %v2712
        %3181 = vmatprep.subr.mxu0 0.0
        %3182 = vmatpush1.msra.mxu0 %v2713
        %3183 = vmatprep.subr.mxu0 0.0
        %3184 = vmatpush1.msra.mxu0 %v2714
        %3185 = vmatprep.subr.mxu0 0.0
        %3186 = vmatpush1.msra.mxu0 %v2715
        %3187 = vmatprep.subr.mxu0 0.0
        %3188 = vmatpush1.msra.mxu0 %v2716
        %3189 = vmatprep.subr.mxu0 0.0
        %3190 = vmatpush1.msra.mxu0 %v2717
        %3191 = vmatprep.subr.mxu0 0.0
        %3192 = vmatpush1.msra.mxu0 %v2718
        %3193 = vmatprep.subr.mxu0 0.0
        %3194 = vmatpush1.msra.mxu0 %v2719
        %3195 = vmatprep.subr.mxu0 0.0
        %3196 = vmatpush1.msra.mxu0 %v2720
        %3197 = vmatprep.subr.mxu0 0.0
        %3198 = vmatpush1.msra.mxu0 %v2721
        %3199 = vmatprep.subr.mxu0 0.0
        %3200 = vmatpush1.msra.mxu0 %v2722
        %3201 = vmatprep.mubr.f32.mxu0 0.00048828125
        %3202 = vmatmul.mubr.f32.gmra.mrb[0].mxu0 0.00048828125
        %v3203 = vpop.f32.mrb[0].mxu0
        %v3204 = vadd.f32 %v3134, %v3203
        %v3205 = vpop.f32.mrb[0].mxu0
        %3206 = vdwg.mxu0
        %3207 = vmatprep.subr.mxu0 0.0
        %3208 = vmatpush1.msra.mxu0 %v2723
        %3209 = vmatprep.subr.mxu0 0.0
        %3210 = vmatpush1.msra.mxu0 %v2724
        %3211 = vmatprep.subr.mxu0 0.0
        %3212 = vmatpush1.msra.mxu0 %v2725
        %3213 = vmatprep.subr.mxu0 0.0
        %3214 = vmatpush1.msra.mxu0 %v2726
        %3215 = vmatprep.subr.mxu0 0.0
        %3216 = vmatpush1.msra.mxu0 %v2727
        %3217 = vmatprep.subr.mxu0 0.0
        %3218 = vmatpush1.msra.mxu0 %v2728
        %3219 = vmatprep.subr.mxu0 0.0
        %3220 = vmatpush1.msra.mxu0 %v2729
        %3221 = vmatprep.subr.mxu0 0.0
        %3222 = vmatpush1.msra.mxu0 %v2730
        %3223 = vmatprep.subr.mxu0 0.0
        %3224 = vmatpush1.msra.mxu0 %v2731
        %3225 = vmatprep.subr.mxu0 0.0
        %3226 = vmatpush1.msra.mxu0 %v2732
        %3227 = vmatprep.subr.mxu0 0.0
        %3228 = vmatpush1.msra.mxu0 %v2733
        %3229 = vmatprep.subr.mxu0 0.0
        %3230 = vmatpush1.msra.mxu0 %v2734
        %3231 = vmatprep.subr.mxu0 0.0
        %3232 = vmatpush1.msra.mxu0 %v2735
        %3233 = vmatprep.subr.mxu0 0.0
        %3234 = vmatpush1.msra.mxu0 %v2736
        %3235 = vmatprep.subr.mxu0 0.0
        %3236 = vmatpush1.msra.mxu0 %v2737
        %3237 = vmatprep.subr.mxu0 0.0
        %3238 = vmatpush1.msra.mxu0 %v2738
        %3239 = vmatprep.subr.mxu0 0.0
        %3240 = vmatpush1.msra.mxu0 %v2739
        %3241 = vmatprep.subr.mxu0 0.0
        %3242 = vmatpush1.msra.mxu0 %v2740
        %3243 = vmatprep.subr.mxu0 0.0
        %3244 = vmatpush1.msra.mxu0 %v2741
        %3245 = vmatprep.subr.mxu0 0.0
        %3246 = vmatpush1.msra.mxu0 %v2742
        %3247 = vmatprep.subr.mxu0 0.0
        %3248 = vmatpush1.msra.mxu0 %v2743
        %3249 = vmatprep.subr.mxu0 0.0
        %3250 = vmatpush1.msra.mxu0 %v2744
        %3251 = vmatprep.subr.mxu0 0.0
        %3252 = vmatpush1.msra.mxu0 %v2745
        %3253 = vmatprep.subr.mxu0 0.0
        %3254 = vmatpush1.msra.mxu0 %v2746
        %3255 = vmatprep.subr.mxu0 0.0
        %3256 = vmatpush1.msra.mxu0 %v2747
        %3257 = vmatprep.subr.mxu0 0.0
        %3258 = vmatpush1.msra.mxu0 %v2748
        %3259 = vmatprep.subr.mxu0 0.0
        %3260 = vmatpush1.msra.mxu0 %v2749
        %3261 = vmatprep.subr.mxu0 0.0
        %3262 = vmatpush1.msra.mxu0 %v2750
        %3263 = vmatprep.subr.mxu0 0.0
        %3264 = vmatpush1.msra.mxu0 %v2751
        %3265 = vmatprep.subr.mxu0 0.0
        %3266 = vmatpush1.msra.mxu0 %v2752
        %3267 = vmatprep.subr.mxu0 0.0
        %3268 = vmatpush1.msra.mxu0 %v2753
        %3269 = vmatprep.subr.mxu0 0.0
        %3270 = vmatpush1.msra.mxu0 %v2754
        %3271 = vmatprep.mubr.f32.mxu0 0.00048828125
        %3272 = vmatmul.mubr.f32.gmra.mrb[0].mxu0 0.00048828125
        %v3273 = vpop.f32.mrb[0].mxu0
        %v3274 = vadd.f32 %v3204, %v3273
        %v3275 = vpop.f32.mrb[0].mxu0
        %3276 = vdwg.mxu0
        %3277 = vmatprep.subr.mxu0 0.0
        %3278 = vmatpush1.msra.mxu0 %v2755
        %3279 = vmatprep.subr.mxu0 0.0
        %3280 = vmatpush1.msra.mxu0 %v2756
        %3281 = vmatprep.subr.mxu0 0.0
        %3282 = vmatpush1.msra.mxu0 %v2757
        %3283 = vmatprep.subr.mxu0 0.0
        %3284 = vmatpush1.msra.mxu0 %v2758
        %3285 = vmatprep.subr.mxu0 0.0
        %3286 = vmatpush1.msra.mxu0 %v2759
        %3287 = vmatprep.subr.mxu0 0.0
        %3288 = vmatpush1.msra.mxu0 %v2760
        %3289 = vmatprep.subr.mxu0 0.0
        %3290 = vmatpush1.msra.mxu0 %v2761
        %3291 = vmatprep.subr.mxu0 0.0
        %3292 = vmatpush1.msra.mxu0 %v2762
        %3293 = vmatprep.subr.mxu0 0.0
        %3294 = vmatpush1.msra.mxu0 %v2763
        %3295 = vmatprep.subr.mxu0 0.0
        %3296 = vmatpush1.msra.mxu0 %v2764
        %3297 = vmatprep.subr.mxu0 0.0
        %3298 = vmatpush1.msra.mxu0 %v2765
        %3299 = vmatprep.subr.mxu0 0.0
        %3300 = vmatpush1.msra.mxu0 %v2766
        %3301 = vmatprep.subr.mxu0 0.0
        %3302 = vmatpush1.msra.mxu0 %v2767
        %3303 = vmatprep.subr.mxu0 0.0
        %3304 = vmatpush1.msra.mxu0 %v2768
        %3305 = vmatprep.subr.mxu0 0.0
        %3306 = vmatpush1.msra.mxu0 %v2769
        %3307 = vmatprep.subr.mxu0 0.0
        %3308 = vmatpush1.msra.mxu0 %v2770
        %3309 = vmatprep.subr.mxu0 0.0
        %3310 = vmatpush1.msra.mxu0 %v2771
        %3311 = vmatprep.subr.mxu0 0.0
        %3312 = vmatpush1.msra.mxu0 %v2772
        %3313 = vmatprep.subr.mxu0 0.0
        %3314 = vmatpush1.msra.mxu0 %v2773
        %3315 = vmatprep.subr.mxu0 0.0
        %3316 = vmatpush1.msra.mxu0 %v2774
        %3317 = vmatprep.subr.mxu0 0.0
        %3318 = vmatpush1.msra.mxu0 %v2775
        %3319 = vmatprep.subr.mxu0 0.0
        %3320 = vmatpush1.msra.mxu0 %v2776
        %3321 = vmatprep.subr.mxu0 0.0
        %3322 = vmatpush1.msra.mxu0 %v2777
        %3323 = vmatprep.subr.mxu0 0.0
        %3324 = vmatpush1.msra.mxu0 %v2778
        %3325 = vmatprep.subr.mxu0 0.0
        %3326 = vmatpush1.msra.mxu0 %v2779
        %3327 = vmatprep.subr.mxu0 0.0
        %3328 = vmatpush1.msra.mxu0 %v2780
        %3329 = vmatprep.subr.mxu0 0.0
        %3330 = vmatpush1.msra.mxu0 %v2781
        %3331 = vmatprep.subr.mxu0 0.0
        %3332 = vmatpush1.msra.mxu0 %v2782
        %3333 = vmatprep.subr.mxu0 0.0
        %3334 = vmatpush1.msra.mxu0 %v2783
        %3335 = vmatprep.subr.mxu0 0.0
        %3336 = vmatpush1.msra.mxu0 %v2784
        %3337 = vmatprep.subr.mxu0 0.0
        %3338 = vmatpush1.msra.mxu0 %v2785
        %3339 = vmatprep.subr.mxu0 0.0
        %3340 = vmatpush1.msra.mxu0 %v2786
        %3341 = vmatprep.mubr.f32.mxu0 0.00048828125
        %3342 = vmatmul.mubr.f32.gmra.mrb[0].mxu0 0.00048828125
        %v3343 = vpop.f32.mrb[0].mxu0
        %v3344 = vadd.f32 %v3274, %v3343
        %v3345 = vpop.f32.mrb[0].mxu0
        %3346 = vdwg.mxu0
        %v3347 = vld [vmem:[#allocation7] sm:$0xff]
        %v3348 = vld [vmem:[#allocation7 + $0x8] sm:$0xff]
        %v3349 = vld [vmem:[#allocation7 + $0x10] sm:$0xff]
        %v3350 = vld [vmem:[#allocation7 + $0x18] sm:$0xff]
        %v3351 = vld [vmem:[#allocation7 + $0x20] sm:$0xff]
        %v3352 = vld [vmem:[#allocation7 + $0x28] sm:$0xff]
        %v3353 = vld [vmem:[#allocation7 + $0x30] sm:$0xff]
        %v3354 = vld [vmem:[#allocation7 + $0x38] sm:$0xff]
        %v3355 = vld [vmem:[#allocation9] sm:$0x3]
        %v3357 = vlaneseq
        %v3358 = vshrl.u32 %v3357, 7
        %v3359 = vsub.s32 0, %v3358
        %v3360 = vrot.slane %v3355, %v3359
        %v3361 = vlaneseq
        %v3362 = vshrl.u32 %v3361, 7
        %v3363 = vsub.s32 1, %v3362
        %v3364 = vrot.slane %v3355, %v3363
        %vm3367 = vcmask 261120
        %v3369 = vsel %vm3367, %v3344, 0
        %3371 = vmatprep.subr.mxu0 %v3348
        %3372 = vmatpush1.msra.mxu0 %v3347
        %3373 = vmatprep.subr.mxu0 %v3350
        %3374 = vmatpush1.msra.mxu0 %v3349
        %3375 = vmatprep.subr.mxu0 %v3352
        %3376 = vmatpush1.msra.mxu0 %v3351
        %3377 = vmatprep.subr.mxu0 %v3354
        %3378 = vmatpush1.msra.mxu0 %v3353
        %3379 = vmatprep.subr.mxu0 0.0
        %3380 = vmatpush1.msra.mxu0 0.0
        %3381 = vmatprep.subr.mxu0 0.0
        %3382 = vmatpush1.msra.mxu0 0.0
        %3383 = vmatprep.subr.mxu0 0.0
        %3384 = vmatpush1.msra.mxu0 0.0
        %3385 = vmatprep.subr.mxu0 0.0
        %3386 = vmatpush1.msra.mxu0 0.0
        %3387 = vmatprep.subr.mxu0 0.0
        %3388 = vmatpush1.msra.mxu0 0.0
        %3389 = vmatprep.subr.mxu0 0.0
        %3390 = vmatpush1.msra.mxu0 0.0
        %3391 = vmatprep.subr.mxu0 0.0
        %3392 = vmatpush1.msra.mxu0 0.0
        %3393 = vmatprep.subr.mxu0 0.0
        %3394 = vmatpush1.msra.mxu0 0.0
        %3395 = vmatprep.subr.mxu0 0.0
        %3396 = vmatpush1.msra.mxu0 0.0
        %3397 = vmatprep.subr.mxu0 0.0
        %3398 = vmatpush1.msra.mxu0 0.0
        %3399 = vmatprep.subr.mxu0 0.0
        %3400 = vmatpush1.msra.mxu0 0.0
        %3401 = vmatprep.subr.mxu0 0.0
        %3402 = vmatpush1.msra.mxu0 0.0
        %3403 = vmatprep.subr.mxu0 0.0
        %3404 = vmatpush1.msra.mxu0 0.0
        %3405 = vmatprep.subr.mxu0 0.0
        %3406 = vmatpush1.msra.mxu0 0.0
        %3407 = vmatprep.subr.mxu0 0.0
        %3408 = vmatpush1.msra.mxu0 0.0
        %3409 = vmatprep.subr.mxu0 0.0
        %3410 = vmatpush1.msra.mxu0 0.0
        %3411 = vmatprep.subr.mxu0 0.0
        %3412 = vmatpush1.msra.mxu0 0.0
        %3413 = vmatprep.subr.mxu0 0.0
        %3414 = vmatpush1.msra.mxu0 0.0
        %3415 = vmatprep.subr.mxu0 0.0
        %3416 = vmatpush1.msra.mxu0 0.0
        %3417 = vmatprep.subr.mxu0 0.0
        %3418 = vmatpush1.msra.mxu0 0.0
        %3419 = vmatprep.subr.mxu0 0.0
        %3420 = vmatpush1.msra.mxu0 0.0
        %3421 = vmatprep.subr.mxu0 0.0
        %3422 = vmatpush1.msra.mxu0 0.0
        %3423 = vmatprep.subr.mxu0 0.0
        %3424 = vmatpush1.msra.mxu0 0.0
        %3425 = vmatprep.subr.mxu0 0.0
        %3426 = vmatpush1.msra.mxu0 0.0
        %3427 = vmatprep.subr.mxu0 0.0
        %3428 = vmatpush1.msra.mxu0 0.0
        %3429 = vmatprep.subr.mxu0 0.0
        %3430 = vmatpush1.msra.mxu0 0.0
        %3431 = vmatprep.subr.mxu0 0.0
        %3432 = vmatpush1.msra.mxu0 0.0
        %3433 = vmatprep.subr.mxu0 0.0
        %3434 = vmatpush1.msra.mxu0 0.0
        %3435 = vmatprep.mubr.f32.mxu0 0.0
        %3436 = vmatmul.mubr.f32.gmra.mrb[0].mxu0 %v3369
        %v3437 = vpop.f32.mrb[0].mxu0
        %v3438 = vadd.f32 %v3360, %v3437
        %v3439 = vpop.f32.mrb[0].mxu0
        %v3440 = vadd.f32 %v3364, %v3439
        %3441 = vdwg.mxu0
        %s3442 = scalar_lea.vmem %s310, 1024 [#allocation2]
        %v3443 = vld [vmem:[%s3442] sm:$0xf]
        %v3444 = vld [vmem:[%s3442 + $0x4] sm:$0xf]
        %v3445 = vld [vmem:[%s3442 + $0x8] sm:$0xf]
        %v3446 = vld [vmem:[%s3442 + $0xc] sm:$0xf]
        %v3447 = vld [vmem:[%s3442 + $0x10] sm:$0xf]
        %v3448 = vld [vmem:[%s3442 + $0x14] sm:$0xf]
        %v3449 = vld [vmem:[%s3442 + $0x18] sm:$0xf]
        %v3450 = vld [vmem:[%s3442 + $0x1c] sm:$0xf]
        %v3451 = vld [vmem:[%s3442 + $0x20] sm:$0xf]
        %v3452 = vld [vmem:[%s3442 + $0x24] sm:$0xf]
        %v3453 = vld [vmem:[%s3442 + $0x28] sm:$0xf]
        %v3454 = vld [vmem:[%s3442 + $0x2c] sm:$0xf]
        %v3455 = vld [vmem:[%s3442 + $0x30] sm:$0xf]
        %v3456 = vld [vmem:[%s3442 + $0x34] sm:$0xf]
        %v3457 = vld [vmem:[%s3442 + $0x38] sm:$0xf]
        %v3458 = vld [vmem:[%s3442 + $0x3c] sm:$0xf]
        %v3459 = vld [vmem:[%s3442 + $0x40] sm:$0xf]
        %v3460 = vld [vmem:[%s3442 + $0x44] sm:$0xf]
        %v3461 = vld [vmem:[%s3442 + $0x48] sm:$0xf]
        %v3462 = vld [vmem:[%s3442 + $0x4c] sm:$0xf]
        %v3463 = vld [vmem:[%s3442 + $0x50] sm:$0xf]
        %v3464 = vld [vmem:[%s3442 + $0x54] sm:$0xf]
        %v3465 = vld [vmem:[%s3442 + $0x58] sm:$0xf]
        %v3466 = vld [vmem:[%s3442 + $0x5c] sm:$0xf]
        %v3467 = vld [vmem:[%s3442 + $0x60] sm:$0xf]
        %v3468 = vld [vmem:[%s3442 + $0x64] sm:$0xf]
        %v3469 = vld [vmem:[%s3442 + $0x68] sm:$0xf]
        %v3470 = vld [vmem:[%s3442 + $0x6c] sm:$0xf]
        %v3471 = vld [vmem:[%s3442 + $0x70] sm:$0xf]
        %v3472 = vld [vmem:[%s3442 + $0x74] sm:$0xf]
        %v3473 = vld [vmem:[%s3442 + $0x78] sm:$0xf]
        %v3474 = vld [vmem:[%s3442 + $0x7c] sm:$0xf]
        %v3475 = vld [vmem:[%s3442 + $0x80] sm:$0xf]
        %v3476 = vld [vmem:[%s3442 + $0x84] sm:$0xf]
        %v3477 = vld [vmem:[%s3442 + $0x88] sm:$0xf]
        %v3478 = vld [vmem:[%s3442 + $0x8c] sm:$0xf]
        %v3479 = vld [vmem:[%s3442 + $0x90] sm:$0xf]
        %v3480 = vld [vmem:[%s3442 + $0x94] sm:$0xf]
        %v3481 = vld [vmem:[%s3442 + $0x98] sm:$0xf]
        %v3482 = vld [vmem:[%s3442 + $0x9c] sm:$0xf]
        %v3483 = vld [vmem:[%s3442 + $0xa0] sm:$0xf]
        %v3484 = vld [vmem:[%s3442 + $0xa4] sm:$0xf]
        %v3485 = vld [vmem:[%s3442 + $0xa8] sm:$0xf]
        %v3486 = vld [vmem:[%s3442 + $0xac] sm:$0xf]
        %v3487 = vld [vmem:[%s3442 + $0xb0] sm:$0xf]
        %v3488 = vld [vmem:[%s3442 + $0xb4] sm:$0xf]
        %v3489 = vld [vmem:[%s3442 + $0xb8] sm:$0xf]
        %v3490 = vld [vmem:[%s3442 + $0xbc] sm:$0xf]
        %v3491 = vld [vmem:[%s3442 + $0xc0] sm:$0xf]
        %v3492 = vld [vmem:[%s3442 + $0xc4] sm:$0xf]
        %v3493 = vld [vmem:[%s3442 + $0xc8] sm:$0xf]
        %v3494 = vld [vmem:[%s3442 + $0xcc] sm:$0xf]
        %v3495 = vld [vmem:[%s3442 + $0xd0] sm:$0xf]
        %v3496 = vld [vmem:[%s3442 + $0xd4] sm:$0xf]
        %v3497 = vld [vmem:[%s3442 + $0xd8] sm:$0xf]
        %v3498 = vld [vmem:[%s3442 + $0xdc] sm:$0xf]
        %v3499 = vld [vmem:[%s3442 + $0xe0] sm:$0xf]
        %v3500 = vld [vmem:[%s3442 + $0xe4] sm:$0xf]
        %v3501 = vld [vmem:[%s3442 + $0xe8] sm:$0xf]
        %v3502 = vld [vmem:[%s3442 + $0xec] sm:$0xf]
        %v3503 = vld [vmem:[%s3442 + $0xf0] sm:$0xf]
        %v3504 = vld [vmem:[%s3442 + $0xf4] sm:$0xf]
        %v3505 = vld [vmem:[%s3442 + $0xf8] sm:$0xf]
        %v3506 = vld [vmem:[%s3442 + $0xfc] sm:$0xf]
        %v3507 = vld [vmem:[%s3442 + $0x100] sm:$0xf]
        %v3508 = vld [vmem:[%s3442 + $0x104] sm:$0xf]
        %v3509 = vld [vmem:[%s3442 + $0x108] sm:$0xf]
        %v3510 = vld [vmem:[%s3442 + $0x10c] sm:$0xf]
        %v3511 = vld [vmem:[%s3442 + $0x110] sm:$0xf]
        %v3512 = vld [vmem:[%s3442 + $0x114] sm:$0xf]
        %v3513 = vld [vmem:[%s3442 + $0x118] sm:$0xf]
        %v3514 = vld [vmem:[%s3442 + $0x11c] sm:$0xf]
        %v3515 = vld [vmem:[%s3442 + $0x120] sm:$0xf]
        %v3516 = vld [vmem:[%s3442 + $0x124] sm:$0xf]
        %v3517 = vld [vmem:[%s3442 + $0x128] sm:$0xf]
        %v3518 = vld [vmem:[%s3442 + $0x12c] sm:$0xf]
        %v3519 = vld [vmem:[%s3442 + $0x130] sm:$0xf]
        %v3520 = vld [vmem:[%s3442 + $0x134] sm:$0xf]
        %v3521 = vld [vmem:[%s3442 + $0x138] sm:$0xf]
        %v3522 = vld [vmem:[%s3442 + $0x13c] sm:$0xf]
        %v3523 = vld [vmem:[%s3442 + $0x140] sm:$0xf]
        %v3524 = vld [vmem:[%s3442 + $0x144] sm:$0xf]
        %v3525 = vld [vmem:[%s3442 + $0x148] sm:$0xf]
        %v3526 = vld [vmem:[%s3442 + $0x14c] sm:$0xf]
        %v3527 = vld [vmem:[%s3442 + $0x150] sm:$0xf]
        %v3528 = vld [vmem:[%s3442 + $0x154] sm:$0xf]
        %v3529 = vld [vmem:[%s3442 + $0x158] sm:$0xf]
        %v3530 = vld [vmem:[%s3442 + $0x15c] sm:$0xf]
        %v3531 = vld [vmem:[%s3442 + $0x160] sm:$0xf]
        %v3532 = vld [vmem:[%s3442 + $0x164] sm:$0xf]
        %v3533 = vld [vmem:[%s3442 + $0x168] sm:$0xf]
        %v3534 = vld [vmem:[%s3442 + $0x16c] sm:$0xf]
        %v3535 = vld [vmem:[%s3442 + $0x170] sm:$0xf]
        %v3536 = vld [vmem:[%s3442 + $0x174] sm:$0xf]
        %v3537 = vld [vmem:[%s3442 + $0x178] sm:$0xf]
        %v3538 = vld [vmem:[%s3442 + $0x17c] sm:$0xf]
        %v3539 = vld [vmem:[%s3442 + $0x180] sm:$0xf]
        %v3540 = vld [vmem:[%s3442 + $0x184] sm:$0xf]
        %v3541 = vld [vmem:[%s3442 + $0x188] sm:$0xf]
        %v3542 = vld [vmem:[%s3442 + $0x18c] sm:$0xf]
        %v3543 = vld [vmem:[%s3442 + $0x190] sm:$0xf]
        %v3544 = vld [vmem:[%s3442 + $0x194] sm:$0xf]
        %v3545 = vld [vmem:[%s3442 + $0x198] sm:$0xf]
        %v3546 = vld [vmem:[%s3442 + $0x19c] sm:$0xf]
        %v3547 = vld [vmem:[%s3442 + $0x1a0] sm:$0xf]
        %v3548 = vld [vmem:[%s3442 + $0x1a4] sm:$0xf]
        %v3549 = vld [vmem:[%s3442 + $0x1a8] sm:$0xf]
        %v3550 = vld [vmem:[%s3442 + $0x1ac] sm:$0xf]
        %v3551 = vld [vmem:[%s3442 + $0x1b0] sm:$0xf]
        %v3552 = vld [vmem:[%s3442 + $0x1b4] sm:$0xf]
        %v3553 = vld [vmem:[%s3442 + $0x1b8] sm:$0xf]
        %v3554 = vld [vmem:[%s3442 + $0x1bc] sm:$0xf]
        %v3555 = vld [vmem:[%s3442 + $0x1c0] sm:$0xf]
        %v3556 = vld [vmem:[%s3442 + $0x1c4] sm:$0xf]
        %v3557 = vld [vmem:[%s3442 + $0x1c8] sm:$0xf]
        %v3558 = vld [vmem:[%s3442 + $0x1cc] sm:$0xf]
        %v3559 = vld [vmem:[%s3442 + $0x1d0] sm:$0xf]
        %v3560 = vld [vmem:[%s3442 + $0x1d4] sm:$0xf]
        %v3561 = vld [vmem:[%s3442 + $0x1d8] sm:$0xf]
        %v3562 = vld [vmem:[%s3442 + $0x1dc] sm:$0xf]
        %v3563 = vld [vmem:[%s3442 + $0x1e0] sm:$0xf]
        %v3564 = vld [vmem:[%s3442 + $0x1e4] sm:$0xf]
        %v3565 = vld [vmem:[%s3442 + $0x1e8] sm:$0xf]
        %v3566 = vld [vmem:[%s3442 + $0x1ec] sm:$0xf]
        %v3567 = vld [vmem:[%s3442 + $0x1f0] sm:$0xf]
        %v3568 = vld [vmem:[%s3442 + $0x1f4] sm:$0xf]
        %v3569 = vld [vmem:[%s3442 + $0x1f8] sm:$0xf]
        %v3570 = vld [vmem:[%s3442 + $0x1fc] sm:$0xf]
        %v3571 = vld [vmem:[%s3442 + $0x200] sm:$0xf]
        %v3572 = vld [vmem:[%s3442 + $0x204] sm:$0xf]
        %v3573 = vld [vmem:[%s3442 + $0x208] sm:$0xf]
        %v3574 = vld [vmem:[%s3442 + $0x20c] sm:$0xf]
        %v3575 = vld [vmem:[%s3442 + $0x210] sm:$0xf]
        %v3576 = vld [vmem:[%s3442 + $0x214] sm:$0xf]
        %v3577 = vld [vmem:[%s3442 + $0x218] sm:$0xf]
        %v3578 = vld [vmem:[%s3442 + $0x21c] sm:$0xf]
        %v3579 = vld [vmem:[%s3442 + $0x220] sm:$0xf]
        %v3580 = vld [vmem:[%s3442 + $0x224] sm:$0xf]
        %v3581 = vld [vmem:[%s3442 + $0x228] sm:$0xf]
        %v3582 = vld [vmem:[%s3442 + $0x22c] sm:$0xf]
        %v3583 = vld [vmem:[%s3442 + $0x230] sm:$0xf]
        %v3584 = vld [vmem:[%s3442 + $0x234] sm:$0xf]
        %v3585 = vld [vmem:[%s3442 + $0x238] sm:$0xf]
        %v3586 = vld [vmem:[%s3442 + $0x23c] sm:$0xf]
        %v3587 = vld [vmem:[%s3442 + $0x240] sm:$0xf]
        %v3588 = vld [vmem:[%s3442 + $0x244] sm:$0xf]
        %v3589 = vld [vmem:[%s3442 + $0x248] sm:$0xf]
        %v3590 = vld [vmem:[%s3442 + $0x24c] sm:$0xf]
        %v3591 = vld [vmem:[%s3442 + $0x250] sm:$0xf]
        %v3592 = vld [vmem:[%s3442 + $0x254] sm:$0xf]
        %v3593 = vld [vmem:[%s3442 + $0x258] sm:$0xf]
        %v3594 = vld [vmem:[%s3442 + $0x25c] sm:$0xf]
        %v3595 = vld [vmem:[%s3442 + $0x260] sm:$0xf]
        %v3596 = vld [vmem:[%s3442 + $0x264] sm:$0xf]
        %v3597 = vld [vmem:[%s3442 + $0x268] sm:$0xf]
        %v3598 = vld [vmem:[%s3442 + $0x26c] sm:$0xf]
        %v3599 = vld [vmem:[%s3442 + $0x270] sm:$0xf]
        %v3600 = vld [vmem:[%s3442 + $0x274] sm:$0xf]
        %v3601 = vld [vmem:[%s3442 + $0x278] sm:$0xf]
        %v3602 = vld [vmem:[%s3442 + $0x27c] sm:$0xf]
        %v3603 = vld [vmem:[%s3442 + $0x280] sm:$0xf]
        %v3604 = vld [vmem:[%s3442 + $0x284] sm:$0xf]
        %v3605 = vld [vmem:[%s3442 + $0x288] sm:$0xf]
        %v3606 = vld [vmem:[%s3442 + $0x28c] sm:$0xf]
        %v3607 = vld [vmem:[%s3442 + $0x290] sm:$0xf]
        %v3608 = vld [vmem:[%s3442 + $0x294] sm:$0xf]
        %v3609 = vld [vmem:[%s3442 + $0x298] sm:$0xf]
        %v3610 = vld [vmem:[%s3442 + $0x29c] sm:$0xf]
        %v3611 = vld [vmem:[%s3442 + $0x2a0] sm:$0xf]
        %v3612 = vld [vmem:[%s3442 + $0x2a4] sm:$0xf]
        %v3613 = vld [vmem:[%s3442 + $0x2a8] sm:$0xf]
        %v3614 = vld [vmem:[%s3442 + $0x2ac] sm:$0xf]
        %v3615 = vld [vmem:[%s3442 + $0x2b0] sm:$0xf]
        %v3616 = vld [vmem:[%s3442 + $0x2b4] sm:$0xf]
        %v3617 = vld [vmem:[%s3442 + $0x2b8] sm:$0xf]
        %v3618 = vld [vmem:[%s3442 + $0x2bc] sm:$0xf]
        %v3619 = vld [vmem:[%s3442 + $0x2c0] sm:$0xf]
        %v3620 = vld [vmem:[%s3442 + $0x2c4] sm:$0xf]
        %v3621 = vld [vmem:[%s3442 + $0x2c8] sm:$0xf]
        %v3622 = vld [vmem:[%s3442 + $0x2cc] sm:$0xf]
        %v3623 = vld [vmem:[%s3442 + $0x2d0] sm:$0xf]
        %v3624 = vld [vmem:[%s3442 + $0x2d4] sm:$0xf]
        %v3625 = vld [vmem:[%s3442 + $0x2d8] sm:$0xf]
        %v3626 = vld [vmem:[%s3442 + $0x2dc] sm:$0xf]
        %v3627 = vld [vmem:[%s3442 + $0x2e0] sm:$0xf]
        %v3628 = vld [vmem:[%s3442 + $0x2e4] sm:$0xf]
        %v3629 = vld [vmem:[%s3442 + $0x2e8] sm:$0xf]
        %v3630 = vld [vmem:[%s3442 + $0x2ec] sm:$0xf]
        %v3631 = vld [vmem:[%s3442 + $0x2f0] sm:$0xf]
        %v3632 = vld [vmem:[%s3442 + $0x2f4] sm:$0xf]
        %v3633 = vld [vmem:[%s3442 + $0x2f8] sm:$0xf]
        %v3634 = vld [vmem:[%s3442 + $0x2fc] sm:$0xf]
        %v3635 = vld [vmem:[%s3442 + $0x300] sm:$0xf]
        %v3636 = vld [vmem:[%s3442 + $0x304] sm:$0xf]
        %v3637 = vld [vmem:[%s3442 + $0x308] sm:$0xf]
        %v3638 = vld [vmem:[%s3442 + $0x30c] sm:$0xf]
        %v3639 = vld [vmem:[%s3442 + $0x310] sm:$0xf]
        %v3640 = vld [vmem:[%s3442 + $0x314] sm:$0xf]
        %v3641 = vld [vmem:[%s3442 + $0x318] sm:$0xf]
        %v3642 = vld [vmem:[%s3442 + $0x31c] sm:$0xf]
        %v3643 = vld [vmem:[%s3442 + $0x320] sm:$0xf]
        %v3644 = vld [vmem:[%s3442 + $0x324] sm:$0xf]
        %v3645 = vld [vmem:[%s3442 + $0x328] sm:$0xf]
        %v3646 = vld [vmem:[%s3442 + $0x32c] sm:$0xf]
        %v3647 = vld [vmem:[%s3442 + $0x330] sm:$0xf]
        %v3648 = vld [vmem:[%s3442 + $0x334] sm:$0xf]
        %v3649 = vld [vmem:[%s3442 + $0x338] sm:$0xf]
        %v3650 = vld [vmem:[%s3442 + $0x33c] sm:$0xf]
        %v3651 = vld [vmem:[%s3442 + $0x340] sm:$0xf]
        %v3652 = vld [vmem:[%s3442 + $0x344] sm:$0xf]
        %v3653 = vld [vmem:[%s3442 + $0x348] sm:$0xf]
        %v3654 = vld [vmem:[%s3442 + $0x34c] sm:$0xf]
        %v3655 = vld [vmem:[%s3442 + $0x350] sm:$0xf]
        %v3656 = vld [vmem:[%s3442 + $0x354] sm:$0xf]
        %v3657 = vld [vmem:[%s3442 + $0x358] sm:$0xf]
        %v3658 = vld [vmem:[%s3442 + $0x35c] sm:$0xf]
        %v3659 = vld [vmem:[%s3442 + $0x360] sm:$0xf]
        %v3660 = vld [vmem:[%s3442 + $0x364] sm:$0xf]
        %v3661 = vld [vmem:[%s3442 + $0x368] sm:$0xf]
        %v3662 = vld [vmem:[%s3442 + $0x36c] sm:$0xf]
        %v3663 = vld [vmem:[%s3442 + $0x370] sm:$0xf]
        %v3664 = vld [vmem:[%s3442 + $0x374] sm:$0xf]
        %v3665 = vld [vmem:[%s3442 + $0x378] sm:$0xf]
        %v3666 = vld [vmem:[%s3442 + $0x37c] sm:$0xf]
        %v3667 = vld [vmem:[%s3442 + $0x380] sm:$0xf]
        %v3668 = vld [vmem:[%s3442 + $0x384] sm:$0xf]
        %v3669 = vld [vmem:[%s3442 + $0x388] sm:$0xf]
        %v3670 = vld [vmem:[%s3442 + $0x38c] sm:$0xf]
        %v3671 = vld [vmem:[%s3442 + $0x390] sm:$0xf]
        %v3672 = vld [vmem:[%s3442 + $0x394] sm:$0xf]
        %v3673 = vld [vmem:[%s3442 + $0x398] sm:$0xf]
        %v3674 = vld [vmem:[%s3442 + $0x39c] sm:$0xf]
        %v3675 = vld [vmem:[%s3442 + $0x3a0] sm:$0xf]
        %v3676 = vld [vmem:[%s3442 + $0x3a4] sm:$0xf]
        %v3677 = vld [vmem:[%s3442 + $0x3a8] sm:$0xf]
        %v3678 = vld [vmem:[%s3442 + $0x3ac] sm:$0xf]
        %v3679 = vld [vmem:[%s3442 + $0x3b0] sm:$0xf]
        %v3680 = vld [vmem:[%s3442 + $0x3b4] sm:$0xf]
        %v3681 = vld [vmem:[%s3442 + $0x3b8] sm:$0xf]
        %v3682 = vld [vmem:[%s3442 + $0x3bc] sm:$0xf]
        %v3683 = vld [vmem:[%s3442 + $0x3c0] sm:$0xf]
        %v3684 = vld [vmem:[%s3442 + $0x3c4] sm:$0xf]
        %v3685 = vld [vmem:[%s3442 + $0x3c8] sm:$0xf]
        %v3686 = vld [vmem:[%s3442 + $0x3cc] sm:$0xf]
        %v3687 = vld [vmem:[%s3442 + $0x3d0] sm:$0xf]
        %v3688 = vld [vmem:[%s3442 + $0x3d4] sm:$0xf]
        %v3689 = vld [vmem:[%s3442 + $0x3d8] sm:$0xf]
        %v3690 = vld [vmem:[%s3442 + $0x3dc] sm:$0xf]
        %v3691 = vld [vmem:[%s3442 + $0x3e0] sm:$0xf]
        %v3692 = vld [vmem:[%s3442 + $0x3e4] sm:$0xf]
        %v3693 = vld [vmem:[%s3442 + $0x3e8] sm:$0xf]
        %v3694 = vld [vmem:[%s3442 + $0x3ec] sm:$0xf]
        %v3695 = vld [vmem:[%s3442 + $0x3f0] sm:$0xf]
        %v3696 = vld [vmem:[%s3442 + $0x3f4] sm:$0xf]
        %v3697 = vld [vmem:[%s3442 + $0x3f8] sm:$0xf]
        %v3698 = vld [vmem:[%s3442 + $0x3fc] sm:$0xf]
        %s3699 = scalar_lea.vmem [#allocation4], 64
        %v3700 = vld [vmem:[%s3699] sm:$0xf]
        %v3701 = vld [vmem:[%s3699 + $0x4] sm:$0xf]
        %v3702 = vld [vmem:[%s3699 + $0x8] sm:$0xf]
        %v3703 = vld [vmem:[%s3699 + $0xc] sm:$0xf]
        %v3704 = vld [vmem:[%s3699 + $0x10] sm:$0xf]
        %v3705 = vld [vmem:[%s3699 + $0x14] sm:$0xf]
        %v3706 = vld [vmem:[%s3699 + $0x18] sm:$0xf]
        %v3707 = vld [vmem:[%s3699 + $0x1c] sm:$0xf]
        %v3708 = vld [vmem:[%s3699 + $0x20] sm:$0xf]
        %v3709 = vld [vmem:[%s3699 + $0x24] sm:$0xf]
        %v3710 = vld [vmem:[%s3699 + $0x28] sm:$0xf]
        %v3711 = vld [vmem:[%s3699 + $0x2c] sm:$0xf]
        %v3712 = vld [vmem:[%s3699 + $0x30] sm:$0xf]
        %v3713 = vld [vmem:[%s3699 + $0x34] sm:$0xf]
        %v3714 = vld [vmem:[%s3699 + $0x38] sm:$0xf]
        %v3715 = vld [vmem:[%s3699 + $0x3c] sm:$0xf]
        %s3716 = scalar_lea.vmem [#allocation6], 1
        %v3717 = vld [vmem:[%s3716] sm:$0x1]
        %v3719 = vlaneseq
        %v3720 = vshrl.u32 %v3719, 7
        %v3721 = vsub.s32 0, %v3720
        %v3722 = vrot.slane %v3717, %v3721
        %v3980 = vunpack.c.l.b16 %v3443
        %v3981 = vunpack.c.l.b16 %v3444
        %v3982 = vunpack.c.l.b16 %v3445
        %v3983 = vunpack.c.l.b16 %v3446
        %v3984 = vunpack.c.l.b16 %v3447
        %v3985 = vunpack.c.l.b16 %v3448
        %v3986 = vunpack.c.l.b16 %v3449
        %v3987 = vunpack.c.l.b16 %v3450
        %v3988 = vunpack.c.l.b16 %v3451
        %v3989 = vunpack.c.l.b16 %v3452
        %v3990 = vunpack.c.l.b16 %v3453
        %v3991 = vunpack.c.l.b16 %v3454
        %v3992 = vunpack.c.l.b16 %v3455
        %v3993 = vunpack.c.l.b16 %v3456
        %v3994 = vunpack.c.l.b16 %v3457
        %v3995 = vunpack.c.l.b16 %v3458
        %v3996 = vunpack.c.l.b16 %v3459
        %v3997 = vunpack.c.l.b16 %v3460
        %v3998 = vunpack.c.l.b16 %v3461
        %v3999 = vunpack.c.l.b16 %v3462
        %v4000 = vunpack.c.l.b16 %v3463
        %v4001 = vunpack.c.l.b16 %v3464
        %v4002 = vunpack.c.l.b16 %v3465
        %v4003 = vunpack.c.l.b16 %v3466
        %v4004 = vunpack.c.l.b16 %v3467
        %v4005 = vunpack.c.l.b16 %v3468
        %v4006 = vunpack.c.l.b16 %v3469
        %v4007 = vunpack.c.l.b16 %v3470
        %v4008 = vunpack.c.l.b16 %v3471
        %v4009 = vunpack.c.l.b16 %v3472
        %v4010 = vunpack.c.l.b16 %v3473
        %v4011 = vunpack.c.l.b16 %v3474
        %v4012 = vunpack.c.l.b16 %v3475
        %v4013 = vunpack.c.l.b16 %v3476
        %v4014 = vunpack.c.l.b16 %v3477
        %v4015 = vunpack.c.l.b16 %v3478
        %v4016 = vunpack.c.l.b16 %v3479
        %v4017 = vunpack.c.l.b16 %v3480
        %v4018 = vunpack.c.l.b16 %v3481
        %v4019 = vunpack.c.l.b16 %v3482
        %v4020 = vunpack.c.l.b16 %v3483
        %v4021 = vunpack.c.l.b16 %v3484
        %v4022 = vunpack.c.l.b16 %v3485
        %v4023 = vunpack.c.l.b16 %v3486
        %v4024 = vunpack.c.l.b16 %v3487
        %v4025 = vunpack.c.l.b16 %v3488
        %v4026 = vunpack.c.l.b16 %v3489
        %v4027 = vunpack.c.l.b16 %v3490
        %v4028 = vunpack.c.l.b16 %v3491
        %v4029 = vunpack.c.l.b16 %v3492
        %v4030 = vunpack.c.l.b16 %v3493
        %v4031 = vunpack.c.l.b16 %v3494
        %v4032 = vunpack.c.l.b16 %v3495
        %v4033 = vunpack.c.l.b16 %v3496
        %v4034 = vunpack.c.l.b16 %v3497
        %v4035 = vunpack.c.l.b16 %v3498
        %v4036 = vunpack.c.l.b16 %v3499
        %v4037 = vunpack.c.l.b16 %v3500
        %v4038 = vunpack.c.l.b16 %v3501
        %v4039 = vunpack.c.l.b16 %v3502
        %v4040 = vunpack.c.l.b16 %v3503
        %v4041 = vunpack.c.l.b16 %v3504
        %v4042 = vunpack.c.l.b16 %v3505
        %v4043 = vunpack.c.l.b16 %v3506
        %v4044 = vunpack.c.l.b16 %v3507
        %v4045 = vunpack.c.l.b16 %v3508
        %v4046 = vunpack.c.l.b16 %v3509
        %v4047 = vunpack.c.l.b16 %v3510
        %v4048 = vunpack.c.l.b16 %v3511
        %v4049 = vunpack.c.l.b16 %v3512
        %v4050 = vunpack.c.l.b16 %v3513
        %v4051 = vunpack.c.l.b16 %v3514
        %v4052 = vunpack.c.l.b16 %v3515
        %v4053 = vunpack.c.l.b16 %v3516
        %v4054 = vunpack.c.l.b16 %v3517
        %v4055 = vunpack.c.l.b16 %v3518
        %v4056 = vunpack.c.l.b16 %v3519
        %v4057 = vunpack.c.l.b16 %v3520
        %v4058 = vunpack.c.l.b16 %v3521
        %v4059 = vunpack.c.l.b16 %v3522
        %v4060 = vunpack.c.l.b16 %v3523
        %v4061 = vunpack.c.l.b16 %v3524
        %v4062 = vunpack.c.l.b16 %v3525
        %v4063 = vunpack.c.l.b16 %v3526
        %v4064 = vunpack.c.l.b16 %v3527
        %v4065 = vunpack.c.l.b16 %v3528
        %v4066 = vunpack.c.l.b16 %v3529
        %v4067 = vunpack.c.l.b16 %v3530
        %v4068 = vunpack.c.l.b16 %v3531
        %v4069 = vunpack.c.l.b16 %v3532
        %v4070 = vunpack.c.l.b16 %v3533
        %v4071 = vunpack.c.l.b16 %v3534
        %v4072 = vunpack.c.l.b16 %v3535
        %v4073 = vunpack.c.l.b16 %v3536
        %v4074 = vunpack.c.l.b16 %v3537
        %v4075 = vunpack.c.l.b16 %v3538
        %v4076 = vunpack.c.l.b16 %v3539
        %v4077 = vunpack.c.l.b16 %v3540
        %v4078 = vunpack.c.l.b16 %v3541
        %v4079 = vunpack.c.l.b16 %v3542
        %v4080 = vunpack.c.l.b16 %v3543
        %v4081 = vunpack.c.l.b16 %v3544
        %v4082 = vunpack.c.l.b16 %v3545
        %v4083 = vunpack.c.l.b16 %v3546
        %v4084 = vunpack.c.l.b16 %v3547
        %v4085 = vunpack.c.l.b16 %v3548
        %v4086 = vunpack.c.l.b16 %v3549
        %v4087 = vunpack.c.l.b16 %v3550
        %v4088 = vunpack.c.l.b16 %v3551
        %v4089 = vunpack.c.l.b16 %v3552
        %v4090 = vunpack.c.l.b16 %v3553
        %v4091 = vunpack.c.l.b16 %v3554
        %v4092 = vunpack.c.l.b16 %v3555
        %v4093 = vunpack.c.l.b16 %v3556
        %v4094 = vunpack.c.l.b16 %v3557
        %v4095 = vunpack.c.l.b16 %v3558
        %v4096 = vunpack.c.l.b16 %v3559
        %v4097 = vunpack.c.l.b16 %v3560
        %v4098 = vunpack.c.l.b16 %v3561
        %v4099 = vunpack.c.l.b16 %v3562
        %v4100 = vunpack.c.l.b16 %v3563
        %v4101 = vunpack.c.l.b16 %v3564
        %v4102 = vunpack.c.l.b16 %v3565
        %v4103 = vunpack.c.l.b16 %v3566
        %v4104 = vunpack.c.l.b16 %v3567
        %v4105 = vunpack.c.l.b16 %v3568
        %v4106 = vunpack.c.l.b16 %v3569
        %v4107 = vunpack.c.l.b16 %v3570
        %v4108 = vunpack.c.l.b16 %v3571
        %v4109 = vunpack.c.l.b16 %v3572
        %v4110 = vunpack.c.l.b16 %v3573
        %v4111 = vunpack.c.l.b16 %v3574
        %v4112 = vunpack.c.l.b16 %v3575
        %v4113 = vunpack.c.l.b16 %v3576
        %v4114 = vunpack.c.l.b16 %v3577
        %v4115 = vunpack.c.l.b16 %v3578
        %v4116 = vunpack.c.l.b16 %v3579
        %v4117 = vunpack.c.l.b16 %v3580
        %v4118 = vunpack.c.l.b16 %v3581
        %v4119 = vunpack.c.l.b16 %v3582
        %v4120 = vunpack.c.l.b16 %v3583
        %v4121 = vunpack.c.l.b16 %v3584
        %v4122 = vunpack.c.l.b16 %v3585
        %v4123 = vunpack.c.l.b16 %v3586
        %v4124 = vunpack.c.l.b16 %v3587
        %v4125 = vunpack.c.l.b16 %v3588
        %v4126 = vunpack.c.l.b16 %v3589
        %v4127 = vunpack.c.l.b16 %v3590
        %v4128 = vunpack.c.l.b16 %v3591
        %v4129 = vunpack.c.l.b16 %v3592
        %v4130 = vunpack.c.l.b16 %v3593
        %v4131 = vunpack.c.l.b16 %v3594
        %v4132 = vunpack.c.l.b16 %v3595
        %v4133 = vunpack.c.l.b16 %v3596
        %v4134 = vunpack.c.l.b16 %v3597
        %v4135 = vunpack.c.l.b16 %v3598
        %v4136 = vunpack.c.l.b16 %v3599
        %v4137 = vunpack.c.l.b16 %v3600
        %v4138 = vunpack.c.l.b16 %v3601
        %v4139 = vunpack.c.l.b16 %v3602
        %v4140 = vunpack.c.l.b16 %v3603
        %v4141 = vunpack.c.l.b16 %v3604
        %v4142 = vunpack.c.l.b16 %v3605
        %v4143 = vunpack.c.l.b16 %v3606
        %v4144 = vunpack.c.l.b16 %v3607
        %v4145 = vunpack.c.l.b16 %v3608
        %v4146 = vunpack.c.l.b16 %v3609
        %v4147 = vunpack.c.l.b16 %v3610
        %v4148 = vunpack.c.l.b16 %v3611
        %v4149 = vunpack.c.l.b16 %v3612
        %v4150 = vunpack.c.l.b16 %v3613
        %v4151 = vunpack.c.l.b16 %v3614
        %v4152 = vunpack.c.l.b16 %v3615
        %v4153 = vunpack.c.l.b16 %v3616
        %v4154 = vunpack.c.l.b16 %v3617
        %v4155 = vunpack.c.l.b16 %v3618
        %v4156 = vunpack.c.l.b16 %v3619
        %v4157 = vunpack.c.l.b16 %v3620
        %v4158 = vunpack.c.l.b16 %v3621
        %v4159 = vunpack.c.l.b16 %v3622
        %v4160 = vunpack.c.l.b16 %v3623
        %v4161 = vunpack.c.l.b16 %v3624
        %v4162 = vunpack.c.l.b16 %v3625
        %v4163 = vunpack.c.l.b16 %v3626
        %v4164 = vunpack.c.l.b16 %v3627
        %v4165 = vunpack.c.l.b16 %v3628
        %v4166 = vunpack.c.l.b16 %v3629
        %v4167 = vunpack.c.l.b16 %v3630
        %v4168 = vunpack.c.l.b16 %v3631
        %v4169 = vunpack.c.l.b16 %v3632
        %v4170 = vunpack.c.l.b16 %v3633
        %v4171 = vunpack.c.l.b16 %v3634
        %v4172 = vunpack.c.l.b16 %v3635
        %v4173 = vunpack.c.l.b16 %v3636
        %v4174 = vunpack.c.l.b16 %v3637
        %v4175 = vunpack.c.l.b16 %v3638
        %v4176 = vunpack.c.l.b16 %v3639
        %v4177 = vunpack.c.l.b16 %v3640
        %v4178 = vunpack.c.l.b16 %v3641
        %v4179 = vunpack.c.l.b16 %v3642
        %v4180 = vunpack.c.l.b16 %v3643
        %v4181 = vunpack.c.l.b16 %v3644
        %v4182 = vunpack.c.l.b16 %v3645
        %v4183 = vunpack.c.l.b16 %v3646
        %v4184 = vunpack.c.l.b16 %v3647
        %v4185 = vunpack.c.l.b16 %v3648
        %v4186 = vunpack.c.l.b16 %v3649
        %v4187 = vunpack.c.l.b16 %v3650
        %v4188 = vunpack.c.l.b16 %v3651
        %v4189 = vunpack.c.l.b16 %v3652
        %v4190 = vunpack.c.l.b16 %v3653
        %v4191 = vunpack.c.l.b16 %v3654
        %v4192 = vunpack.c.l.b16 %v3655
        %v4193 = vunpack.c.l.b16 %v3656
        %v4194 = vunpack.c.l.b16 %v3657
        %v4195 = vunpack.c.l.b16 %v3658
        %v4196 = vunpack.c.l.b16 %v3659
        %v4197 = vunpack.c.l.b16 %v3660
        %v4198 = vunpack.c.l.b16 %v3661
        %v4199 = vunpack.c.l.b16 %v3662
        %v4200 = vunpack.c.l.b16 %v3663
        %v4201 = vunpack.c.l.b16 %v3664
        %v4202 = vunpack.c.l.b16 %v3665
        %v4203 = vunpack.c.l.b16 %v3666
        %v4204 = vunpack.c.l.b16 %v3667
        %v4205 = vunpack.c.l.b16 %v3668
        %v4206 = vunpack.c.l.b16 %v3669
        %v4207 = vunpack.c.l.b16 %v3670
        %v4208 = vunpack.c.l.b16 %v3671
        %v4209 = vunpack.c.l.b16 %v3672
        %v4210 = vunpack.c.l.b16 %v3673
        %v4211 = vunpack.c.l.b16 %v3674
        %v4212 = vunpack.c.l.b16 %v3675
        %v4213 = vunpack.c.l.b16 %v3676
        %v4214 = vunpack.c.l.b16 %v3677
        %v4215 = vunpack.c.l.b16 %v3678
        %v4216 = vunpack.c.l.b16 %v3679
        %v4217 = vunpack.c.l.b16 %v3680
        %v4218 = vunpack.c.l.b16 %v3681
        %v4219 = vunpack.c.l.b16 %v3682
        %v4220 = vunpack.c.l.b16 %v3683
        %v4221 = vunpack.c.l.b16 %v3684
        %v4222 = vunpack.c.l.b16 %v3685
        %v4223 = vunpack.c.l.b16 %v3686
        %v4224 = vunpack.c.l.b16 %v3687
        %v4225 = vunpack.c.l.b16 %v3688
        %v4226 = vunpack.c.l.b16 %v3689
        %v4227 = vunpack.c.l.b16 %v3690
        %v4228 = vunpack.c.l.b16 %v3691
        %v4229 = vunpack.c.l.b16 %v3692
        %v4230 = vunpack.c.l.b16 %v3693
        %v4231 = vunpack.c.l.b16 %v3694
        %v4232 = vunpack.c.l.b16 %v3695
        %v4233 = vunpack.c.l.b16 %v3696
        %v4234 = vunpack.c.l.b16 %v3697
        %v4235 = vunpack.c.l.b16 %v3698
        %v4236 = vpack.c.b16 %v3981, %v3980
        %v4237 = vpack.c.b16 %v3983, %v3982
        %v4238 = vpack.c.b16 %v3985, %v3984
        %v4239 = vpack.c.b16 %v3987, %v3986
        %v4240 = vpack.c.b16 %v3989, %v3988
        %v4241 = vpack.c.b16 %v3991, %v3990
        %v4242 = vpack.c.b16 %v3993, %v3992
        %v4243 = vpack.c.b16 %v3995, %v3994
        %v4244 = vpack.c.b16 %v3997, %v3996
        %v4245 = vpack.c.b16 %v3999, %v3998
        %v4246 = vpack.c.b16 %v4001, %v4000
        %v4247 = vpack.c.b16 %v4003, %v4002
        %v4248 = vpack.c.b16 %v4005, %v4004
        %v4249 = vpack.c.b16 %v4007, %v4006
        %v4250 = vpack.c.b16 %v4009, %v4008
        %v4251 = vpack.c.b16 %v4011, %v4010
        %v4252 = vpack.c.b16 %v4013, %v4012
        %v4253 = vpack.c.b16 %v4015, %v4014
        %v4254 = vpack.c.b16 %v4017, %v4016
        %v4255 = vpack.c.b16 %v4019, %v4018
        %v4256 = vpack.c.b16 %v4021, %v4020
        %v4257 = vpack.c.b16 %v4023, %v4022
        %v4258 = vpack.c.b16 %v4025, %v4024
        %v4259 = vpack.c.b16 %v4027, %v4026
        %v4260 = vpack.c.b16 %v4029, %v4028
        %v4261 = vpack.c.b16 %v4031, %v4030
        %v4262 = vpack.c.b16 %v4033, %v4032
        %v4263 = vpack.c.b16 %v4035, %v4034
        %v4264 = vpack.c.b16 %v4037, %v4036
        %v4265 = vpack.c.b16 %v4039, %v4038
        %v4266 = vpack.c.b16 %v4041, %v4040
        %v4267 = vpack.c.b16 %v4043, %v4042
        %v4268 = vpack.c.b16 %v4045, %v4044
        %v4269 = vpack.c.b16 %v4047, %v4046
        %v4270 = vpack.c.b16 %v4049, %v4048
        %v4271 = vpack.c.b16 %v4051, %v4050
        %v4272 = vpack.c.b16 %v4053, %v4052
        %v4273 = vpack.c.b16 %v4055, %v4054
        %v4274 = vpack.c.b16 %v4057, %v4056
        %v4275 = vpack.c.b16 %v4059, %v4058
        %v4276 = vpack.c.b16 %v4061, %v4060
        %v4277 = vpack.c.b16 %v4063, %v4062
        %v4278 = vpack.c.b16 %v4065, %v4064
        %v4279 = vpack.c.b16 %v4067, %v4066
        %v4280 = vpack.c.b16 %v4069, %v4068
        %v4281 = vpack.c.b16 %v4071, %v4070
        %v4282 = vpack.c.b16 %v4073, %v4072
        %v4283 = vpack.c.b16 %v4075, %v4074
        %v4284 = vpack.c.b16 %v4077, %v4076
        %v4285 = vpack.c.b16 %v4079, %v4078
        %v4286 = vpack.c.b16 %v4081, %v4080
        %v4287 = vpack.c.b16 %v4083, %v4082
        %v4288 = vpack.c.b16 %v4085, %v4084
        %v4289 = vpack.c.b16 %v4087, %v4086
        %v4290 = vpack.c.b16 %v4089, %v4088
        %v4291 = vpack.c.b16 %v4091, %v4090
        %v4292 = vpack.c.b16 %v4093, %v4092
        %v4293 = vpack.c.b16 %v4095, %v4094
        %v4294 = vpack.c.b16 %v4097, %v4096
        %v4295 = vpack.c.b16 %v4099, %v4098
        %v4296 = vpack.c.b16 %v4101, %v4100
        %v4297 = vpack.c.b16 %v4103, %v4102
        %v4298 = vpack.c.b16 %v4105, %v4104
        %v4299 = vpack.c.b16 %v4107, %v4106
        %v4300 = vpack.c.b16 %v4109, %v4108
        %v4301 = vpack.c.b16 %v4111, %v4110
        %v4302 = vpack.c.b16 %v4113, %v4112
        %v4303 = vpack.c.b16 %v4115, %v4114
        %v4304 = vpack.c.b16 %v4117, %v4116
        %v4305 = vpack.c.b16 %v4119, %v4118
        %v4306 = vpack.c.b16 %v4121, %v4120
        %v4307 = vpack.c.b16 %v4123, %v4122
        %v4308 = vpack.c.b16 %v4125, %v4124
        %v4309 = vpack.c.b16 %v4127, %v4126
        %v4310 = vpack.c.b16 %v4129, %v4128
        %v4311 = vpack.c.b16 %v4131, %v4130
        %v4312 = vpack.c.b16 %v4133, %v4132
        %v4313 = vpack.c.b16 %v4135, %v4134
        %v4314 = vpack.c.b16 %v4137, %v4136
        %v4315 = vpack.c.b16 %v4139, %v4138
        %v4316 = vpack.c.b16 %v4141, %v4140
        %v4317 = vpack.c.b16 %v4143, %v4142
        %v4318 = vpack.c.b16 %v4145, %v4144
        %v4319 = vpack.c.b16 %v4147, %v4146
        %v4320 = vpack.c.b16 %v4149, %v4148
        %v4321 = vpack.c.b16 %v4151, %v4150
        %v4322 = vpack.c.b16 %v4153, %v4152
        %v4323 = vpack.c.b16 %v4155, %v4154
        %v4324 = vpack.c.b16 %v4157, %v4156
        %v4325 = vpack.c.b16 %v4159, %v4158
        %v4326 = vpack.c.b16 %v4161, %v4160
        %v4327 = vpack.c.b16 %v4163, %v4162
        %v4328 = vpack.c.b16 %v4165, %v4164
        %v4329 = vpack.c.b16 %v4167, %v4166
        %v4330 = vpack.c.b16 %v4169, %v4168
        %v4331 = vpack.c.b16 %v4171, %v4170
        %v4332 = vpack.c.b16 %v4173, %v4172
        %v4333 = vpack.c.b16 %v4175, %v4174
        %v4334 = vpack.c.b16 %v4177, %v4176
        %v4335 = vpack.c.b16 %v4179, %v4178
        %v4336 = vpack.c.b16 %v4181, %v4180
        %v4337 = vpack.c.b16 %v4183, %v4182
        %v4338 = vpack.c.b16 %v4185, %v4184
        %v4339 = vpack.c.b16 %v4187, %v4186
        %v4340 = vpack.c.b16 %v4189, %v4188
        %v4341 = vpack.c.b16 %v4191, %v4190
        %v4342 = vpack.c.b16 %v4193, %v4192
        %v4343 = vpack.c.b16 %v4195, %v4194
        %v4344 = vpack.c.b16 %v4197, %v4196
        %v4345 = vpack.c.b16 %v4199, %v4198
        %v4346 = vpack.c.b16 %v4201, %v4200
        %v4347 = vpack.c.b16 %v4203, %v4202
        %v4348 = vpack.c.b16 %v4205, %v4204
        %v4349 = vpack.c.b16 %v4207, %v4206
        %v4350 = vpack.c.b16 %v4209, %v4208
        %v4351 = vpack.c.b16 %v4211, %v4210
        %v4352 = vpack.c.b16 %v4213, %v4212
        %v4353 = vpack.c.b16 %v4215, %v4214
        %v4354 = vpack.c.b16 %v4217, %v4216
        %v4355 = vpack.c.b16 %v4219, %v4218
        %v4356 = vpack.c.b16 %v4221, %v4220
        %v4357 = vpack.c.b16 %v4223, %v4222
        %v4358 = vpack.c.b16 %v4225, %v4224
        %v4359 = vpack.c.b16 %v4227, %v4226
        %v4360 = vpack.c.b16 %v4229, %v4228
        %v4361 = vpack.c.b16 %v4231, %v4230
        %v4362 = vpack.c.b16 %v4233, %v4232
        %v4363 = vpack.c.b16 %v4235, %v4234
        %v4508 = vunpack.c.l.b16 %v3700
        %v4509 = vunpack.c.l.b16 %v3701
        %v4510 = vunpack.c.l.b16 %v3702
        %v4511 = vunpack.c.l.b16 %v3703
        %v4512 = vunpack.c.l.b16 %v3704
        %v4513 = vunpack.c.l.b16 %v3705
        %v4514 = vunpack.c.l.b16 %v3706
        %v4515 = vunpack.c.l.b16 %v3707
        %v4516 = vunpack.c.l.b16 %v3708
        %v4517 = vunpack.c.l.b16 %v3709
        %v4518 = vunpack.c.l.b16 %v3710
        %v4519 = vunpack.c.l.b16 %v3711
        %v4520 = vunpack.c.l.b16 %v3712
        %v4521 = vunpack.c.l.b16 %v3713
        %v4522 = vunpack.c.l.b16 %v3714
        %v4523 = vunpack.c.l.b16 %v3715
        %v4524 = vpack.c.b16 %v4509, %v4508
        %v4525 = vpack.c.b16 %v4511, %v4510
        %v4526 = vpack.c.b16 %v4513, %v4512
        %v4527 = vpack.c.b16 %v4515, %v4514
        %v4528 = vpack.c.b16 %v4517, %v4516
        %v4529 = vpack.c.b16 %v4519, %v4518
        %v4530 = vpack.c.b16 %v4521, %v4520
        %v4531 = vpack.c.b16 %v4523, %v4522
        %4540 = vmatprep.subr.bf16.mxu0 0
        %4541 = vmatpush1.bf16.msra.mxu0 %v4524
        %4542 = vmatprep.subr.bf16.mxu0 0
        %4543 = vmatpush1.bf16.msra.mxu0 %v4525
        %4544 = vmatprep.subr.bf16.mxu0 0
        %4545 = vmatpush1.bf16.msra.mxu0 %v4526
        %4546 = vmatprep.subr.bf16.mxu0 0
        %4547 = vmatpush1.bf16.msra.mxu0 %v4527
        %4548 = vmatprep.subr.bf16.mxu0 0
        %4549 = vmatpush1.bf16.msra.mxu0 %v4528
        %4550 = vmatprep.subr.bf16.mxu0 0
        %4551 = vmatpush1.bf16.msra.mxu0 %v4529
        %4552 = vmatprep.subr.bf16.mxu0 0
        %4553 = vmatpush1.bf16.msra.mxu0 %v4530
        %4554 = vmatprep.subr.bf16.mxu0 0
        %4555 = vmatpush1.bf16.msra.mxu0 %v4531
        %4556 = vmatprep.subr.bf16.mxu0 0
        %4557 = vmatpush1.bf16.msra.mxu0 0
        %4558 = vmatprep.subr.bf16.mxu0 0
        %4559 = vmatpush1.bf16.msra.mxu0 0
        %4560 = vmatprep.subr.bf16.mxu0 0
        %4561 = vmatpush1.bf16.msra.mxu0 0
        %4562 = vmatprep.subr.bf16.mxu0 0
        %4563 = vmatpush1.bf16.msra.mxu0 0
        %4564 = vmatprep.subr.bf16.mxu0 0
        %4565 = vmatpush1.bf16.msra.mxu0 0
        %4566 = vmatprep.subr.bf16.mxu0 0
        %4567 = vmatpush1.bf16.msra.mxu0 0
        %4568 = vmatprep.subr.bf16.mxu0 0
        %4569 = vmatpush1.bf16.msra.mxu0 0
        %4570 = vmatprep.subr.bf16.mxu0 0
        %4571 = vmatpush1.bf16.msra.mxu0 0
        %4572 = vmatprep.mubr.bf16.mxu0 0
        %4573 = vmatmul.mubr.bf16.gmra.mrb[0].mxu0 %v4236
        %v4574 = vpop.f32.mrb[0].mxu0
        %v4575 = vadd.f32 %v3722, %v4574
        %v4576 = vpop.f32.mrb[0].mxu0
        %v4577 = vpop.f32.mrb[0].mxu0
        %v4578 = vadd.f32 %v3722, %v4577
        %v4579 = vpop.f32.mrb[0].mxu0
        %4580 = vmatprep.mubr.bf16.mxu0 0
        %4581 = vmatmul.mubr.bf16.gmra.mrb[0].mxu0 %v4237
        %v4582 = vpop.f32.mrb[0].mxu0
        %v4583 = vadd.f32 %v3722, %v4582
        %v4584 = vpop.f32.mrb[0].mxu0
        %v4585 = vpop.f32.mrb[0].mxu0
        %v4586 = vadd.f32 %v3722, %v4585
        %v4587 = vpop.f32.mrb[0].mxu0
        %4588 = vmatprep.mubr.bf16.mxu0 0
        %4589 = vmatmul.mubr.bf16.gmra.mrb[0].mxu0 %v4238
        %v4590 = vpop.f32.mrb[0].mxu0
        %v4591 = vadd.f32 %v3722, %v4590
        %v4592 = vpop.f32.mrb[0].mxu0
        %v4593 = vpop.f32.mrb[0].mxu0
        %v4594 = vadd.f32 %v3722, %v4593
        %v4595 = vpop.f32.mrb[0].mxu0
        %4596 = vmatprep.mubr.bf16.mxu0 0
        %4597 = vmatmul.mubr.bf16.gmra.mrb[0].mxu0 %v4239
        %v4598 = vpop.f32.mrb[0].mxu0
        %v4599 = vadd.f32 %v3722, %v4598
        %v4600 = vpop.f32.mrb[0].mxu0
        %v4601 = vpop.f32.mrb[0].mxu0
        %v4602 = vadd.f32 %v3722, %v4601
        %v4603 = vpop.f32.mrb[0].mxu0
        %4604 = vmatprep.mubr.bf16.mxu0 0
        %4605 = vmatmul.mubr.bf16.gmra.mrb[0].mxu0 %v4240
        %v4606 = vpop.f32.mrb[0].mxu0
        %v4607 = vadd.f32 %v3722, %v4606
        %v4608 = vpop.f32.mrb[0].mxu0
        %v4609 = vpop.f32.mrb[0].mxu0
        %v4610 = vadd.f32 %v3722, %v4609
        %v4611 = vpop.f32.mrb[0].mxu0
        %4612 = vmatprep.mubr.bf16.mxu0 0
        %4613 = vmatmul.mubr.bf16.gmra.mrb[0].mxu0 %v4241
        %v4614 = vpop.f32.mrb[0].mxu0
        %v4615 = vadd.f32 %v3722, %v4614
        %v4616 = vpop.f32.mrb[0].mxu0
        %v4617 = vpop.f32.mrb[0].mxu0
        %v4618 = vadd.f32 %v3722, %v4617
        %v4619 = vpop.f32.mrb[0].mxu0
        %4620 = vmatprep.mubr.bf16.mxu0 0
        %4621 = vmatmul.mubr.bf16.gmra.mrb[0].mxu0 %v4242
        %v4622 = vpop.f32.mrb[0].mxu0
        %v4623 = vadd.f32 %v3722, %v4622
        %v4624 = vpop.f32.mrb[0].mxu0
        %v4625 = vpop.f32.mrb[0].mxu0
        %v4626 = vadd.f32 %v3722, %v4625
        %v4627 = vpop.f32.mrb[0].mxu0
        %4628 = vmatprep.mubr.bf16.mxu0 0
        %4629 = vmatmul.mubr.bf16.gmra.mrb[0].mxu0 %v4243
        %v4630 = vpop.f32.mrb[0].mxu0
        %v4631 = vadd.f32 %v3722, %v4630
        %v4632 = vpop.f32.mrb[0].mxu0
        %v4633 = vpop.f32.mrb[0].mxu0
        %v4634 = vadd.f32 %v3722, %v4633
        %v4635 = vpop.f32.mrb[0].mxu0
        %4636 = vmatprep.mubr.bf16.mxu0 0
        %4637 = vmatmul.mubr.bf16.gmra.mrb[0].mxu0 %v4244
        %v4638 = vpop.f32.mrb[0].mxu0
        %v4639 = vadd.f32 %v3722, %v4638
        %v4640 = vpop.f32.mrb[0].mxu0
        %v4641 = vpop.f32.mrb[0].mxu0
        %v4642 = vadd.f32 %v3722, %v4641
        %v4643 = vpop.f32.mrb[0].mxu0
        %4644 = vmatprep.mubr.bf16.mxu0 0
        %4645 = vmatmul.mubr.bf16.gmra.mrb[0].mxu0 %v4245
        %v4646 = vpop.f32.mrb[0].mxu0
        %v4647 = vadd.f32 %v3722, %v4646
        %v4648 = vpop.f32.mrb[0].mxu0
        %v4649 = vpop.f32.mrb[0].mxu0
        %v4650 = vadd.f32 %v3722, %v4649
        %v4651 = vpop.f32.mrb[0].mxu0
        %4652 = vmatprep.mubr.bf16.mxu0 0
        %4653 = vmatmul.mubr.bf16.gmra.mrb[0].mxu0 %v4246
        %v4654 = vpop.f32.mrb[0].mxu0
        %v4655 = vadd.f32 %v3722, %v4654
        %v4656 = vpop.f32.mrb[0].mxu0
        %v4657 = vpop.f32.mrb[0].mxu0
        %v4658 = vadd.f32 %v3722, %v4657
        %v4659 = vpop.f32.mrb[0].mxu0
        %4660 = vmatprep.mubr.bf16.mxu0 0
        %4661 = vmatmul.mubr.bf16.gmra.mrb[0].mxu0 %v4247
        %v4662 = vpop.f32.mrb[0].mxu0
        %v4663 = vadd.f32 %v3722, %v4662
        %v4664 = vpop.f32.mrb[0].mxu0
        %v4665 = vpop.f32.mrb[0].mxu0
        %v4666 = vadd.f32 %v3722, %v4665
        %v4667 = vpop.f32.mrb[0].mxu0
        %4668 = vmatprep.mubr.bf16.mxu0 0
        %4669 = vmatmul.mubr.bf16.gmra.mrb[0].mxu0 %v4248
        %v4670 = vpop.f32.mrb[0].mxu0
        %v4671 = vadd.f32 %v3722, %v4670
        %v4672 = vpop.f32.mrb[0].mxu0
        %v4673 = vpop.f32.mrb[0].mxu0
        %v4674 = vadd.f32 %v3722, %v4673
        %v4675 = vpop.f32.mrb[0].mxu0
        %4676 = vmatprep.mubr.bf16.mxu0 0
        %4677 = vmatmul.mubr.bf16.gmra.mrb[0].mxu0 %v4249
        %v4678 = vpop.f32.mrb[0].mxu0
        %v4679 = vadd.f32 %v3722, %v4678
        %v4680 = vpop.f32.mrb[0].mxu0
        %v4681 = vpop.f32.mrb[0].mxu0
        %v4682 = vadd.f32 %v3722, %v4681
        %v4683 = vpop.f32.mrb[0].mxu0
        %4684 = vmatprep.mubr.bf16.mxu0 0
        %4685 = vmatmul.mubr.bf16.gmra.mrb[0].mxu0 %v4250
        %v4686 = vpop.f32.mrb[0].mxu0
        %v4687 = vadd.f32 %v3722, %v4686
        %v4688 = vpop.f32.mrb[0].mxu0
        %v4689 = vpop.f32.mrb[0].mxu0
        %v4690 = vadd.f32 %v3722, %v4689
        %v4691 = vpop.f32.mrb[0].mxu0
        %4692 = vmatprep.mubr.bf16.mxu0 0
        %4693 = vmatmul.mubr.bf16.gmra.mrb[0].mxu0 %v4251
        %v4694 = vpop.f32.mrb[0].mxu0
        %v4695 = vadd.f32 %v3722, %v4694
        %v4696 = vpop.f32.mrb[0].mxu0
        %v4697 = vpop.f32.mrb[0].mxu0
        %v4698 = vadd.f32 %v3722, %v4697
        %v4699 = vpop.f32.mrb[0].mxu0
        %4700 = vmatprep.mubr.bf16.mxu0 0
        %4701 = vmatmul.mubr.bf16.gmra.mrb[0].mxu0 %v4252
        %v4702 = vpop.f32.mrb[0].mxu0
        %v4703 = vadd.f32 %v3722, %v4702
        %v4704 = vpop.f32.mrb[0].mxu0
        %v4705 = vpop.f32.mrb[0].mxu0
        %v4706 = vadd.f32 %v3722, %v4705
        %v4707 = vpop.f32.mrb[0].mxu0
        %4708 = vmatprep.mubr.bf16.mxu0 0
        %4709 = vmatmul.mubr.bf16.gmra.mrb[0].mxu0 %v4253
        %v4710 = vpop.f32.mrb[0].mxu0
        %v4711 = vadd.f32 %v3722, %v4710
        %v4712 = vpop.f32.mrb[0].mxu0
        %v4713 = vpop.f32.mrb[0].mxu0
        %v4714 = vadd.f32 %v3722, %v4713
        %v4715 = vpop.f32.mrb[0].mxu0
        %4716 = vmatprep.mubr.bf16.mxu0 0
        %4717 = vmatmul.mubr.bf16.gmra.mrb[0].mxu0 %v4254
        %v4718 = vpop.f32.mrb[0].mxu0
        %v4719 = vadd.f32 %v3722, %v4718
        %v4720 = vpop.f32.mrb[0].mxu0
        %v4721 = vpop.f32.mrb[0].mxu0
        %v4722 = vadd.f32 %v3722, %v4721
        %v4723 = vpop.f32.mrb[0].mxu0
        %4724 = vmatprep.mubr.bf16.mxu0 0
        %4725 = vmatmul.mubr.bf16.gmra.mrb[0].mxu0 %v4255
        %v4726 = vpop.f32.mrb[0].mxu0
        %v4727 = vadd.f32 %v3722, %v4726
        %v4728 = vpop.f32.mrb[0].mxu0
        %v4729 = vpop.f32.mrb[0].mxu0
        %v4730 = vadd.f32 %v3722, %v4729
        %v4731 = vpop.f32.mrb[0].mxu0
        %4732 = vmatprep.mubr.bf16.mxu0 0
        %4733 = vmatmul.mubr.bf16.gmra.mrb[0].mxu0 %v4256
        %v4734 = vpop.f32.mrb[0].mxu0
        %v4735 = vadd.f32 %v3722, %v4734
        %v4736 = vpop.f32.mrb[0].mxu0
        %v4737 = vpop.f32.mrb[0].mxu0
        %v4738 = vadd.f32 %v3722, %v4737
        %v4739 = vpop.f32.mrb[0].mxu0
        %4740 = vmatprep.mubr.bf16.mxu0 0
        %4741 = vmatmul.mubr.bf16.gmra.mrb[0].mxu0 %v4257
        %v4742 = vpop.f32.mrb[0].mxu0
        %v4743 = vadd.f32 %v3722, %v4742
        %v4744 = vpop.f32.mrb[0].mxu0
        %v4745 = vpop.f32.mrb[0].mxu0
        %v4746 = vadd.f32 %v3722, %v4745
        %v4747 = vpop.f32.mrb[0].mxu0
        %4748 = vmatprep.mubr.bf16.mxu0 0
        %4749 = vmatmul.mubr.bf16.gmra.mrb[0].mxu0 %v4258
        %v4750 = vpop.f32.mrb[0].mxu0
        %v4751 = vadd.f32 %v3722, %v4750
        %v4752 = vpop.f32.mrb[0].mxu0
        %v4753 = vpop.f32.mrb[0].mxu0
        %v4754 = vadd.f32 %v3722, %v4753
        %v4755 = vpop.f32.mrb[0].mxu0
        %4756 = vmatprep.mubr.bf16.mxu0 0
        %4757 = vmatmul.mubr.bf16.gmra.mrb[0].mxu0 %v4259
        %v4758 = vpop.f32.mrb[0].mxu0
        %v4759 = vadd.f32 %v3722, %v4758
        %v4760 = vpop.f32.mrb[0].mxu0
        %v4761 = vpop.f32.mrb[0].mxu0
        %v4762 = vadd.f32 %v3722, %v4761
        %v4763 = vpop.f32.mrb[0].mxu0
        %4764 = vmatprep.mubr.bf16.mxu0 0
        %4765 = vmatmul.mubr.bf16.gmra.mrb[0].mxu0 %v4260
        %v4766 = vpop.f32.mrb[0].mxu0
        %v4767 = vadd.f32 %v3722, %v4766
        %v4768 = vpop.f32.mrb[0].mxu0
        %v4769 = vpop.f32.mrb[0].mxu0
        %v4770 = vadd.f32 %v3722, %v4769
        %v4771 = vpop.f32.mrb[0].mxu0
        %4772 = vmatprep.mubr.bf16.mxu0 0
        %4773 = vmatmul.mubr.bf16.gmra.mrb[0].mxu0 %v4261
        %v4774 = vpop.f32.mrb[0].mxu0
        %v4775 = vadd.f32 %v3722, %v4774
        %v4776 = vpop.f32.mrb[0].mxu0
        %v4777 = vpop.f32.mrb[0].mxu0
        %v4778 = vadd.f32 %v3722, %v4777
        %v4779 = vpop.f32.mrb[0].mxu0
        %4780 = vmatprep.mubr.bf16.mxu0 0
        %4781 = vmatmul.mubr.bf16.gmra.mrb[0].mxu0 %v4262
        %v4782 = vpop.f32.mrb[0].mxu0
        %v4783 = vadd.f32 %v3722, %v4782
        %v4784 = vpop.f32.mrb[0].mxu0
        %v4785 = vpop.f32.mrb[0].mxu0
        %v4786 = vadd.f32 %v3722, %v4785
        %v4787 = vpop.f32.mrb[0].mxu0
        %4788 = vmatprep.mubr.bf16.mxu0 0
        %4789 = vmatmul.mubr.bf16.gmra.mrb[0].mxu0 %v4263
        %v4790 = vpop.f32.mrb[0].mxu0
        %v4791 = vadd.f32 %v3722, %v4790
        %v4792 = vpop.f32.mrb[0].mxu0
        %v4793 = vpop.f32.mrb[0].mxu0
        %v4794 = vadd.f32 %v3722, %v4793
        %v4795 = vpop.f32.mrb[0].mxu0
        %4796 = vmatprep.mubr.bf16.mxu0 0
        %4797 = vmatmul.mubr.bf16.gmra.mrb[0].mxu0 %v4264
        %v4798 = vpop.f32.mrb[0].mxu0
        %v4799 = vadd.f32 %v3722, %v4798
        %v4800 = vpop.f32.mrb[0].mxu0
        %v4801 = vpop.f32.mrb[0].mxu0
        %v4802 = vadd.f32 %v3722, %v4801
        %v4803 = vpop.f32.mrb[0].mxu0
        %4804 = vmatprep.mubr.bf16.mxu0 0
        %4805 = vmatmul.mubr.bf16.gmra.mrb[0].mxu0 %v4265
        %v4806 = vpop.f32.mrb[0].mxu0
        %v4807 = vadd.f32 %v3722, %v4806
        %v4808 = vpop.f32.mrb[0].mxu0
        %v4809 = vpop.f32.mrb[0].mxu0
        %v4810 = vadd.f32 %v3722, %v4809
        %v4811 = vpop.f32.mrb[0].mxu0
        %4812 = vmatprep.mubr.bf16.mxu0 0
        %4813 = vmatmul.mubr.bf16.gmra.mrb[0].mxu0 %v4266
        %v4814 = vpop.f32.mrb[0].mxu0
        %v4815 = vadd.f32 %v3722, %v4814
        %v4816 = vpop.f32.mrb[0].mxu0
        %v4817 = vpop.f32.mrb[0].mxu0
        %v4818 = vadd.f32 %v3722, %v4817
        %v4819 = vpop.f32.mrb[0].mxu0
        %4820 = vmatprep.mubr.bf16.mxu0 0
        %4821 = vmatmul.mubr.bf16.gmra.mrb[0].mxu0 %v4267
        %v4822 = vpop.f32.mrb[0].mxu0
        %v4823 = vadd.f32 %v3722, %v4822
        %v4824 = vpop.f32.mrb[0].mxu0
        %v4825 = vpop.f32.mrb[0].mxu0
        %v4826 = vadd.f32 %v3722, %v4825
        %v4827 = vpop.f32.mrb[0].mxu0
        %4828 = vmatprep.mubr.bf16.mxu0 0
        %4829 = vmatmul.mubr.bf16.gmra.mrb[0].mxu0 %v4268
        %v4830 = vpop.f32.mrb[0].mxu0
        %v4831 = vadd.f32 %v3722, %v4830
        %v4832 = vpop.f32.mrb[0].mxu0
        %v4833 = vpop.f32.mrb[0].mxu0
        %v4834 = vadd.f32 %v3722, %v4833
        %v4835 = vpop.f32.mrb[0].mxu0
        %4836 = vmatprep.mubr.bf16.mxu0 0
        %4837 = vmatmul.mubr.bf16.gmra.mrb[0].mxu0 %v4269
        %v4838 = vpop.f32.mrb[0].mxu0
        %v4839 = vadd.f32 %v3722, %v4838
        %v4840 = vpop.f32.mrb[0].mxu0
        %v4841 = vpop.f32.mrb[0].mxu0
        %v4842 = vadd.f32 %v3722, %v4841
        %v4843 = vpop.f32.mrb[0].mxu0
        %4844 = vmatprep.mubr.bf16.mxu0 0
        %4845 = vmatmul.mubr.bf16.gmra.mrb[0].mxu0 %v4270
        %v4846 = vpop.f32.mrb[0].mxu0
        %v4847 = vadd.f32 %v3722, %v4846
        %v4848 = vpop.f32.mrb[0].mxu0
        %v4849 = vpop.f32.mrb[0].mxu0
        %v4850 = vadd.f32 %v3722, %v4849
        %v4851 = vpop.f32.mrb[0].mxu0
        %4852 = vmatprep.mubr.bf16.mxu0 0
        %4853 = vmatmul.mubr.bf16.gmra.mrb[0].mxu0 %v4271
        %v4854 = vpop.f32.mrb[0].mxu0
        %v4855 = vadd.f32 %v3722, %v4854
        %v4856 = vpop.f32.mrb[0].mxu0
        %v4857 = vpop.f32.mrb[0].mxu0
        %v4858 = vadd.f32 %v3722, %v4857
        %v4859 = vpop.f32.mrb[0].mxu0
        %4860 = vmatprep.mubr.bf16.mxu0 0
        %4861 = vmatmul.mubr.bf16.gmra.mrb[0].mxu0 %v4272
        %v4862 = vpop.f32.mrb[0].mxu0
        %v4863 = vadd.f32 %v3722, %v4862
        %v4864 = vpop.f32.mrb[0].mxu0
        %v4865 = vpop.f32.mrb[0].mxu0
        %v4866 = vadd.f32 %v3722, %v4865
        %v4867 = vpop.f32.mrb[0].mxu0
        %4868 = vmatprep.mubr.bf16.mxu0 0
        %4869 = vmatmul.mubr.bf16.gmra.mrb[0].mxu0 %v4273
        %v4870 = vpop.f32.mrb[0].mxu0
        %v4871 = vadd.f32 %v3722, %v4870
        %v4872 = vpop.f32.mrb[0].mxu0
        %v4873 = vpop.f32.mrb[0].mxu0
        %v4874 = vadd.f32 %v3722, %v4873
        %v4875 = vpop.f32.mrb[0].mxu0
        %4876 = vmatprep.mubr.bf16.mxu0 0
        %4877 = vmatmul.mubr.bf16.gmra.mrb[0].mxu0 %v4274
        %v4878 = vpop.f32.mrb[0].mxu0
        %v4879 = vadd.f32 %v3722, %v4878
        %v4880 = vpop.f32.mrb[0].mxu0
        %v4881 = vpop.f32.mrb[0].mxu0
        %v4882 = vadd.f32 %v3722, %v4881
        %v4883 = vpop.f32.mrb[0].mxu0
        %4884 = vmatprep.mubr.bf16.mxu0 0
        %4885 = vmatmul.mubr.bf16.gmra.mrb[0].mxu0 %v4275
        %v4886 = vpop.f32.mrb[0].mxu0
        %v4887 = vadd.f32 %v3722, %v4886
        %v4888 = vpop.f32.mrb[0].mxu0
        %v4889 = vpop.f32.mrb[0].mxu0
        %v4890 = vadd.f32 %v3722, %v4889
        %v4891 = vpop.f32.mrb[0].mxu0
        %4892 = vmatprep.mubr.bf16.mxu0 0
        %4893 = vmatmul.mubr.bf16.gmra.mrb[0].mxu0 %v4276
        %v4894 = vpop.f32.mrb[0].mxu0
        %v4895 = vadd.f32 %v3722, %v4894
        %v4896 = vpop.f32.mrb[0].mxu0
        %v4897 = vpop.f32.mrb[0].mxu0
        %v4898 = vadd.f32 %v3722, %v4897
        %v4899 = vpop.f32.mrb[0].mxu0
        %4900 = vmatprep.mubr.bf16.mxu0 0
        %4901 = vmatmul.mubr.bf16.gmra.mrb[0].mxu0 %v4277
        %v4902 = vpop.f32.mrb[0].mxu0
        %v4903 = vadd.f32 %v3722, %v4902
        %v4904 = vpop.f32.mrb[0].mxu0
        %v4905 = vpop.f32.mrb[0].mxu0
        %v4906 = vadd.f32 %v3722, %v4905
        %v4907 = vpop.f32.mrb[0].mxu0
        %4908 = vmatprep.mubr.bf16.mxu0 0
        %4909 = vmatmul.mubr.bf16.gmra.mrb[0].mxu0 %v4278
        %v4910 = vpop.f32.mrb[0].mxu0
        %v4911 = vadd.f32 %v3722, %v4910
        %v4912 = vpop.f32.mrb[0].mxu0
        %v4913 = vpop.f32.mrb[0].mxu0
        %v4914 = vadd.f32 %v3722, %v4913
        %v4915 = vpop.f32.mrb[0].mxu0
        %4916 = vmatprep.mubr.bf16.mxu0 0
        %4917 = vmatmul.mubr.bf16.gmra.mrb[0].mxu0 %v4279
        %v4918 = vpop.f32.mrb[0].mxu0
        %v4919 = vadd.f32 %v3722, %v4918
        %v4920 = vpop.f32.mrb[0].mxu0
        %v4921 = vpop.f32.mrb[0].mxu0
        %v4922 = vadd.f32 %v3722, %v4921
        %v4923 = vpop.f32.mrb[0].mxu0
        %4924 = vmatprep.mubr.bf16.mxu0 0
        %4925 = vmatmul.mubr.bf16.gmra.mrb[0].mxu0 %v4280
        %v4926 = vpop.f32.mrb[0].mxu0
        %v4927 = vadd.f32 %v3722, %v4926
        %v4928 = vpop.f32.mrb[0].mxu0
        %v4929 = vpop.f32.mrb[0].mxu0
        %v4930 = vadd.f32 %v3722, %v4929
        %v4931 = vpop.f32.mrb[0].mxu0
        %4932 = vmatprep.mubr.bf16.mxu0 0
        %4933 = vmatmul.mubr.bf16.gmra.mrb[0].mxu0 %v4281
        %v4934 = vpop.f32.mrb[0].mxu0
        %v4935 = vadd.f32 %v3722, %v4934
        %v4936 = vpop.f32.mrb[0].mxu0
        %v4937 = vpop.f32.mrb[0].mxu0
        %v4938 = vadd.f32 %v3722, %v4937
        %v4939 = vpop.f32.mrb[0].mxu0
        %4940 = vmatprep.mubr.bf16.mxu0 0
        %4941 = vmatmul.mubr.bf16.gmra.mrb[0].mxu0 %v4282
        %v4942 = vpop.f32.mrb[0].mxu0
        %v4943 = vadd.f32 %v3722, %v4942
        %v4944 = vpop.f32.mrb[0].mxu0
        %v4945 = vpop.f32.mrb[0].mxu0
        %v4946 = vadd.f32 %v3722, %v4945
        %v4947 = vpop.f32.mrb[0].mxu0
        %4948 = vmatprep.mubr.bf16.mxu0 0
        %4949 = vmatmul.mubr.bf16.gmra.mrb[0].mxu0 %v4283
        %v4950 = vpop.f32.mrb[0].mxu0
        %v4951 = vadd.f32 %v3722, %v4950
        %v4952 = vpop.f32.mrb[0].mxu0
        %v4953 = vpop.f32.mrb[0].mxu0
        %v4954 = vadd.f32 %v3722, %v4953
        %v4955 = vpop.f32.mrb[0].mxu0
        %4956 = vmatprep.mubr.bf16.mxu0 0
        %4957 = vmatmul.mubr.bf16.gmra.mrb[0].mxu0 %v4284
        %v4958 = vpop.f32.mrb[0].mxu0
        %v4959 = vadd.f32 %v3722, %v4958
        %v4960 = vpop.f32.mrb[0].mxu0
        %v4961 = vpop.f32.mrb[0].mxu0
        %v4962 = vadd.f32 %v3722, %v4961
        %v4963 = vpop.f32.mrb[0].mxu0
        %4964 = vmatprep.mubr.bf16.mxu0 0
        %4965 = vmatmul.mubr.bf16.gmra.mrb[0].mxu0 %v4285
        %v4966 = vpop.f32.mrb[0].mxu0
        %v4967 = vadd.f32 %v3722, %v4966
        %v4968 = vpop.f32.mrb[0].mxu0
        %v4969 = vpop.f32.mrb[0].mxu0
        %v4970 = vadd.f32 %v3722, %v4969
        %v4971 = vpop.f32.mrb[0].mxu0
        %4972 = vmatprep.mubr.bf16.mxu0 0
        %4973 = vmatmul.mubr.bf16.gmra.mrb[0].mxu0 %v4286
        %v4974 = vpop.f32.mrb[0].mxu0
        %v4975 = vadd.f32 %v3722, %v4974
        %v4976 = vpop.f32.mrb[0].mxu0
        %v4977 = vpop.f32.mrb[0].mxu0
        %v4978 = vadd.f32 %v3722, %v4977
        %v4979 = vpop.f32.mrb[0].mxu0
        %4980 = vmatprep.mubr.bf16.mxu0 0
        %4981 = vmatmul.mubr.bf16.gmra.mrb[0].mxu0 %v4287
        %v4982 = vpop.f32.mrb[0].mxu0
        %v4983 = vadd.f32 %v3722, %v4982
        %v4984 = vpop.f32.mrb[0].mxu0
        %v4985 = vpop.f32.mrb[0].mxu0
        %v4986 = vadd.f32 %v3722, %v4985
        %v4987 = vpop.f32.mrb[0].mxu0
        %4988 = vmatprep.mubr.bf16.mxu0 0
        %4989 = vmatmul.mubr.bf16.gmra.mrb[0].mxu0 %v4288
        %v4990 = vpop.f32.mrb[0].mxu0
        %v4991 = vadd.f32 %v3722, %v4990
        %v4992 = vpop.f32.mrb[0].mxu0
        %v4993 = vpop.f32.mrb[0].mxu0
        %v4994 = vadd.f32 %v3722, %v4993
        %v4995 = vpop.f32.mrb[0].mxu0
        %4996 = vmatprep.mubr.bf16.mxu0 0
        %4997 = vmatmul.mubr.bf16.gmra.mrb[0].mxu0 %v4289
        %v4998 = vpop.f32.mrb[0].mxu0
        %v4999 = vadd.f32 %v3722, %v4998
        %v5000 = vpop.f32.mrb[0].mxu0
        %v5001 = vpop.f32.mrb[0].mxu0
        %v5002 = vadd.f32 %v3722, %v5001
        %v5003 = vpop.f32.mrb[0].mxu0
        %5004 = vmatprep.mubr.bf16.mxu0 0
        %5005 = vmatmul.mubr.bf16.gmra.mrb[0].mxu0 %v4290
        %v5006 = vpop.f32.mrb[0].mxu0
        %v5007 = vadd.f32 %v3722, %v5006
        %v5008 = vpop.f32.mrb[0].mxu0
        %v5009 = vpop.f32.mrb[0].mxu0
        %v5010 = vadd.f32 %v3722, %v5009
        %v5011 = vpop.f32.mrb[0].mxu0
        %5012 = vmatprep.mubr.bf16.mxu0 0
        %5013 = vmatmul.mubr.bf16.gmra.mrb[0].mxu0 %v4291
        %v5014 = vpop.f32.mrb[0].mxu0
        %v5015 = vadd.f32 %v3722, %v5014
        %v5016 = vpop.f32.mrb[0].mxu0
        %v5017 = vpop.f32.mrb[0].mxu0
        %v5018 = vadd.f32 %v3722, %v5017
        %v5019 = vpop.f32.mrb[0].mxu0
        %5020 = vmatprep.mubr.bf16.mxu0 0
        %5021 = vmatmul.mubr.bf16.gmra.mrb[0].mxu0 %v4292
        %v5022 = vpop.f32.mrb[0].mxu0
        %v5023 = vadd.f32 %v3722, %v5022
        %v5024 = vpop.f32.mrb[0].mxu0
        %v5025 = vpop.f32.mrb[0].mxu0
        %v5026 = vadd.f32 %v3722, %v5025
        %v5027 = vpop.f32.mrb[0].mxu0
        %5028 = vmatprep.mubr.bf16.mxu0 0
        %5029 = vmatmul.mubr.bf16.gmra.mrb[0].mxu0 %v4293
        %v5030 = vpop.f32.mrb[0].mxu0
        %v5031 = vadd.f32 %v3722, %v5030
        %v5032 = vpop.f32.mrb[0].mxu0
        %v5033 = vpop.f32.mrb[0].mxu0
        %v5034 = vadd.f32 %v3722, %v5033
        %v5035 = vpop.f32.mrb[0].mxu0
        %5036 = vmatprep.mubr.bf16.mxu0 0
        %5037 = vmatmul.mubr.bf16.gmra.mrb[0].mxu0 %v4294
        %v5038 = vpop.f32.mrb[0].mxu0
        %v5039 = vadd.f32 %v3722, %v5038
        %v5040 = vpop.f32.mrb[0].mxu0
        %v5041 = vpop.f32.mrb[0].mxu0
        %v5042 = vadd.f32 %v3722, %v5041
        %v5043 = vpop.f32.mrb[0].mxu0
        %5044 = vmatprep.mubr.bf16.mxu0 0
        %5045 = vmatmul.mubr.bf16.gmra.mrb[0].mxu0 %v4295
        %v5046 = vpop.f32.mrb[0].mxu0
        %v5047 = vadd.f32 %v3722, %v5046
        %v5048 = vpop.f32.mrb[0].mxu0
        %v5049 = vpop.f32.mrb[0].mxu0
        %v5050 = vadd.f32 %v3722, %v5049
        %v5051 = vpop.f32.mrb[0].mxu0
        %5052 = vmatprep.mubr.bf16.mxu0 0
        %5053 = vmatmul.mubr.bf16.gmra.mrb[0].mxu0 %v4296
        %v5054 = vpop.f32.mrb[0].mxu0
        %v5055 = vadd.f32 %v3722, %v5054
        %v5056 = vpop.f32.mrb[0].mxu0
        %v5057 = vpop.f32.mrb[0].mxu0
        %v5058 = vadd.f32 %v3722, %v5057
        %v5059 = vpop.f32.mrb[0].mxu0
        %5060 = vmatprep.mubr.bf16.mxu0 0
        %5061 = vmatmul.mubr.bf16.gmra.mrb[0].mxu0 %v4297
        %v5062 = vpop.f32.mrb[0].mxu0
        %v5063 = vadd.f32 %v3722, %v5062
        %v5064 = vpop.f32.mrb[0].mxu0
        %v5065 = vpop.f32.mrb[0].mxu0
        %v5066 = vadd.f32 %v3722, %v5065
        %v5067 = vpop.f32.mrb[0].mxu0
        %5068 = vmatprep.mubr.bf16.mxu0 0
        %5069 = vmatmul.mubr.bf16.gmra.mrb[0].mxu0 %v4298
        %v5070 = vpop.f32.mrb[0].mxu0
        %v5071 = vadd.f32 %v3722, %v5070
        %v5072 = vpop.f32.mrb[0].mxu0
        %v5073 = vpop.f32.mrb[0].mxu0
        %v5074 = vadd.f32 %v3722, %v5073
        %v5075 = vpop.f32.mrb[0].mxu0
        %5076 = vmatprep.mubr.bf16.mxu0 0
        %5077 = vmatmul.mubr.bf16.gmra.mrb[0].mxu0 %v4299
        %v5078 = vpop.f32.mrb[0].mxu0
        %v5079 = vadd.f32 %v3722, %v5078
        %v5080 = vpop.f32.mrb[0].mxu0
        %v5081 = vpop.f32.mrb[0].mxu0
        %v5082 = vadd.f32 %v3722, %v5081
        %v5083 = vpop.f32.mrb[0].mxu0
        %5084 = vmatprep.mubr.bf16.mxu0 0
        %5085 = vmatmul.mubr.bf16.gmra.mrb[0].mxu0 %v4300
        %v5086 = vpop.f32.mrb[0].mxu0
        %v5087 = vadd.f32 %v3722, %v5086
        %v5088 = vpop.f32.mrb[0].mxu0
        %v5089 = vpop.f32.mrb[0].mxu0
        %v5090 = vadd.f32 %v3722, %v5089
        %v5091 = vpop.f32.mrb[0].mxu0
        %5092 = vmatprep.mubr.bf16.mxu0 0
        %5093 = vmatmul.mubr.bf16.gmra.mrb[0].mxu0 %v4301
        %v5094 = vpop.f32.mrb[0].mxu0
        %v5095 = vadd.f32 %v3722, %v5094
        %v5096 = vpop.f32.mrb[0].mxu0
        %v5097 = vpop.f32.mrb[0].mxu0
        %v5098 = vadd.f32 %v3722, %v5097
        %v5099 = vpop.f32.mrb[0].mxu0
        %5100 = vmatprep.mubr.bf16.mxu0 0
        %5101 = vmatmul.mubr.bf16.gmra.mrb[0].mxu0 %v4302
        %v5102 = vpop.f32.mrb[0].mxu0
        %v5103 = vadd.f32 %v3722, %v5102
        %v5104 = vpop.f32.mrb[0].mxu0
        %v5105 = vpop.f32.mrb[0].mxu0
        %v5106 = vadd.f32 %v3722, %v5105
        %v5107 = vpop.f32.mrb[0].mxu0
        %5108 = vmatprep.mubr.bf16.mxu0 0
        %5109 = vmatmul.mubr.bf16.gmra.mrb[0].mxu0 %v4303
        %v5110 = vpop.f32.mrb[0].mxu0
        %v5111 = vadd.f32 %v3722, %v5110
        %v5112 = vpop.f32.mrb[0].mxu0
        %v5113 = vpop.f32.mrb[0].mxu0
        %v5114 = vadd.f32 %v3722, %v5113
        %v5115 = vpop.f32.mrb[0].mxu0
        %5116 = vmatprep.mubr.bf16.mxu0 0
        %5117 = vmatmul.mubr.bf16.gmra.mrb[0].mxu0 %v4304
        %v5118 = vpop.f32.mrb[0].mxu0
        %v5119 = vadd.f32 %v3722, %v5118
        %v5120 = vpop.f32.mrb[0].mxu0
        %v5121 = vpop.f32.mrb[0].mxu0
        %v5122 = vadd.f32 %v3722, %v5121
        %v5123 = vpop.f32.mrb[0].mxu0
        %5124 = vmatprep.mubr.bf16.mxu0 0
        %5125 = vmatmul.mubr.bf16.gmra.mrb[0].mxu0 %v4305
        %v5126 = vpop.f32.mrb[0].mxu0
        %v5127 = vadd.f32 %v3722, %v5126
        %v5128 = vpop.f32.mrb[0].mxu0
        %v5129 = vpop.f32.mrb[0].mxu0
        %v5130 = vadd.f32 %v3722, %v5129
        %v5131 = vpop.f32.mrb[0].mxu0
        %5132 = vmatprep.mubr.bf16.mxu0 0
        %5133 = vmatmul.mubr.bf16.gmra.mrb[0].mxu0 %v4306
        %v5134 = vpop.f32.mrb[0].mxu0
        %v5135 = vadd.f32 %v3722, %v5134
        %v5136 = vpop.f32.mrb[0].mxu0
        %v5137 = vpop.f32.mrb[0].mxu0
        %v5138 = vadd.f32 %v3722, %v5137
        %v5139 = vpop.f32.mrb[0].mxu0
        %5140 = vmatprep.mubr.bf16.mxu0 0
        %5141 = vmatmul.mubr.bf16.gmra.mrb[0].mxu0 %v4307
        %v5142 = vpop.f32.mrb[0].mxu0
        %v5143 = vadd.f32 %v3722, %v5142
        %v5144 = vpop.f32.mrb[0].mxu0
        %v5145 = vpop.f32.mrb[0].mxu0
        %v5146 = vadd.f32 %v3722, %v5145
        %v5147 = vpop.f32.mrb[0].mxu0
        %5148 = vmatprep.mubr.bf16.mxu0 0
        %5149 = vmatmul.mubr.bf16.gmra.mrb[0].mxu0 %v4308
        %v5150 = vpop.f32.mrb[0].mxu0
        %v5151 = vadd.f32 %v3722, %v5150
        %v5152 = vpop.f32.mrb[0].mxu0
        %v5153 = vpop.f32.mrb[0].mxu0
        %v5154 = vadd.f32 %v3722, %v5153
        %v5155 = vpop.f32.mrb[0].mxu0
        %5156 = vmatprep.mubr.bf16.mxu0 0
        %5157 = vmatmul.mubr.bf16.gmra.mrb[0].mxu0 %v4309
        %v5158 = vpop.f32.mrb[0].mxu0
        %v5159 = vadd.f32 %v3722, %v5158
        %v5160 = vpop.f32.mrb[0].mxu0
        %v5161 = vpop.f32.mrb[0].mxu0
        %v5162 = vadd.f32 %v3722, %v5161
        %v5163 = vpop.f32.mrb[0].mxu0
        %5164 = vmatprep.mubr.bf16.mxu0 0
        %5165 = vmatmul.mubr.bf16.gmra.mrb[0].mxu0 %v4310
        %v5166 = vpop.f32.mrb[0].mxu0
        %v5167 = vadd.f32 %v3722, %v5166
        %v5168 = vpop.f32.mrb[0].mxu0
        %v5169 = vpop.f32.mrb[0].mxu0
        %v5170 = vadd.f32 %v3722, %v5169
        %v5171 = vpop.f32.mrb[0].mxu0
        %5172 = vmatprep.mubr.bf16.mxu0 0
        %5173 = vmatmul.mubr.bf16.gmra.mrb[0].mxu0 %v4311
        %v5174 = vpop.f32.mrb[0].mxu0
        %v5175 = vadd.f32 %v3722, %v5174
        %v5176 = vpop.f32.mrb[0].mxu0
        %v5177 = vpop.f32.mrb[0].mxu0
        %v5178 = vadd.f32 %v3722, %v5177
        %v5179 = vpop.f32.mrb[0].mxu0
        %5180 = vmatprep.mubr.bf16.mxu0 0
        %5181 = vmatmul.mubr.bf16.gmra.mrb[0].mxu0 %v4312
        %v5182 = vpop.f32.mrb[0].mxu0
        %v5183 = vadd.f32 %v3722, %v5182
        %v5184 = vpop.f32.mrb[0].mxu0
        %v5185 = vpop.f32.mrb[0].mxu0
        %v5186 = vadd.f32 %v3722, %v5185
        %v5187 = vpop.f32.mrb[0].mxu0
        %5188 = vmatprep.mubr.bf16.mxu0 0
        %5189 = vmatmul.mubr.bf16.gmra.mrb[0].mxu0 %v4313
        %v5190 = vpop.f32.mrb[0].mxu0
        %v5191 = vadd.f32 %v3722, %v5190
        %v5192 = vpop.f32.mrb[0].mxu0
        %v5193 = vpop.f32.mrb[0].mxu0
        %v5194 = vadd.f32 %v3722, %v5193
        %v5195 = vpop.f32.mrb[0].mxu0
        %5196 = vmatprep.mubr.bf16.mxu0 0
        %5197 = vmatmul.mubr.bf16.gmra.mrb[0].mxu0 %v4314
        %v5198 = vpop.f32.mrb[0].mxu0
        %v5199 = vadd.f32 %v3722, %v5198
        %v5200 = vpop.f32.mrb[0].mxu0
        %v5201 = vpop.f32.mrb[0].mxu0
        %v5202 = vadd.f32 %v3722, %v5201
        %v5203 = vpop.f32.mrb[0].mxu0
        %5204 = vmatprep.mubr.bf16.mxu0 0
        %5205 = vmatmul.mubr.bf16.gmra.mrb[0].mxu0 %v4315
        %v5206 = vpop.f32.mrb[0].mxu0
        %v5207 = vadd.f32 %v3722, %v5206
        %v5208 = vpop.f32.mrb[0].mxu0
        %v5209 = vpop.f32.mrb[0].mxu0
        %v5210 = vadd.f32 %v3722, %v5209
        %v5211 = vpop.f32.mrb[0].mxu0
        %5212 = vmatprep.mubr.bf16.mxu0 0
        %5213 = vmatmul.mubr.bf16.gmra.mrb[0].mxu0 %v4316
        %v5214 = vpop.f32.mrb[0].mxu0
        %v5215 = vadd.f32 %v3722, %v5214
        %v5216 = vpop.f32.mrb[0].mxu0
        %v5217 = vpop.f32.mrb[0].mxu0
        %v5218 = vadd.f32 %v3722, %v5217
        %v5219 = vpop.f32.mrb[0].mxu0
        %5220 = vmatprep.mubr.bf16.mxu0 0
        %5221 = vmatmul.mubr.bf16.gmra.mrb[0].mxu0 %v4317
        %v5222 = vpop.f32.mrb[0].mxu0
        %v5223 = vadd.f32 %v3722, %v5222
        %v5224 = vpop.f32.mrb[0].mxu0
        %v5225 = vpop.f32.mrb[0].mxu0
        %v5226 = vadd.f32 %v3722, %v5225
        %v5227 = vpop.f32.mrb[0].mxu0
        %5228 = vmatprep.mubr.bf16.mxu0 0
        %5229 = vmatmul.mubr.bf16.gmra.mrb[0].mxu0 %v4318
        %v5230 = vpop.f32.mrb[0].mxu0
        %v5231 = vadd.f32 %v3722, %v5230
        %v5232 = vpop.f32.mrb[0].mxu0
        %v5233 = vpop.f32.mrb[0].mxu0
        %v5234 = vadd.f32 %v3722, %v5233
        %v5235 = vpop.f32.mrb[0].mxu0
        %5236 = vmatprep.mubr.bf16.mxu0 0
        %5237 = vmatmul.mubr.bf16.gmra.mrb[0].mxu0 %v4319
        %v5238 = vpop.f32.mrb[0].mxu0
        %v5239 = vadd.f32 %v3722, %v5238
        %v5240 = vpop.f32.mrb[0].mxu0
        %v5241 = vpop.f32.mrb[0].mxu0
        %v5242 = vadd.f32 %v3722, %v5241
        %v5243 = vpop.f32.mrb[0].mxu0
        %5244 = vmatprep.mubr.bf16.mxu0 0
        %5245 = vmatmul.mubr.bf16.gmra.mrb[0].mxu0 %v4320
        %v5246 = vpop.f32.mrb[0].mxu0
        %v5247 = vadd.f32 %v3722, %v5246
        %v5248 = vpop.f32.mrb[0].mxu0
        %v5249 = vpop.f32.mrb[0].mxu0
        %v5250 = vadd.f32 %v3722, %v5249
        %v5251 = vpop.f32.mrb[0].mxu0
        %5252 = vmatprep.mubr.bf16.mxu0 0
        %5253 = vmatmul.mubr.bf16.gmra.mrb[0].mxu0 %v4321
        %v5254 = vpop.f32.mrb[0].mxu0
        %v5255 = vadd.f32 %v3722, %v5254
        %v5256 = vpop.f32.mrb[0].mxu0
        %v5257 = vpop.f32.mrb[0].mxu0
        %v5258 = vadd.f32 %v3722, %v5257
        %v5259 = vpop.f32.mrb[0].mxu0
        %5260 = vmatprep.mubr.bf16.mxu0 0
        %5261 = vmatmul.mubr.bf16.gmra.mrb[0].mxu0 %v4322
        %v5262 = vpop.f32.mrb[0].mxu0
        %v5263 = vadd.f32 %v3722, %v5262
        %v5264 = vpop.f32.mrb[0].mxu0
        %v5265 = vpop.f32.mrb[0].mxu0
        %v5266 = vadd.f32 %v3722, %v5265
        %v5267 = vpop.f32.mrb[0].mxu0
        %5268 = vmatprep.mubr.bf16.mxu0 0
        %5269 = vmatmul.mubr.bf16.gmra.mrb[0].mxu0 %v4323
        %v5270 = vpop.f32.mrb[0].mxu0
        %v5271 = vadd.f32 %v3722, %v5270
        %v5272 = vpop.f32.mrb[0].mxu0
        %v5273 = vpop.f32.mrb[0].mxu0
        %v5274 = vadd.f32 %v3722, %v5273
        %v5275 = vpop.f32.mrb[0].mxu0
        %5276 = vmatprep.mubr.bf16.mxu0 0
        %5277 = vmatmul.mubr.bf16.gmra.mrb[0].mxu0 %v4324
        %v5278 = vpop.f32.mrb[0].mxu0
        %v5279 = vadd.f32 %v3722, %v5278
        %v5280 = vpop.f32.mrb[0].mxu0
        %v5281 = vpop.f32.mrb[0].mxu0
        %v5282 = vadd.f32 %v3722, %v5281
        %v5283 = vpop.f32.mrb[0].mxu0
        %5284 = vmatprep.mubr.bf16.mxu0 0
        %5285 = vmatmul.mubr.bf16.gmra.mrb[0].mxu0 %v4325
        %v5286 = vpop.f32.mrb[0].mxu0
        %v5287 = vadd.f32 %v3722, %v5286
        %v5288 = vpop.f32.mrb[0].mxu0
        %v5289 = vpop.f32.mrb[0].mxu0
        %v5290 = vadd.f32 %v3722, %v5289
        %v5291 = vpop.f32.mrb[0].mxu0
        %5292 = vmatprep.mubr.bf16.mxu0 0
        %5293 = vmatmul.mubr.bf16.gmra.mrb[0].mxu0 %v4326
        %v5294 = vpop.f32.mrb[0].mxu0
        %v5295 = vadd.f32 %v3722, %v5294
        %v5296 = vpop.f32.mrb[0].mxu0
        %v5297 = vpop.f32.mrb[0].mxu0
        %v5298 = vadd.f32 %v3722, %v5297
        %v5299 = vpop.f32.mrb[0].mxu0
        %5300 = vmatprep.mubr.bf16.mxu0 0
        %5301 = vmatmul.mubr.bf16.gmra.mrb[0].mxu0 %v4327
        %v5302 = vpop.f32.mrb[0].mxu0
        %v5303 = vadd.f32 %v3722, %v5302
        %v5304 = vpop.f32.mrb[0].mxu0
        %v5305 = vpop.f32.mrb[0].mxu0
        %v5306 = vadd.f32 %v3722, %v5305
        %v5307 = vpop.f32.mrb[0].mxu0
        %5308 = vmatprep.mubr.bf16.mxu0 0
        %5309 = vmatmul.mubr.bf16.gmra.mrb[0].mxu0 %v4328
        %v5310 = vpop.f32.mrb[0].mxu0
        %v5311 = vadd.f32 %v3722, %v5310
        %v5312 = vpop.f32.mrb[0].mxu0
        %v5313 = vpop.f32.mrb[0].mxu0
        %v5314 = vadd.f32 %v3722, %v5313
        %v5315 = vpop.f32.mrb[0].mxu0
        %5316 = vmatprep.mubr.bf16.mxu0 0
        %5317 = vmatmul.mubr.bf16.gmra.mrb[0].mxu0 %v4329
        %v5318 = vpop.f32.mrb[0].mxu0
        %v5319 = vadd.f32 %v3722, %v5318
        %v5320 = vpop.f32.mrb[0].mxu0
        %v5321 = vpop.f32.mrb[0].mxu0
        %v5322 = vadd.f32 %v3722, %v5321
        %v5323 = vpop.f32.mrb[0].mxu0
        %5324 = vmatprep.mubr.bf16.mxu0 0
        %5325 = vmatmul.mubr.bf16.gmra.mrb[0].mxu0 %v4330
        %v5326 = vpop.f32.mrb[0].mxu0
        %v5327 = vadd.f32 %v3722, %v5326
        %v5328 = vpop.f32.mrb[0].mxu0
        %v5329 = vpop.f32.mrb[0].mxu0
        %v5330 = vadd.f32 %v3722, %v5329
        %v5331 = vpop.f32.mrb[0].mxu0
        %5332 = vmatprep.mubr.bf16.mxu0 0
        %5333 = vmatmul.mubr.bf16.gmra.mrb[0].mxu0 %v4331
        %v5334 = vpop.f32.mrb[0].mxu0
        %v5335 = vadd.f32 %v3722, %v5334
        %v5336 = vpop.f32.mrb[0].mxu0
        %v5337 = vpop.f32.mrb[0].mxu0
        %v5338 = vadd.f32 %v3722, %v5337
        %v5339 = vpop.f32.mrb[0].mxu0
        %5340 = vmatprep.mubr.bf16.mxu0 0
        %5341 = vmatmul.mubr.bf16.gmra.mrb[0].mxu0 %v4332
        %v5342 = vpop.f32.mrb[0].mxu0
        %v5343 = vadd.f32 %v3722, %v5342
        %v5344 = vpop.f32.mrb[0].mxu0
        %v5345 = vpop.f32.mrb[0].mxu0
        %v5346 = vadd.f32 %v3722, %v5345
        %v5347 = vpop.f32.mrb[0].mxu0
        %5348 = vmatprep.mubr.bf16.mxu0 0
        %5349 = vmatmul.mubr.bf16.gmra.mrb[0].mxu0 %v4333
        %v5350 = vpop.f32.mrb[0].mxu0
        %v5351 = vadd.f32 %v3722, %v5350
        %v5352 = vpop.f32.mrb[0].mxu0
        %v5353 = vpop.f32.mrb[0].mxu0
        %v5354 = vadd.f32 %v3722, %v5353
        %v5355 = vpop.f32.mrb[0].mxu0
        %5356 = vmatprep.mubr.bf16.mxu0 0
        %5357 = vmatmul.mubr.bf16.gmra.mrb[0].mxu0 %v4334
        %v5358 = vpop.f32.mrb[0].mxu0
        %v5359 = vadd.f32 %v3722, %v5358
        %v5360 = vpop.f32.mrb[0].mxu0
        %v5361 = vpop.f32.mrb[0].mxu0
        %v5362 = vadd.f32 %v3722, %v5361
        %v5363 = vpop.f32.mrb[0].mxu0
        %5364 = vmatprep.mubr.bf16.mxu0 0
        %5365 = vmatmul.mubr.bf16.gmra.mrb[0].mxu0 %v4335
        %v5366 = vpop.f32.mrb[0].mxu0
        %v5367 = vadd.f32 %v3722, %v5366
        %v5368 = vpop.f32.mrb[0].mxu0
        %v5369 = vpop.f32.mrb[0].mxu0
        %v5370 = vadd.f32 %v3722, %v5369
        %v5371 = vpop.f32.mrb[0].mxu0
        %5372 = vmatprep.mubr.bf16.mxu0 0
        %5373 = vmatmul.mubr.bf16.gmra.mrb[0].mxu0 %v4336
        %v5374 = vpop.f32.mrb[0].mxu0
        %v5375 = vadd.f32 %v3722, %v5374
        %v5376 = vpop.f32.mrb[0].mxu0
        %v5377 = vpop.f32.mrb[0].mxu0
        %v5378 = vadd.f32 %v3722, %v5377
        %v5379 = vpop.f32.mrb[0].mxu0
        %5380 = vmatprep.mubr.bf16.mxu0 0
        %5381 = vmatmul.mubr.bf16.gmra.mrb[0].mxu0 %v4337
        %v5382 = vpop.f32.mrb[0].mxu0
        %v5383 = vadd.f32 %v3722, %v5382
        %v5384 = vpop.f32.mrb[0].mxu0
        %v5385 = vpop.f32.mrb[0].mxu0
        %v5386 = vadd.f32 %v3722, %v5385
        %v5387 = vpop.f32.mrb[0].mxu0
        %5388 = vmatprep.mubr.bf16.mxu0 0
        %5389 = vmatmul.mubr.bf16.gmra.mrb[0].mxu0 %v4338
        %v5390 = vpop.f32.mrb[0].mxu0
        %v5391 = vadd.f32 %v3722, %v5390
        %v5392 = vpop.f32.mrb[0].mxu0
        %v5393 = vpop.f32.mrb[0].mxu0
        %v5394 = vadd.f32 %v3722, %v5393
        %v5395 = vpop.f32.mrb[0].mxu0
        %5396 = vmatprep.mubr.bf16.mxu0 0
        %5397 = vmatmul.mubr.bf16.gmra.mrb[0].mxu0 %v4339
        %v5398 = vpop.f32.mrb[0].mxu0
        %v5399 = vadd.f32 %v3722, %v5398
        %v5400 = vpop.f32.mrb[0].mxu0
        %v5401 = vpop.f32.mrb[0].mxu0
        %v5402 = vadd.f32 %v3722, %v5401
        %v5403 = vpop.f32.mrb[0].mxu0
        %5404 = vmatprep.mubr.bf16.mxu0 0
        %5405 = vmatmul.mubr.bf16.gmra.mrb[0].mxu0 %v4340
        %v5406 = vpop.f32.mrb[0].mxu0
        %v5407 = vadd.f32 %v3722, %v5406
        %v5408 = vpop.f32.mrb[0].mxu0
        %v5409 = vpop.f32.mrb[0].mxu0
        %v5410 = vadd.f32 %v3722, %v5409
        %v5411 = vpop.f32.mrb[0].mxu0
        %5412 = vmatprep.mubr.bf16.mxu0 0
        %5413 = vmatmul.mubr.bf16.gmra.mrb[0].mxu0 %v4341
        %v5414 = vpop.f32.mrb[0].mxu0
        %v5415 = vadd.f32 %v3722, %v5414
        %v5416 = vpop.f32.mrb[0].mxu0
        %v5417 = vpop.f32.mrb[0].mxu0
        %v5418 = vadd.f32 %v3722, %v5417
        %v5419 = vpop.f32.mrb[0].mxu0
        %5420 = vmatprep.mubr.bf16.mxu0 0
        %5421 = vmatmul.mubr.bf16.gmra.mrb[0].mxu0 %v4342
        %v5422 = vpop.f32.mrb[0].mxu0
        %v5423 = vadd.f32 %v3722, %v5422
        %v5424 = vpop.f32.mrb[0].mxu0
        %v5425 = vpop.f32.mrb[0].mxu0
        %v5426 = vadd.f32 %v3722, %v5425
        %v5427 = vpop.f32.mrb[0].mxu0
        %5428 = vmatprep.mubr.bf16.mxu0 0
        %5429 = vmatmul.mubr.bf16.gmra.mrb[0].mxu0 %v4343
        %v5430 = vpop.f32.mrb[0].mxu0
        %v5431 = vadd.f32 %v3722, %v5430
        %v5432 = vpop.f32.mrb[0].mxu0
        %v5433 = vpop.f32.mrb[0].mxu0
        %v5434 = vadd.f32 %v3722, %v5433
        %v5435 = vpop.f32.mrb[0].mxu0
        %5436 = vmatprep.mubr.bf16.mxu0 0
        %5437 = vmatmul.mubr.bf16.gmra.mrb[0].mxu0 %v4344
        %v5438 = vpop.f32.mrb[0].mxu0
        %v5439 = vadd.f32 %v3722, %v5438
        %v5440 = vpop.f32.mrb[0].mxu0
        %v5441 = vpop.f32.mrb[0].mxu0
        %v5442 = vadd.f32 %v3722, %v5441
        %v5443 = vpop.f32.mrb[0].mxu0
        %5444 = vmatprep.mubr.bf16.mxu0 0
        %5445 = vmatmul.mubr.bf16.gmra.mrb[0].mxu0 %v4345
        %v5446 = vpop.f32.mrb[0].mxu0
        %v5447 = vadd.f32 %v3722, %v5446
        %v5448 = vpop.f32.mrb[0].mxu0
        %v5449 = vpop.f32.mrb[0].mxu0
        %v5450 = vadd.f32 %v3722, %v5449
        %v5451 = vpop.f32.mrb[0].mxu0
        %5452 = vmatprep.mubr.bf16.mxu0 0
        %5453 = vmatmul.mubr.bf16.gmra.mrb[0].mxu0 %v4346
        %v5454 = vpop.f32.mrb[0].mxu0
        %v5455 = vadd.f32 %v3722, %v5454
        %v5456 = vpop.f32.mrb[0].mxu0
        %v5457 = vpop.f32.mrb[0].mxu0
        %v5458 = vadd.f32 %v3722, %v5457
        %v5459 = vpop.f32.mrb[0].mxu0
        %5460 = vmatprep.mubr.bf16.mxu0 0
        %5461 = vmatmul.mubr.bf16.gmra.mrb[0].mxu0 %v4347
        %v5462 = vpop.f32.mrb[0].mxu0
        %v5463 = vadd.f32 %v3722, %v5462
        %v5464 = vpop.f32.mrb[0].mxu0
        %v5465 = vpop.f32.mrb[0].mxu0
        %v5466 = vadd.f32 %v3722, %v5465
        %v5467 = vpop.f32.mrb[0].mxu0
        %5468 = vmatprep.mubr.bf16.mxu0 0
        %5469 = vmatmul.mubr.bf16.gmra.mrb[0].mxu0 %v4348
        %v5470 = vpop.f32.mrb[0].mxu0
        %v5471 = vadd.f32 %v3722, %v5470
        %v5472 = vpop.f32.mrb[0].mxu0
        %v5473 = vpop.f32.mrb[0].mxu0
        %v5474 = vadd.f32 %v3722, %v5473
        %v5475 = vpop.f32.mrb[0].mxu0
        %5476 = vmatprep.mubr.bf16.mxu0 0
        %5477 = vmatmul.mubr.bf16.gmra.mrb[0].mxu0 %v4349
        %v5478 = vpop.f32.mrb[0].mxu0
        %v5479 = vadd.f32 %v3722, %v5478
        %v5480 = vpop.f32.mrb[0].mxu0
        %v5481 = vpop.f32.mrb[0].mxu0
        %v5482 = vadd.f32 %v3722, %v5481
        %v5483 = vpop.f32.mrb[0].mxu0
        %5484 = vmatprep.mubr.bf16.mxu0 0
        %5485 = vmatmul.mubr.bf16.gmra.mrb[0].mxu0 %v4350
        %v5486 = vpop.f32.mrb[0].mxu0
        %v5487 = vadd.f32 %v3722, %v5486
        %v5488 = vpop.f32.mrb[0].mxu0
        %v5489 = vpop.f32.mrb[0].mxu0
        %v5490 = vadd.f32 %v3722, %v5489
        %v5491 = vpop.f32.mrb[0].mxu0
        %5492 = vmatprep.mubr.bf16.mxu0 0
        %5493 = vmatmul.mubr.bf16.gmra.mrb[0].mxu0 %v4351
        %v5494 = vpop.f32.mrb[0].mxu0
        %v5495 = vadd.f32 %v3722, %v5494
        %v5496 = vpop.f32.mrb[0].mxu0
        %v5497 = vpop.f32.mrb[0].mxu0
        %v5498 = vadd.f32 %v3722, %v5497
        %v5499 = vpop.f32.mrb[0].mxu0
        %5500 = vmatprep.mubr.bf16.mxu0 0
        %5501 = vmatmul.mubr.bf16.gmra.mrb[0].mxu0 %v4352
        %v5502 = vpop.f32.mrb[0].mxu0
        %v5503 = vadd.f32 %v3722, %v5502
        %v5504 = vpop.f32.mrb[0].mxu0
        %v5505 = vpop.f32.mrb[0].mxu0
        %v5506 = vadd.f32 %v3722, %v5505
        %v5507 = vpop.f32.mrb[0].mxu0
        %5508 = vmatprep.mubr.bf16.mxu0 0
        %5509 = vmatmul.mubr.bf16.gmra.mrb[0].mxu0 %v4353
        %v5510 = vpop.f32.mrb[0].mxu0
        %v5511 = vadd.f32 %v3722, %v5510
        %v5512 = vpop.f32.mrb[0].mxu0
        %v5513 = vpop.f32.mrb[0].mxu0
        %v5514 = vadd.f32 %v3722, %v5513
        %v5515 = vpop.f32.mrb[0].mxu0
        %5516 = vmatprep.mubr.bf16.mxu0 0
        %5517 = vmatmul.mubr.bf16.gmra.mrb[0].mxu0 %v4354
        %v5518 = vpop.f32.mrb[0].mxu0
        %v5519 = vadd.f32 %v3722, %v5518
        %v5520 = vpop.f32.mrb[0].mxu0
        %v5521 = vpop.f32.mrb[0].mxu0
        %v5522 = vadd.f32 %v3722, %v5521
        %v5523 = vpop.f32.mrb[0].mxu0
        %5524 = vmatprep.mubr.bf16.mxu0 0
        %5525 = vmatmul.mubr.bf16.gmra.mrb[0].mxu0 %v4355
        %v5526 = vpop.f32.mrb[0].mxu0
        %v5527 = vadd.f32 %v3722, %v5526
        %v5528 = vpop.f32.mrb[0].mxu0
        %v5529 = vpop.f32.mrb[0].mxu0
        %v5530 = vadd.f32 %v3722, %v5529
        %v5531 = vpop.f32.mrb[0].mxu0
        %5532 = vmatprep.mubr.bf16.mxu0 0
        %5533 = vmatmul.mubr.bf16.gmra.mrb[0].mxu0 %v4356
        %v5534 = vpop.f32.mrb[0].mxu0
        %v5535 = vadd.f32 %v3722, %v5534
        %v5536 = vpop.f32.mrb[0].mxu0
        %v5537 = vpop.f32.mrb[0].mxu0
        %v5538 = vadd.f32 %v3722, %v5537
        %v5539 = vpop.f32.mrb[0].mxu0
        %5540 = vmatprep.mubr.bf16.mxu0 0
        %5541 = vmatmul.mubr.bf16.gmra.mrb[0].mxu0 %v4357
        %v5542 = vpop.f32.mrb[0].mxu0
        %v5543 = vadd.f32 %v3722, %v5542
        %v5544 = vpop.f32.mrb[0].mxu0
        %v5545 = vpop.f32.mrb[0].mxu0
        %v5546 = vadd.f32 %v3722, %v5545
        %v5547 = vpop.f32.mrb[0].mxu0
        %5548 = vmatprep.mubr.bf16.mxu0 0
        %5549 = vmatmul.mubr.bf16.gmra.mrb[0].mxu0 %v4358
        %v5550 = vpop.f32.mrb[0].mxu0
        %v5551 = vadd.f32 %v3722, %v5550
        %v5552 = vpop.f32.mrb[0].mxu0
        %v5553 = vpop.f32.mrb[0].mxu0
        %v5554 = vadd.f32 %v3722, %v5553
        %v5555 = vpop.f32.mrb[0].mxu0
        %5556 = vmatprep.mubr.bf16.mxu0 0
        %5557 = vmatmul.mubr.bf16.gmra.mrb[0].mxu0 %v4359
        %v5558 = vpop.f32.mrb[0].mxu0
        %v5559 = vadd.f32 %v3722, %v5558
        %v5560 = vpop.f32.mrb[0].mxu0
        %v5561 = vpop.f32.mrb[0].mxu0
        %v5562 = vadd.f32 %v3722, %v5561
        %v5563 = vpop.f32.mrb[0].mxu0
        %5564 = vmatprep.mubr.bf16.mxu0 0
        %5565 = vmatmul.mubr.bf16.gmra.mrb[0].mxu0 %v4360
        %v5566 = vpop.f32.mrb[0].mxu0
        %v5567 = vadd.f32 %v3722, %v5566
        %v5568 = vpop.f32.mrb[0].mxu0
        %v5569 = vpop.f32.mrb[0].mxu0
        %v5570 = vadd.f32 %v3722, %v5569
        %v5571 = vpop.f32.mrb[0].mxu0
        %5572 = vmatprep.mubr.bf16.mxu0 0
        %5573 = vmatmul.mubr.bf16.gmra.mrb[0].mxu0 %v4361
        %v5574 = vpop.f32.mrb[0].mxu0
        %v5575 = vadd.f32 %v3722, %v5574
        %v5576 = vpop.f32.mrb[0].mxu0
        %v5577 = vpop.f32.mrb[0].mxu0
        %v5578 = vadd.f32 %v3722, %v5577
        %v5579 = vpop.f32.mrb[0].mxu0
        %5580 = vmatprep.mubr.bf16.mxu0 0
        %5581 = vmatmul.mubr.bf16.gmra.mrb[0].mxu0 %v4362
        %v5582 = vpop.f32.mrb[0].mxu0
        %v5583 = vadd.f32 %v3722, %v5582
        %v5584 = vpop.f32.mrb[0].mxu0
        %v5585 = vpop.f32.mrb[0].mxu0
        %v5586 = vadd.f32 %v3722, %v5585
        %v5587 = vpop.f32.mrb[0].mxu0
        %5588 = vmatprep.mubr.bf16.mxu0 0
        %5589 = vmatmul.mubr.bf16.gmra.mrb[0].mxu0 %v4363
        %v5590 = vpop.f32.mrb[0].mxu0
        %v5591 = vadd.f32 %v3722, %v5590
        %v5592 = vpop.f32.mrb[0].mxu0
        %v5593 = vpop.f32.mrb[0].mxu0
        %v5594 = vadd.f32 %v3722, %v5593
        %v5595 = vpop.f32.mrb[0].mxu0
        %5596 = vdwg.mxu0
        %v5597 = vmax.f32 %v4575, 0.0
        %v5598 = vmax.f32 %v4578, 0.0
        %v5599 = vmax.f32 %v4583, 0.0
        %v5600 = vmax.f32 %v4586, 0.0
        %v5601 = vmax.f32 %v4591, 0.0
        %v5602 = vmax.f32 %v4594, 0.0
        %v5603 = vmax.f32 %v4599, 0.0
        %v5604 = vmax.f32 %v4602, 0.0
        %v5605 = vmax.f32 %v4607, 0.0
        %v5606 = vmax.f32 %v4610, 0.0
        %v5607 = vmax.f32 %v4615, 0.0
        %v5608 = vmax.f32 %v4618, 0.0
        %v5609 = vmax.f32 %v4623, 0.0
        %v5610 = vmax.f32 %v4626, 0.0
        %v5611 = vmax.f32 %v4631, 0.0
        %v5612 = vmax.f32 %v4634, 0.0
        %v5613 = vmax.f32 %v4639, 0.0
        %v5614 = vmax.f32 %v4642, 0.0
        %v5615 = vmax.f32 %v4647, 0.0
        %v5616 = vmax.f32 %v4650, 0.0
        %v5617 = vmax.f32 %v4655, 0.0
        %v5618 = vmax.f32 %v4658, 0.0
        %v5619 = vmax.f32 %v4663, 0.0
        %v5620 = vmax.f32 %v4666, 0.0
        %v5621 = vmax.f32 %v4671, 0.0
        %v5622 = vmax.f32 %v4674, 0.0
        %v5623 = vmax.f32 %v4679, 0.0
        %v5624 = vmax.f32 %v4682, 0.0
        %v5625 = vmax.f32 %v4687, 0.0
        %v5626 = vmax.f32 %v4690, 0.0
        %v5627 = vmax.f32 %v4695, 0.0
        %v5628 = vmax.f32 %v4698, 0.0
        %v5629 = vmax.f32 %v4703, 0.0
        %v5630 = vmax.f32 %v4706, 0.0
        %v5631 = vmax.f32 %v4711, 0.0
        %v5632 = vmax.f32 %v4714, 0.0
        %v5633 = vmax.f32 %v4719, 0.0
        %v5634 = vmax.f32 %v4722, 0.0
        %v5635 = vmax.f32 %v4727, 0.0
        %v5636 = vmax.f32 %v4730, 0.0
        %v5637 = vmax.f32 %v4735, 0.0
        %v5638 = vmax.f32 %v4738, 0.0
        %v5639 = vmax.f32 %v4743, 0.0
        %v5640 = vmax.f32 %v4746, 0.0
        %v5641 = vmax.f32 %v4751, 0.0
        %v5642 = vmax.f32 %v4754, 0.0
        %v5643 = vmax.f32 %v4759, 0.0
        %v5644 = vmax.f32 %v4762, 0.0
        %v5645 = vmax.f32 %v4767, 0.0
        %v5646 = vmax.f32 %v4770, 0.0
        %v5647 = vmax.f32 %v4775, 0.0
        %v5648 = vmax.f32 %v4778, 0.0
        %v5649 = vmax.f32 %v4783, 0.0
        %v5650 = vmax.f32 %v4786, 0.0
        %v5651 = vmax.f32 %v4791, 0.0
        %v5652 = vmax.f32 %v4794, 0.0
        %v5653 = vmax.f32 %v4799, 0.0
        %v5654 = vmax.f32 %v4802, 0.0
        %v5655 = vmax.f32 %v4807, 0.0
        %v5656 = vmax.f32 %v4810, 0.0
        %v5657 = vmax.f32 %v4815, 0.0
        %v5658 = vmax.f32 %v4818, 0.0
        %v5659 = vmax.f32 %v4823, 0.0
        %v5660 = vmax.f32 %v4826, 0.0
        %v5661 = vmax.f32 %v4831, 0.0
        %v5662 = vmax.f32 %v4834, 0.0
        %v5663 = vmax.f32 %v4839, 0.0
        %v5664 = vmax.f32 %v4842, 0.0
        %v5665 = vmax.f32 %v4847, 0.0
        %v5666 = vmax.f32 %v4850, 0.0
        %v5667 = vmax.f32 %v4855, 0.0
        %v5668 = vmax.f32 %v4858, 0.0
        %v5669 = vmax.f32 %v4863, 0.0
        %v5670 = vmax.f32 %v4866, 0.0
        %v5671 = vmax.f32 %v4871, 0.0
        %v5672 = vmax.f32 %v4874, 0.0
        %v5673 = vmax.f32 %v4879, 0.0
        %v5674 = vmax.f32 %v4882, 0.0
        %v5675 = vmax.f32 %v4887, 0.0
        %v5676 = vmax.f32 %v4890, 0.0
        %v5677 = vmax.f32 %v4895, 0.0
        %v5678 = vmax.f32 %v4898, 0.0
        %v5679 = vmax.f32 %v4903, 0.0
        %v5680 = vmax.f32 %v4906, 0.0
        %v5681 = vmax.f32 %v4911, 0.0
        %v5682 = vmax.f32 %v4914, 0.0
        %v5683 = vmax.f32 %v4919, 0.0
        %v5684 = vmax.f32 %v4922, 0.0
        %v5685 = vmax.f32 %v4927, 0.0
        %v5686 = vmax.f32 %v4930, 0.0
        %v5687 = vmax.f32 %v4935, 0.0
        %v5688 = vmax.f32 %v4938, 0.0
        %v5689 = vmax.f32 %v4943, 0.0
        %v5690 = vmax.f32 %v4946, 0.0
        %v5691 = vmax.f32 %v4951, 0.0
        %v5692 = vmax.f32 %v4954, 0.0
        %v5693 = vmax.f32 %v4959, 0.0
        %v5694 = vmax.f32 %v4962, 0.0
        %v5695 = vmax.f32 %v4967, 0.0
        %v5696 = vmax.f32 %v4970, 0.0
        %v5697 = vmax.f32 %v4975, 0.0
        %v5698 = vmax.f32 %v4978, 0.0
        %v5699 = vmax.f32 %v4983, 0.0
        %v5700 = vmax.f32 %v4986, 0.0
        %v5701 = vmax.f32 %v4991, 0.0
        %v5702 = vmax.f32 %v4994, 0.0
        %v5703 = vmax.f32 %v4999, 0.0
        %v5704 = vmax.f32 %v5002, 0.0
        %v5705 = vmax.f32 %v5007, 0.0
        %v5706 = vmax.f32 %v5010, 0.0
        %v5707 = vmax.f32 %v5015, 0.0
        %v5708 = vmax.f32 %v5018, 0.0
        %v5709 = vmax.f32 %v5023, 0.0
        %v5710 = vmax.f32 %v5026, 0.0
        %v5711 = vmax.f32 %v5031, 0.0
        %v5712 = vmax.f32 %v5034, 0.0
        %v5713 = vmax.f32 %v5039, 0.0
        %v5714 = vmax.f32 %v5042, 0.0
        %v5715 = vmax.f32 %v5047, 0.0
        %v5716 = vmax.f32 %v5050, 0.0
        %v5717 = vmax.f32 %v5055, 0.0
        %v5718 = vmax.f32 %v5058, 0.0
        %v5719 = vmax.f32 %v5063, 0.0
        %v5720 = vmax.f32 %v5066, 0.0
        %v5721 = vmax.f32 %v5071, 0.0
        %v5722 = vmax.f32 %v5074, 0.0
        %v5723 = vmax.f32 %v5079, 0.0
        %v5724 = vmax.f32 %v5082, 0.0
        %v5725 = vmax.f32 %v5087, 0.0
        %v5726 = vmax.f32 %v5090, 0.0
        %v5727 = vmax.f32 %v5095, 0.0
        %v5728 = vmax.f32 %v5098, 0.0
        %v5729 = vmax.f32 %v5103, 0.0
        %v5730 = vmax.f32 %v5106, 0.0
        %v5731 = vmax.f32 %v5111, 0.0
        %v5732 = vmax.f32 %v5114, 0.0
        %v5733 = vmax.f32 %v5119, 0.0
        %v5734 = vmax.f32 %v5122, 0.0
        %v5735 = vmax.f32 %v5127, 0.0
        %v5736 = vmax.f32 %v5130, 0.0
        %v5737 = vmax.f32 %v5135, 0.0
        %v5738 = vmax.f32 %v5138, 0.0
        %v5739 = vmax.f32 %v5143, 0.0
        %v5740 = vmax.f32 %v5146, 0.0
        %v5741 = vmax.f32 %v5151, 0.0
        %v5742 = vmax.f32 %v5154, 0.0
        %v5743 = vmax.f32 %v5159, 0.0
        %v5744 = vmax.f32 %v5162, 0.0
        %v5745 = vmax.f32 %v5167, 0.0
        %v5746 = vmax.f32 %v5170, 0.0
        %v5747 = vmax.f32 %v5175, 0.0
        %v5748 = vmax.f32 %v5178, 0.0
        %v5749 = vmax.f32 %v5183, 0.0
        %v5750 = vmax.f32 %v5186, 0.0
        %v5751 = vmax.f32 %v5191, 0.0
        %v5752 = vmax.f32 %v5194, 0.0
        %v5753 = vmax.f32 %v5199, 0.0
        %v5754 = vmax.f32 %v5202, 0.0
        %v5755 = vmax.f32 %v5207, 0.0
        %v5756 = vmax.f32 %v5210, 0.0
        %v5757 = vmax.f32 %v5215, 0.0
        %v5758 = vmax.f32 %v5218, 0.0
        %v5759 = vmax.f32 %v5223, 0.0
        %v5760 = vmax.f32 %v5226, 0.0
        %v5761 = vmax.f32 %v5231, 0.0
        %v5762 = vmax.f32 %v5234, 0.0
        %v5763 = vmax.f32 %v5239, 0.0
        %v5764 = vmax.f32 %v5242, 0.0
        %v5765 = vmax.f32 %v5247, 0.0
        %v5766 = vmax.f32 %v5250, 0.0
        %v5767 = vmax.f32 %v5255, 0.0
        %v5768 = vmax.f32 %v5258, 0.0
        %v5769 = vmax.f32 %v5263, 0.0
        %v5770 = vmax.f32 %v5266, 0.0
        %v5771 = vmax.f32 %v5271, 0.0
        %v5772 = vmax.f32 %v5274, 0.0
        %v5773 = vmax.f32 %v5279, 0.0
        %v5774 = vmax.f32 %v5282, 0.0
        %v5775 = vmax.f32 %v5287, 0.0
        %v5776 = vmax.f32 %v5290, 0.0
        %v5777 = vmax.f32 %v5295, 0.0
        %v5778 = vmax.f32 %v5298, 0.0
        %v5779 = vmax.f32 %v5303, 0.0
        %v5780 = vmax.f32 %v5306, 0.0
        %v5781 = vmax.f32 %v5311, 0.0
        %v5782 = vmax.f32 %v5314, 0.0
        %v5783 = vmax.f32 %v5319, 0.0
        %v5784 = vmax.f32 %v5322, 0.0
        %v5785 = vmax.f32 %v5327, 0.0
        %v5786 = vmax.f32 %v5330, 0.0
        %v5787 = vmax.f32 %v5335, 0.0
        %v5788 = vmax.f32 %v5338, 0.0
        %v5789 = vmax.f32 %v5343, 0.0
        %v5790 = vmax.f32 %v5346, 0.0
        %v5791 = vmax.f32 %v5351, 0.0
        %v5792 = vmax.f32 %v5354, 0.0
        %v5793 = vmax.f32 %v5359, 0.0
        %v5794 = vmax.f32 %v5362, 0.0
        %v5795 = vmax.f32 %v5367, 0.0
        %v5796 = vmax.f32 %v5370, 0.0
        %v5797 = vmax.f32 %v5375, 0.0
        %v5798 = vmax.f32 %v5378, 0.0
        %v5799 = vmax.f32 %v5383, 0.0
        %v5800 = vmax.f32 %v5386, 0.0
        %v5801 = vmax.f32 %v5391, 0.0
        %v5802 = vmax.f32 %v5394, 0.0
        %v5803 = vmax.f32 %v5399, 0.0
        %v5804 = vmax.f32 %v5402, 0.0
        %v5805 = vmax.f32 %v5407, 0.0
        %v5806 = vmax.f32 %v5410, 0.0
        %v5807 = vmax.f32 %v5415, 0.0
        %v5808 = vmax.f32 %v5418, 0.0
        %v5809 = vmax.f32 %v5423, 0.0
        %v5810 = vmax.f32 %v5426, 0.0
        %v5811 = vmax.f32 %v5431, 0.0
        %v5812 = vmax.f32 %v5434, 0.0
        %v5813 = vmax.f32 %v5439, 0.0
        %v5814 = vmax.f32 %v5442, 0.0
        %v5815 = vmax.f32 %v5447, 0.0
        %v5816 = vmax.f32 %v5450, 0.0
        %v5817 = vmax.f32 %v5455, 0.0
        %v5818 = vmax.f32 %v5458, 0.0
        %v5819 = vmax.f32 %v5463, 0.0
        %v5820 = vmax.f32 %v5466, 0.0
        %v5821 = vmax.f32 %v5471, 0.0
        %v5822 = vmax.f32 %v5474, 0.0
        %v5823 = vmax.f32 %v5479, 0.0
        %v5824 = vmax.f32 %v5482, 0.0
        %v5825 = vmax.f32 %v5487, 0.0
        %v5826 = vmax.f32 %v5490, 0.0
        %v5827 = vmax.f32 %v5495, 0.0
        %v5828 = vmax.f32 %v5498, 0.0
        %v5829 = vmax.f32 %v5503, 0.0
        %v5830 = vmax.f32 %v5506, 0.0
        %v5831 = vmax.f32 %v5511, 0.0
        %v5832 = vmax.f32 %v5514, 0.0
        %v5833 = vmax.f32 %v5519, 0.0
        %v5834 = vmax.f32 %v5522, 0.0
        %v5835 = vmax.f32 %v5527, 0.0
        %v5836 = vmax.f32 %v5530, 0.0
        %v5837 = vmax.f32 %v5535, 0.0
        %v5838 = vmax.f32 %v5538, 0.0
        %v5839 = vmax.f32 %v5543, 0.0
        %v5840 = vmax.f32 %v5546, 0.0
        %v5841 = vmax.f32 %v5551, 0.0
        %v5842 = vmax.f32 %v5554, 0.0
        %v5843 = vmax.f32 %v5559, 0.0
        %v5844 = vmax.f32 %v5562, 0.0
        %v5845 = vmax.f32 %v5567, 0.0
        %v5846 = vmax.f32 %v5570, 0.0
        %v5847 = vmax.f32 %v5575, 0.0
        %v5848 = vmax.f32 %v5578, 0.0
        %v5849 = vmax.f32 %v5583, 0.0
        %v5850 = vmax.f32 %v5586, 0.0
        %v5851 = vmax.f32 %v5591, 0.0
        %v5852 = vmax.f32 %v5594, 0.0
        %5853 = vmatprep.subr.mxu0 0.0
        %5854 = vmatpush1.msra.mxu0 %v5597
        %5855 = vmatprep.subr.mxu0 0.0
        %5856 = vmatpush1.msra.mxu0 %v5598
        %5857 = vmatprep.subr.mxu0 0.0
        %5858 = vmatpush1.msra.mxu0 %v5599
        %5859 = vmatprep.subr.mxu0 0.0
        %5860 = vmatpush1.msra.mxu0 %v5600
        %5861 = vmatprep.subr.mxu0 0.0
        %5862 = vmatpush1.msra.mxu0 %v5601
        %5863 = vmatprep.subr.mxu0 0.0
        %5864 = vmatpush1.msra.mxu0 %v5602
        %5865 = vmatprep.subr.mxu0 0.0
        %5866 = vmatpush1.msra.mxu0 %v5603
        %5867 = vmatprep.subr.mxu0 0.0
        %5868 = vmatpush1.msra.mxu0 %v5604
        %5869 = vmatprep.subr.mxu0 0.0
        %5870 = vmatpush1.msra.mxu0 %v5605
        %5871 = vmatprep.subr.mxu0 0.0
        %5872 = vmatpush1.msra.mxu0 %v5606
        %5873 = vmatprep.subr.mxu0 0.0
        %5874 = vmatpush1.msra.mxu0 %v5607
        %5875 = vmatprep.subr.mxu0 0.0
        %5876 = vmatpush1.msra.mxu0 %v5608
        %5877 = vmatprep.subr.mxu0 0.0
        %5878 = vmatpush1.msra.mxu0 %v5609
        %5879 = vmatprep.subr.mxu0 0.0
        %5880 = vmatpush1.msra.mxu0 %v5610
        %5881 = vmatprep.subr.mxu0 0.0
        %5882 = vmatpush1.msra.mxu0 %v5611
        %5883 = vmatprep.subr.mxu0 0.0
        %5884 = vmatpush1.msra.mxu0 %v5612
        %5885 = vmatprep.subr.mxu0 0.0
        %5886 = vmatpush1.msra.mxu0 %v5613
        %5887 = vmatprep.subr.mxu0 0.0
        %5888 = vmatpush1.msra.mxu0 %v5614
        %5889 = vmatprep.subr.mxu0 0.0
        %5890 = vmatpush1.msra.mxu0 %v5615
        %5891 = vmatprep.subr.mxu0 0.0
        %5892 = vmatpush1.msra.mxu0 %v5616
        %5893 = vmatprep.subr.mxu0 0.0
        %5894 = vmatpush1.msra.mxu0 %v5617
        %5895 = vmatprep.subr.mxu0 0.0
        %5896 = vmatpush1.msra.mxu0 %v5618
        %5897 = vmatprep.subr.mxu0 0.0
        %5898 = vmatpush1.msra.mxu0 %v5619
        %5899 = vmatprep.subr.mxu0 0.0
        %5900 = vmatpush1.msra.mxu0 %v5620
        %5901 = vmatprep.subr.mxu0 0.0
        %5902 = vmatpush1.msra.mxu0 %v5621
        %5903 = vmatprep.subr.mxu0 0.0
        %5904 = vmatpush1.msra.mxu0 %v5622
        %5905 = vmatprep.subr.mxu0 0.0
        %5906 = vmatpush1.msra.mxu0 %v5623
        %5907 = vmatprep.subr.mxu0 0.0
        %5908 = vmatpush1.msra.mxu0 %v5624
        %5909 = vmatprep.subr.mxu0 0.0
        %5910 = vmatpush1.msra.mxu0 %v5625
        %5911 = vmatprep.subr.mxu0 0.0
        %5912 = vmatpush1.msra.mxu0 %v5626
        %5913 = vmatprep.subr.mxu0 0.0
        %5914 = vmatpush1.msra.mxu0 %v5627
        %5915 = vmatprep.subr.mxu0 0.0
        %5916 = vmatpush1.msra.mxu0 %v5628
        %5917 = vmatprep.mubr.f32.mxu0 0.00048828125
        %5918 = vmatmul.mubr.f32.gmra.mrb[0].mxu0 0.00048828125
        %v5919 = vpop.f32.mrb[0].mxu0
        %v5920 = vadd.f32 0.0, %v5919
        %v5921 = vpop.f32.mrb[0].mxu0
        %5922 = vdwg.mxu0
        %5923 = vmatprep.subr.mxu0 0.0
        %5924 = vmatpush1.msra.mxu0 %v5629
        %5925 = vmatprep.subr.mxu0 0.0
        %5926 = vmatpush1.msra.mxu0 %v5630
        %5927 = vmatprep.subr.mxu0 0.0
        %5928 = vmatpush1.msra.mxu0 %v5631
        %5929 = vmatprep.subr.mxu0 0.0
        %5930 = vmatpush1.msra.mxu0 %v5632
        %5931 = vmatprep.subr.mxu0 0.0
        %5932 = vmatpush1.msra.mxu0 %v5633
        %5933 = vmatprep.subr.mxu0 0.0
        %5934 = vmatpush1.msra.mxu0 %v5634
        %5935 = vmatprep.subr.mxu0 0.0
        %5936 = vmatpush1.msra.mxu0 %v5635
        %5937 = vmatprep.subr.mxu0 0.0
        %5938 = vmatpush1.msra.mxu0 %v5636
        %5939 = vmatprep.subr.mxu0 0.0
        %5940 = vmatpush1.msra.mxu0 %v5637
        %5941 = vmatprep.subr.mxu0 0.0
        %5942 = vmatpush1.msra.mxu0 %v5638
        %5943 = vmatprep.subr.mxu0 0.0
        %5944 = vmatpush1.msra.mxu0 %v5639
        %5945 = vmatprep.subr.mxu0 0.0
        %5946 = vmatpush1.msra.mxu0 %v5640
        %5947 = vmatprep.subr.mxu0 0.0
        %5948 = vmatpush1.msra.mxu0 %v5641
        %5949 = vmatprep.subr.mxu0 0.0
        %5950 = vmatpush1.msra.mxu0 %v5642
        %5951 = vmatprep.subr.mxu0 0.0
        %5952 = vmatpush1.msra.mxu0 %v5643
        %5953 = vmatprep.subr.mxu0 0.0
        %5954 = vmatpush1.msra.mxu0 %v5644
        %5955 = vmatprep.subr.mxu0 0.0
        %5956 = vmatpush1.msra.mxu0 %v5645
        %5957 = vmatprep.subr.mxu0 0.0
        %5958 = vmatpush1.msra.mxu0 %v5646
        %5959 = vmatprep.subr.mxu0 0.0
        %5960 = vmatpush1.msra.mxu0 %v5647
        %5961 = vmatprep.subr.mxu0 0.0
        %5962 = vmatpush1.msra.mxu0 %v5648
        %5963 = vmatprep.subr.mxu0 0.0
        %5964 = vmatpush1.msra.mxu0 %v5649
        %5965 = vmatprep.subr.mxu0 0.0
        %5966 = vmatpush1.msra.mxu0 %v5650
        %5967 = vmatprep.subr.mxu0 0.0
        %5968 = vmatpush1.msra.mxu0 %v5651
        %5969 = vmatprep.subr.mxu0 0.0
        %5970 = vmatpush1.msra.mxu0 %v5652
        %5971 = vmatprep.subr.mxu0 0.0
        %5972 = vmatpush1.msra.mxu0 %v5653
        %5973 = vmatprep.subr.mxu0 0.0
        %5974 = vmatpush1.msra.mxu0 %v5654
        %5975 = vmatprep.subr.mxu0 0.0
        %5976 = vmatpush1.msra.mxu0 %v5655
        %5977 = vmatprep.subr.mxu0 0.0
        %5978 = vmatpush1.msra.mxu0 %v5656
        %5979 = vmatprep.subr.mxu0 0.0
        %5980 = vmatpush1.msra.mxu0 %v5657
        %5981 = vmatprep.subr.mxu0 0.0
        %5982 = vmatpush1.msra.mxu0 %v5658
        %5983 = vmatprep.subr.mxu0 0.0
        %5984 = vmatpush1.msra.mxu0 %v5659
        %5985 = vmatprep.subr.mxu0 0.0
        %5986 = vmatpush1.msra.mxu0 %v5660
        %5987 = vmatprep.mubr.f32.mxu0 0.00048828125
        %5988 = vmatmul.mubr.f32.gmra.mrb[0].mxu0 0.00048828125
        %v5989 = vpop.f32.mrb[0].mxu0
        %v5990 = vadd.f32 %v5920, %v5989
        %v5991 = vpop.f32.mrb[0].mxu0
        %5992 = vdwg.mxu0
        %5993 = vmatprep.subr.mxu0 0.0
        %5994 = vmatpush1.msra.mxu0 %v5661
        %5995 = vmatprep.subr.mxu0 0.0
        %5996 = vmatpush1.msra.mxu0 %v5662
        %5997 = vmatprep.subr.mxu0 0.0
        %5998 = vmatpush1.msra.mxu0 %v5663
        %5999 = vmatprep.subr.mxu0 0.0
        %6000 = vmatpush1.msra.mxu0 %v5664
        %6001 = vmatprep.subr.mxu0 0.0
        %6002 = vmatpush1.msra.mxu0 %v5665
        %6003 = vmatprep.subr.mxu0 0.0
        %6004 = vmatpush1.msra.mxu0 %v5666
        %6005 = vmatprep.subr.mxu0 0.0
        %6006 = vmatpush1.msra.mxu0 %v5667
        %6007 = vmatprep.subr.mxu0 0.0
        %6008 = vmatpush1.msra.mxu0 %v5668
        %6009 = vmatprep.subr.mxu0 0.0
        %6010 = vmatpush1.msra.mxu0 %v5669
        %6011 = vmatprep.subr.mxu0 0.0
        %6012 = vmatpush1.msra.mxu0 %v5670
        %6013 = vmatprep.subr.mxu0 0.0
        %6014 = vmatpush1.msra.mxu0 %v5671
        %6015 = vmatprep.subr.mxu0 0.0
        %6016 = vmatpush1.msra.mxu0 %v5672
        %6017 = vmatprep.subr.mxu0 0.0
        %6018 = vmatpush1.msra.mxu0 %v5673
        %6019 = vmatprep.subr.mxu0 0.0
        %6020 = vmatpush1.msra.mxu0 %v5674
        %6021 = vmatprep.subr.mxu0 0.0
        %6022 = vmatpush1.msra.mxu0 %v5675
        %6023 = vmatprep.subr.mxu0 0.0
        %6024 = vmatpush1.msra.mxu0 %v5676
        %6025 = vmatprep.subr.mxu0 0.0
        %6026 = vmatpush1.msra.mxu0 %v5677
        %6027 = vmatprep.subr.mxu0 0.0
        %6028 = vmatpush1.msra.mxu0 %v5678
        %6029 = vmatprep.subr.mxu0 0.0
        %6030 = vmatpush1.msra.mxu0 %v5679
        %6031 = vmatprep.subr.mxu0 0.0
        %6032 = vmatpush1.msra.mxu0 %v5680
        %6033 = vmatprep.subr.mxu0 0.0
        %6034 = vmatpush1.msra.mxu0 %v5681
        %6035 = vmatprep.subr.mxu0 0.0
        %6036 = vmatpush1.msra.mxu0 %v5682
        %6037 = vmatprep.subr.mxu0 0.0
        %6038 = vmatpush1.msra.mxu0 %v5683
        %6039 = vmatprep.subr.mxu0 0.0
        %6040 = vmatpush1.msra.mxu0 %v5684
        %6041 = vmatprep.subr.mxu0 0.0
        %6042 = vmatpush1.msra.mxu0 %v5685
        %6043 = vmatprep.subr.mxu0 0.0
        %6044 = vmatpush1.msra.mxu0 %v5686
        %6045 = vmatprep.subr.mxu0 0.0
        %6046 = vmatpush1.msra.mxu0 %v5687
        %6047 = vmatprep.subr.mxu0 0.0
        %6048 = vmatpush1.msra.mxu0 %v5688
        %6049 = vmatprep.subr.mxu0 0.0
        %6050 = vmatpush1.msra.mxu0 %v5689
        %6051 = vmatprep.subr.mxu0 0.0
        %6052 = vmatpush1.msra.mxu0 %v5690
        %6053 = vmatprep.subr.mxu0 0.0
        %6054 = vmatpush1.msra.mxu0 %v5691
        %6055 = vmatprep.subr.mxu0 0.0
        %6056 = vmatpush1.msra.mxu0 %v5692
        %6057 = vmatprep.mubr.f32.mxu0 0.00048828125
        %6058 = vmatmul.mubr.f32.gmra.mrb[0].mxu0 0.00048828125
        %v6059 = vpop.f32.mrb[0].mxu0
        %v6060 = vadd.f32 %v5990, %v6059
        %v6061 = vpop.f32.mrb[0].mxu0
        %6062 = vdwg.mxu0
        %6063 = vmatprep.subr.mxu0 0.0
        %6064 = vmatpush1.msra.mxu0 %v5693
        %6065 = vmatprep.subr.mxu0 0.0
        %6066 = vmatpush1.msra.mxu0 %v5694
        %6067 = vmatprep.subr.mxu0 0.0
        %6068 = vmatpush1.msra.mxu0 %v5695
        %6069 = vmatprep.subr.mxu0 0.0
        %6070 = vmatpush1.msra.mxu0 %v5696
        %6071 = vmatprep.subr.mxu0 0.0
        %6072 = vmatpush1.msra.mxu0 %v5697
        %6073 = vmatprep.subr.mxu0 0.0
        %6074 = vmatpush1.msra.mxu0 %v5698
        %6075 = vmatprep.subr.mxu0 0.0
        %6076 = vmatpush1.msra.mxu0 %v5699
        %6077 = vmatprep.subr.mxu0 0.0
        %6078 = vmatpush1.msra.mxu0 %v5700
        %6079 = vmatprep.subr.mxu0 0.0
        %6080 = vmatpush1.msra.mxu0 %v5701
        %6081 = vmatprep.subr.mxu0 0.0
        %6082 = vmatpush1.msra.mxu0 %v5702
        %6083 = vmatprep.subr.mxu0 0.0
        %6084 = vmatpush1.msra.mxu0 %v5703
        %6085 = vmatprep.subr.mxu0 0.0
        %6086 = vmatpush1.msra.mxu0 %v5704
        %6087 = vmatprep.subr.mxu0 0.0
        %6088 = vmatpush1.msra.mxu0 %v5705
        %6089 = vmatprep.subr.mxu0 0.0
        %6090 = vmatpush1.msra.mxu0 %v5706
        %6091 = vmatprep.subr.mxu0 0.0
        %6092 = vmatpush1.msra.mxu0 %v5707
        %6093 = vmatprep.subr.mxu0 0.0
        %6094 = vmatpush1.msra.mxu0 %v5708
        %6095 = vmatprep.subr.mxu0 0.0
        %6096 = vmatpush1.msra.mxu0 %v5709
        %6097 = vmatprep.subr.mxu0 0.0
        %6098 = vmatpush1.msra.mxu0 %v5710
        %6099 = vmatprep.subr.mxu0 0.0
        %6100 = vmatpush1.msra.mxu0 %v5711
        %6101 = vmatprep.subr.mxu0 0.0
        %6102 = vmatpush1.msra.mxu0 %v5712
        %6103 = vmatprep.subr.mxu0 0.0
        %6104 = vmatpush1.msra.mxu0 %v5713
        %6105 = vmatprep.subr.mxu0 0.0
        %6106 = vmatpush1.msra.mxu0 %v5714
        %6107 = vmatprep.subr.mxu0 0.0
        %6108 = vmatpush1.msra.mxu0 %v5715
        %6109 = vmatprep.subr.mxu0 0.0
        %6110 = vmatpush1.msra.mxu0 %v5716
        %6111 = vmatprep.subr.mxu0 0.0
        %6112 = vmatpush1.msra.mxu0 %v5717
        %6113 = vmatprep.subr.mxu0 0.0
        %6114 = vmatpush1.msra.mxu0 %v5718
        %6115 = vmatprep.subr.mxu0 0.0
        %6116 = vmatpush1.msra.mxu0 %v5719
        %6117 = vmatprep.subr.mxu0 0.0
        %6118 = vmatpush1.msra.mxu0 %v5720
        %6119 = vmatprep.subr.mxu0 0.0
        %6120 = vmatpush1.msra.mxu0 %v5721
        %6121 = vmatprep.subr.mxu0 0.0
        %6122 = vmatpush1.msra.mxu0 %v5722
        %6123 = vmatprep.subr.mxu0 0.0
        %6124 = vmatpush1.msra.mxu0 %v5723
        %6125 = vmatprep.subr.mxu0 0.0
        %6126 = vmatpush1.msra.mxu0 %v5724
        %6127 = vmatprep.mubr.f32.mxu0 0.00048828125
        %6128 = vmatmul.mubr.f32.gmra.mrb[0].mxu0 0.00048828125
        %v6129 = vpop.f32.mrb[0].mxu0
        %v6130 = vadd.f32 %v6060, %v6129
        %v6131 = vpop.f32.mrb[0].mxu0
        %6132 = vdwg.mxu0
        %6133 = vmatprep.subr.mxu0 0.0
        %6134 = vmatpush1.msra.mxu0 %v5725
        %6135 = vmatprep.subr.mxu0 0.0
        %6136 = vmatpush1.msra.mxu0 %v5726
        %6137 = vmatprep.subr.mxu0 0.0
        %6138 = vmatpush1.msra.mxu0 %v5727
        %6139 = vmatprep.subr.mxu0 0.0
        %6140 = vmatpush1.msra.mxu0 %v5728
        %6141 = vmatprep.subr.mxu0 0.0
        %6142 = vmatpush1.msra.mxu0 %v5729
        %6143 = vmatprep.subr.mxu0 0.0
        %6144 = vmatpush1.msra.mxu0 %v5730
        %6145 = vmatprep.subr.mxu0 0.0
        %6146 = vmatpush1.msra.mxu0 %v5731
        %6147 = vmatprep.subr.mxu0 0.0
        %6148 = vmatpush1.msra.mxu0 %v5732
        %6149 = vmatprep.subr.mxu0 0.0
        %6150 = vmatpush1.msra.mxu0 %v5733
        %6151 = vmatprep.subr.mxu0 0.0
        %6152 = vmatpush1.msra.mxu0 %v5734
        %6153 = vmatprep.subr.mxu0 0.0
        %6154 = vmatpush1.msra.mxu0 %v5735
        %6155 = vmatprep.subr.mxu0 0.0
        %6156 = vmatpush1.msra.mxu0 %v5736
        %6157 = vmatprep.subr.mxu0 0.0
        %6158 = vmatpush1.msra.mxu0 %v5737
        %6159 = vmatprep.subr.mxu0 0.0
        %6160 = vmatpush1.msra.mxu0 %v5738
        %6161 = vmatprep.subr.mxu0 0.0
        %6162 = vmatpush1.msra.mxu0 %v5739
        %6163 = vmatprep.subr.mxu0 0.0
        %6164 = vmatpush1.msra.mxu0 %v5740
        %6165 = vmatprep.subr.mxu0 0.0
        %6166 = vmatpush1.msra.mxu0 %v5741
        %6167 = vmatprep.subr.mxu0 0.0
        %6168 = vmatpush1.msra.mxu0 %v5742
        %6169 = vmatprep.subr.mxu0 0.0
        %6170 = vmatpush1.msra.mxu0 %v5743
        %6171 = vmatprep.subr.mxu0 0.0
        %6172 = vmatpush1.msra.mxu0 %v5744
        %6173 = vmatprep.subr.mxu0 0.0
        %6174 = vmatpush1.msra.mxu0 %v5745
        %6175 = vmatprep.subr.mxu0 0.0
        %6176 = vmatpush1.msra.mxu0 %v5746
        %6177 = vmatprep.subr.mxu0 0.0
        %6178 = vmatpush1.msra.mxu0 %v5747
        %6179 = vmatprep.subr.mxu0 0.0
        %6180 = vmatpush1.msra.mxu0 %v5748
        %6181 = vmatprep.subr.mxu0 0.0
        %6182 = vmatpush1.msra.mxu0 %v5749
        %6183 = vmatprep.subr.mxu0 0.0
        %6184 = vmatpush1.msra.mxu0 %v5750
        %6185 = vmatprep.subr.mxu0 0.0
        %6186 = vmatpush1.msra.mxu0 %v5751
        %6187 = vmatprep.subr.mxu0 0.0
        %6188 = vmatpush1.msra.mxu0 %v5752
        %6189 = vmatprep.subr.mxu0 0.0
        %6190 = vmatpush1.msra.mxu0 %v5753
        %6191 = vmatprep.subr.mxu0 0.0
        %6192 = vmatpush1.msra.mxu0 %v5754
        %6193 = vmatprep.subr.mxu0 0.0
        %6194 = vmatpush1.msra.mxu0 %v5755
        %6195 = vmatprep.subr.mxu0 0.0
        %6196 = vmatpush1.msra.mxu0 %v5756
        %6197 = vmatprep.mubr.f32.mxu0 0.00048828125
        %6198 = vmatmul.mubr.f32.gmra.mrb[0].mxu0 0.00048828125
        %v6199 = vpop.f32.mrb[0].mxu0
        %v6200 = vadd.f32 %v6130, %v6199
        %v6201 = vpop.f32.mrb[0].mxu0
        %6202 = vdwg.mxu0
        %6203 = vmatprep.subr.mxu0 0.0
        %6204 = vmatpush1.msra.mxu0 %v5757
        %6205 = vmatprep.subr.mxu0 0.0
        %6206 = vmatpush1.msra.mxu0 %v5758
        %6207 = vmatprep.subr.mxu0 0.0
        %6208 = vmatpush1.msra.mxu0 %v5759
        %6209 = vmatprep.subr.mxu0 0.0
        %6210 = vmatpush1.msra.mxu0 %v5760
        %6211 = vmatprep.subr.mxu0 0.0
        %6212 = vmatpush1.msra.mxu0 %v5761
        %6213 = vmatprep.subr.mxu0 0.0
        %6214 = vmatpush1.msra.mxu0 %v5762
        %6215 = vmatprep.subr.mxu0 0.0
        %6216 = vmatpush1.msra.mxu0 %v5763
        %6217 = vmatprep.subr.mxu0 0.0
        %6218 = vmatpush1.msra.mxu0 %v5764
        %6219 = vmatprep.subr.mxu0 0.0
        %6220 = vmatpush1.msra.mxu0 %v5765
        %6221 = vmatprep.subr.mxu0 0.0
        %6222 = vmatpush1.msra.mxu0 %v5766
        %6223 = vmatprep.subr.mxu0 0.0
        %6224 = vmatpush1.msra.mxu0 %v5767
        %6225 = vmatprep.subr.mxu0 0.0
        %6226 = vmatpush1.msra.mxu0 %v5768
        %6227 = vmatprep.subr.mxu0 0.0
        %6228 = vmatpush1.msra.mxu0 %v5769
        %6229 = vmatprep.subr.mxu0 0.0
        %6230 = vmatpush1.msra.mxu0 %v5770
        %6231 = vmatprep.subr.mxu0 0.0
        %6232 = vmatpush1.msra.mxu0 %v5771
        %6233 = vmatprep.subr.mxu0 0.0
        %6234 = vmatpush1.msra.mxu0 %v5772
        %6235 = vmatprep.subr.mxu0 0.0
        %6236 = vmatpush1.msra.mxu0 %v5773
        %6237 = vmatprep.subr.mxu0 0.0
        %6238 = vmatpush1.msra.mxu0 %v5774
        %6239 = vmatprep.subr.mxu0 0.0
        %6240 = vmatpush1.msra.mxu0 %v5775
        %6241 = vmatprep.subr.mxu0 0.0
        %6242 = vmatpush1.msra.mxu0 %v5776
        %6243 = vmatprep.subr.mxu0 0.0
        %6244 = vmatpush1.msra.mxu0 %v5777
        %6245 = vmatprep.subr.mxu0 0.0
        %6246 = vmatpush1.msra.mxu0 %v5778
        %6247 = vmatprep.subr.mxu0 0.0
        %6248 = vmatpush1.msra.mxu0 %v5779
        %6249 = vmatprep.subr.mxu0 0.0
        %6250 = vmatpush1.msra.mxu0 %v5780
        %6251 = vmatprep.subr.mxu0 0.0
        %6252 = vmatpush1.msra.mxu0 %v5781
        %6253 = vmatprep.subr.mxu0 0.0
        %6254 = vmatpush1.msra.mxu0 %v5782
        %6255 = vmatprep.subr.mxu0 0.0
        %6256 = vmatpush1.msra.mxu0 %v5783
        %6257 = vmatprep.subr.mxu0 0.0
        %6258 = vmatpush1.msra.mxu0 %v5784
        %6259 = vmatprep.subr.mxu0 0.0
        %6260 = vmatpush1.msra.mxu0 %v5785
        %6261 = vmatprep.subr.mxu0 0.0
        %6262 = vmatpush1.msra.mxu0 %v5786
        %6263 = vmatprep.subr.mxu0 0.0
        %6264 = vmatpush1.msra.mxu0 %v5787
        %6265 = vmatprep.subr.mxu0 0.0
        %6266 = vmatpush1.msra.mxu0 %v5788
        %6267 = vmatprep.mubr.f32.mxu0 0.00048828125
        %6268 = vmatmul.mubr.f32.gmra.mrb[0].mxu0 0.00048828125
        %v6269 = vpop.f32.mrb[0].mxu0
        %v6270 = vadd.f32 %v6200, %v6269
        %v6271 = vpop.f32.mrb[0].mxu0
        %6272 = vdwg.mxu0
        %6273 = vmatprep.subr.mxu0 0.0
        %6274 = vmatpush1.msra.mxu0 %v5789
        %6275 = vmatprep.subr.mxu0 0.0
        %6276 = vmatpush1.msra.mxu0 %v5790
        %6277 = vmatprep.subr.mxu0 0.0
        %6278 = vmatpush1.msra.mxu0 %v5791
        %6279 = vmatprep.subr.mxu0 0.0
        %6280 = vmatpush1.msra.mxu0 %v5792
        %6281 = vmatprep.subr.mxu0 0.0
        %6282 = vmatpush1.msra.mxu0 %v5793
        %6283 = vmatprep.subr.mxu0 0.0
        %6284 = vmatpush1.msra.mxu0 %v5794
        %6285 = vmatprep.subr.mxu0 0.0
        %6286 = vmatpush1.msra.mxu0 %v5795
        %6287 = vmatprep.subr.mxu0 0.0
        %6288 = vmatpush1.msra.mxu0 %v5796
        %6289 = vmatprep.subr.mxu0 0.0
        %6290 = vmatpush1.msra.mxu0 %v5797
        %6291 = vmatprep.subr.mxu0 0.0
        %6292 = vmatpush1.msra.mxu0 %v5798
        %6293 = vmatprep.subr.mxu0 0.0
        %6294 = vmatpush1.msra.mxu0 %v5799
        %6295 = vmatprep.subr.mxu0 0.0
        %6296 = vmatpush1.msra.mxu0 %v5800
        %6297 = vmatprep.subr.mxu0 0.0
        %6298 = vmatpush1.msra.mxu0 %v5801
        %6299 = vmatprep.subr.mxu0 0.0
        %6300 = vmatpush1.msra.mxu0 %v5802
        %6301 = vmatprep.subr.mxu0 0.0
        %6302 = vmatpush1.msra.mxu0 %v5803
        %6303 = vmatprep.subr.mxu0 0.0
        %6304 = vmatpush1.msra.mxu0 %v5804
        %6305 = vmatprep.subr.mxu0 0.0
        %6306 = vmatpush1.msra.mxu0 %v5805
        %6307 = vmatprep.subr.mxu0 0.0
        %6308 = vmatpush1.msra.mxu0 %v5806
        %6309 = vmatprep.subr.mxu0 0.0
        %6310 = vmatpush1.msra.mxu0 %v5807
        %6311 = vmatprep.subr.mxu0 0.0
        %6312 = vmatpush1.msra.mxu0 %v5808
        %6313 = vmatprep.subr.mxu0 0.0
        %6314 = vmatpush1.msra.mxu0 %v5809
        %6315 = vmatprep.subr.mxu0 0.0
        %6316 = vmatpush1.msra.mxu0 %v5810
        %6317 = vmatprep.subr.mxu0 0.0
        %6318 = vmatpush1.msra.mxu0 %v5811
        %6319 = vmatprep.subr.mxu0 0.0
        %6320 = vmatpush1.msra.mxu0 %v5812
        %6321 = vmatprep.subr.mxu0 0.0
        %6322 = vmatpush1.msra.mxu0 %v5813
        %6323 = vmatprep.subr.mxu0 0.0
        %6324 = vmatpush1.msra.mxu0 %v5814
        %6325 = vmatprep.subr.mxu0 0.0
        %6326 = vmatpush1.msra.mxu0 %v5815
        %6327 = vmatprep.subr.mxu0 0.0
        %6328 = vmatpush1.msra.mxu0 %v5816
        %6329 = vmatprep.subr.mxu0 0.0
        %6330 = vmatpush1.msra.mxu0 %v5817
        %6331 = vmatprep.subr.mxu0 0.0
        %6332 = vmatpush1.msra.mxu0 %v5818
        %6333 = vmatprep.subr.mxu0 0.0
        %6334 = vmatpush1.msra.mxu0 %v5819
        %6335 = vmatprep.subr.mxu0 0.0
        %6336 = vmatpush1.msra.mxu0 %v5820
        %6337 = vmatprep.mubr.f32.mxu0 0.00048828125
        %6338 = vmatmul.mubr.f32.gmra.mrb[0].mxu0 0.00048828125
        %v6339 = vpop.f32.mrb[0].mxu0
        %v6340 = vadd.f32 %v6270, %v6339
        %v6341 = vpop.f32.mrb[0].mxu0
        %6342 = vdwg.mxu0
        %6343 = vmatprep.subr.mxu0 0.0
        %6344 = vmatpush1.msra.mxu0 %v5821
        %6345 = vmatprep.subr.mxu0 0.0
        %6346 = vmatpush1.msra.mxu0 %v5822
        %6347 = vmatprep.subr.mxu0 0.0
        %6348 = vmatpush1.msra.mxu0 %v5823
        %6349 = vmatprep.subr.mxu0 0.0
        %6350 = vmatpush1.msra.mxu0 %v5824
        %6351 = vmatprep.subr.mxu0 0.0
        %6352 = vmatpush1.msra.mxu0 %v5825
        %6353 = vmatprep.subr.mxu0 0.0
        %6354 = vmatpush1.msra.mxu0 %v5826
        %6355 = vmatprep.subr.mxu0 0.0
        %6356 = vmatpush1.msra.mxu0 %v5827
        %6357 = vmatprep.subr.mxu0 0.0
        %6358 = vmatpush1.msra.mxu0 %v5828
        %6359 = vmatprep.subr.mxu0 0.0
        %6360 = vmatpush1.msra.mxu0 %v5829
        %6361 = vmatprep.subr.mxu0 0.0
        %6362 = vmatpush1.msra.mxu0 %v5830
        %6363 = vmatprep.subr.mxu0 0.0
        %6364 = vmatpush1.msra.mxu0 %v5831
        %6365 = vmatprep.subr.mxu0 0.0
        %6366 = vmatpush1.msra.mxu0 %v5832
        %6367 = vmatprep.subr.mxu0 0.0
        %6368 = vmatpush1.msra.mxu0 %v5833
        %6369 = vmatprep.subr.mxu0 0.0
        %6370 = vmatpush1.msra.mxu0 %v5834
        %6371 = vmatprep.subr.mxu0 0.0
        %6372 = vmatpush1.msra.mxu0 %v5835
        %6373 = vmatprep.subr.mxu0 0.0
        %6374 = vmatpush1.msra.mxu0 %v5836
        %6375 = vmatprep.subr.mxu0 0.0
        %6376 = vmatpush1.msra.mxu0 %v5837
        %6377 = vmatprep.subr.mxu0 0.0
        %6378 = vmatpush1.msra.mxu0 %v5838
        %6379 = vmatprep.subr.mxu0 0.0
        %6380 = vmatpush1.msra.mxu0 %v5839
        %6381 = vmatprep.subr.mxu0 0.0
        %6382 = vmatpush1.msra.mxu0 %v5840
        %6383 = vmatprep.subr.mxu0 0.0
        %6384 = vmatpush1.msra.mxu0 %v5841
        %6385 = vmatprep.subr.mxu0 0.0
        %6386 = vmatpush1.msra.mxu0 %v5842
        %6387 = vmatprep.subr.mxu0 0.0
        %6388 = vmatpush1.msra.mxu0 %v5843
        %6389 = vmatprep.subr.mxu0 0.0
        %6390 = vmatpush1.msra.mxu0 %v5844
        %6391 = vmatprep.subr.mxu0 0.0
        %6392 = vmatpush1.msra.mxu0 %v5845
        %6393 = vmatprep.subr.mxu0 0.0
        %6394 = vmatpush1.msra.mxu0 %v5846
        %6395 = vmatprep.subr.mxu0 0.0
        %6396 = vmatpush1.msra.mxu0 %v5847
        %6397 = vmatprep.subr.mxu0 0.0
        %6398 = vmatpush1.msra.mxu0 %v5848
        %6399 = vmatprep.subr.mxu0 0.0
        %6400 = vmatpush1.msra.mxu0 %v5849
        %6401 = vmatprep.subr.mxu0 0.0
        %6402 = vmatpush1.msra.mxu0 %v5850
        %6403 = vmatprep.subr.mxu0 0.0
        %6404 = vmatpush1.msra.mxu0 %v5851
        %6405 = vmatprep.subr.mxu0 0.0
        %6406 = vmatpush1.msra.mxu0 %v5852
        %6407 = vmatprep.mubr.f32.mxu0 0.00048828125
        %6408 = vmatmul.mubr.f32.gmra.mrb[0].mxu0 0.00048828125
        %v6409 = vpop.f32.mrb[0].mxu0
        %v6410 = vadd.f32 %v6340, %v6409
        %v6411 = vpop.f32.mrb[0].mxu0
        %6412 = vdwg.mxu0
        %s6413 = scalar_lea.vmem [#allocation7], 64
        %v6414 = vld [vmem:[%s6413] sm:$0xff]
        %v6415 = vld [vmem:[%s6413 + $0x8] sm:$0xff]
        %v6416 = vld [vmem:[%s6413 + $0x10] sm:$0xff]
        %v6417 = vld [vmem:[%s6413 + $0x18] sm:$0xff]
        %v6418 = vld [vmem:[%s6413 + $0x20] sm:$0xff]
        %v6419 = vld [vmem:[%s6413 + $0x28] sm:$0xff]
        %v6420 = vld [vmem:[%s6413 + $0x30] sm:$0xff]
        %v6421 = vld [vmem:[%s6413 + $0x38] sm:$0xff]
        %s6422 = scalar_lea.vmem [#allocation9], 2
        %v6423 = vld [vmem:[%s6422] sm:$0x3]
        %v6425 = vlaneseq
        %v6426 = vshrl.u32 %v6425, 7
        %v6427 = vsub.s32 0, %v6426
        %v6428 = vrot.slane %v6423, %v6427
        %v6429 = vlaneseq
        %v6430 = vshrl.u32 %v6429, 7
        %v6431 = vsub.s32 1, %v6430
        %v6432 = vrot.slane %v6423, %v6431
        %v6436 = vsel %vm3367, %v6410, 0
        %6438 = vmatprep.subr.mxu0 %v6415
        %6439 = vmatpush1.msra.mxu0 %v6414
        %6440 = vmatprep.subr.mxu0 %v6417
        %6441 = vmatpush1.msra.mxu0 %v6416
        %6442 = vmatprep.subr.mxu0 %v6419
        %6443 = vmatpush1.msra.mxu0 %v6418
        %6444 = vmatprep.subr.mxu0 %v6421
        %6445 = vmatpush1.msra.mxu0 %v6420
        %6446 = vmatprep.subr.mxu0 0.0
        %6447 = vmatpush1.msra.mxu0 0.0
        %6448 = vmatprep.subr.mxu0 0.0
        %6449 = vmatpush1.msra.mxu0 0.0
        %6450 = vmatprep.subr.mxu0 0.0
        %6451 = vmatpush1.msra.mxu0 0.0
        %6452 = vmatprep.subr.mxu0 0.0
        %6453 = vmatpush1.msra.mxu0 0.0
        %6454 = vmatprep.subr.mxu0 0.0
        %6455 = vmatpush1.msra.mxu0 0.0
        %6456 = vmatprep.subr.mxu0 0.0
        %6457 = vmatpush1.msra.mxu0 0.0
        %6458 = vmatprep.subr.mxu0 0.0
        %6459 = vmatpush1.msra.mxu0 0.0
        %6460 = vmatprep.subr.mxu0 0.0
        %6461 = vmatpush1.msra.mxu0 0.0
        %6462 = vmatprep.subr.mxu0 0.0
        %6463 = vmatpush1.msra.mxu0 0.0
        %6464 = vmatprep.subr.mxu0 0.0
        %6465 = vmatpush1.msra.mxu0 0.0
        %6466 = vmatprep.subr.mxu0 0.0
        %6467 = vmatpush1.msra.mxu0 0.0
        %6468 = vmatprep.subr.mxu0 0.0
        %6469 = vmatpush1.msra.mxu0 0.0
        %6470 = vmatprep.subr.mxu0 0.0
        %6471 = vmatpush1.msra.mxu0 0.0
        %6472 = vmatprep.subr.mxu0 0.0
        %6473 = vmatpush1.msra.mxu0 0.0
        %6474 = vmatprep.subr.mxu0 0.0
        %6475 = vmatpush1.msra.mxu0 0.0
        %6476 = vmatprep.subr.mxu0 0.0
        %6477 = vmatpush1.msra.mxu0 0.0
        %6478 = vmatprep.subr.mxu0 0.0
        %6479 = vmatpush1.msra.mxu0 0.0
        %6480 = vmatprep.subr.mxu0 0.0
        %6481 = vmatpush1.msra.mxu0 0.0
        %6482 = vmatprep.subr.mxu0 0.0
        %6483 = vmatpush1.msra.mxu0 0.0
        %6484 = vmatprep.subr.mxu0 0.0
        %6485 = vmatpush1.msra.mxu0 0.0
        %6486 = vmatprep.subr.mxu0 0.0
        %6487 = vmatpush1.msra.mxu0 0.0
        %6488 = vmatprep.subr.mxu0 0.0
        %6489 = vmatpush1.msra.mxu0 0.0
        %6490 = vmatprep.subr.mxu0 0.0
        %6491 = vmatpush1.msra.mxu0 0.0
        %6492 = vmatprep.subr.mxu0 0.0
        %6493 = vmatpush1.msra.mxu0 0.0
        %6494 = vmatprep.subr.mxu0 0.0
        %6495 = vmatpush1.msra.mxu0 0.0
        %6496 = vmatprep.subr.mxu0 0.0
        %6497 = vmatpush1.msra.mxu0 0.0
        %6498 = vmatprep.subr.mxu0 0.0
        %6499 = vmatpush1.msra.mxu0 0.0
        %6500 = vmatprep.subr.mxu0 0.0
        %6501 = vmatpush1.msra.mxu0 0.0
        %6502 = vmatprep.mubr.f32.mxu0 0.0
        %6503 = vmatmul.mubr.f32.gmra.mrb[0].mxu0 %v6436
        %v6504 = vpop.f32.mrb[0].mxu0
        %v6505 = vadd.f32 %v6428, %v6504
        %v6506 = vpop.f32.mrb[0].mxu0
        %v6507 = vadd.f32 %v6432, %v6506
        %6508 = vdwg.mxu0
        %v6509 = vadd.f32 %v3438, %v6505
        %v6510 = vadd.f32 %v3440, %v6507
        %v6511 = vrot.slane %v6410, 7
        %vm6513 = vcmask 1040384
        %v6514 = vsel %vm6513, %v3344, %v6511
        %vm6515 = vcmask 254976
        %6516 = vst.msk [vmem:[%s368] sm:$0x3] %vm6515, %v6514
        %v6519 = vrot.slane %v6505, 7
        %v6520 = vrot.slane %v6507, 7
        %v6523 = vsel %vm6513, %v3438, %v6519
        %v6524 = vsel %vm6513, %v3440, %v6520
        %v6527 = vcombine.low %v6523, %v6524
        %v6529 = vunpack.c.l.s4 1983009808
        %v6530 = vunpack.c.0.s8 %v6529
        %v6531 = vlaneseq
        %v6532 = vshrl.u32 %v6531, 7
        %v6533 = vsub.s32 %v6530, %v6532
        %v6534 = vrot.slane %v6527, %v6533
        %6536 = vst [vmem:[%s373] sm:$0xf] %v6534
        %v6537 = vmul.f32 %v6509, 0.5
        %v6538 = vmul.f32 %v6510, 0.5
        %v6541 = vcombine.low %v6537, %v6538
        %v6543 = vunpack.c.l.s4 1966171168
        %v6544 = vunpack.c.0.s8 %v6543
        %v6545 = vlaneseq
        %v6546 = vshrl.u32 %v6545, 7
        %v6547 = vsub.s32 %v6544, %v6546
        %v6548 = vrot.slane %v6541, %v6547
        %v6550 = vunpack.c.l.s4 1966171168
        %v6551 = vunpack.c.0.s8 %v6550
        %v6552 = vlaneseq
        %v6553 = vshrl.u32 %v6552, 7
        %v6554 = vsub.s32 %v6551, %v6553
        %v6555 = vrot.slane %v6548, %v6554
        %v6557 = vlaneseq
        %vm6558 = vcmp.ge.s32.totalorder %v6557, 0
        %vm6559 = vcmp.lt.s32.totalorder %v6557, 256
        %vm6560 = vmand %vm6558, %vm6559
        %6561 = vst.msk [vmem:[%s377] sm:$0x3] %vm6560, %v6555
        %p6562 = scmp.lt.s32.totalorder %s24, 1
        %s6563 = scalar_select %p6562, %s24, 1
        %s6564 = smul.addr %s6563, 2
        %s6565 = scalar_lea.vmem %s5, %s6564
        %p6566 = scmp.lt.s32.totalorder %s24, 1
        %s6567 = scalar_select %p6566, %s24, 1
        %s6568 = smul.addr %s6567, 2
        %s6569 = smul.addr %s6568, 2
        %s6570 = scalar_lea.vmem %s6, %s6569
        %p6571 = scmp.lt.s32.totalorder %s24, 1
        %s6572 = scalar_select %p6571, %s24, 1
        %s6573 = smul.addr %s6572, 2
        %s6574 = scalar_lea.vmem %s7, %s6573
        // Predicated region
        $region61: #{_lambda_.1} parent=39 // pred_check
          %p6575 = pneg %p152
        $region62: #{_lambda_.1} parent=39 // pred_check_branch
          %6577 = sbr.rel (%p6575) target = $region64
        $region63: #{_lambda_.1} parent=39 // pred_region
          _
        $region64: #{_lambda_.1} parent=39 // pred_fallthru
          _
        // Predicated region
        $region65: #{_lambda_.1} parent=39 // pred_check
          %p6578 = pneg %p178
        $region66: #{_lambda_.1} parent=39 // pred_check_branch
          %6580 = sbr.rel (%p6578) target = $region68
        $region67: #{_lambda_.1} parent=39 // pred_region
          _
        $region68: #{_lambda_.1} parent=39 // pred_fallthru
          _
        // Predicated region
        $region69: #{_lambda_.1} parent=39 // pred_check
          %p6581 = pneg %p204
        $region70: #{_lambda_.1} parent=39 // pred_check_branch
          %6583 = sbr.rel (%p6581) target = $region72
        $region71: #{_lambda_.1} parent=39 // pred_region
          _
        $region72: #{_lambda_.1} parent=39 // pred_fallthru
          _
      $region40: #{_lambda_.1} parent=5 // pred_fallthru
        _
      %p6584 = scmp.le.s32.totalorder 2, %s19
      // Predicated region
      $region73: #{_lambda_.1} parent=5 // pred_check
        %p6585 = pneg %p6584
      $region74: #{_lambda_.1} parent=5 // pred_check_branch
        %6587 = sbr.rel (%p6585) target = $region76
      $region75: #{_lambda_.1} parent=5 // pred_region
        %s6588 = ssub.s32 %s19, 2
        // Predicated region
        $region77: #{_lambda_.1} parent=75 // pred_check
          %p6589 = pneg %p158
        $region78: #{_lambda_.1} parent=75 // pred_check_branch
          %6591 = sbr.rel (%p6589) target = $region80
        $region79: #{_lambda_.1} parent=75 // pred_region
          %p6592 = scmp.lt.s32.totalorder %s25, 1
          %s6593 = scalar_select %p6592, %s25, 1
          %s6594 = smul.addr %s6593, 2
          %s6595 = scalar_lea.vmem %s5, %s6594
        $region80: #{_lambda_.1} parent=75 // pred_fallthru
          _
        // Predicated region
        $region81: #{_lambda_.1} parent=75 // pred_check
          %p6596 = pneg %p184
        $region82: #{_lambda_.1} parent=75 // pred_check_branch
          %6598 = sbr.rel (%p6596) target = $region84
        $region83: #{_lambda_.1} parent=75 // pred_region
          %p6599 = scmp.lt.s32.totalorder %s25, 1
          %s6600 = scalar_select %p6599, %s25, 1
          %s6601 = smul.addr %s6600, 2
          %s6602 = smul.addr %s6601, 2
          %s6603 = scalar_lea.vmem %s6, %s6602
        $region84: #{_lambda_.1} parent=75 // pred_fallthru
          _
        // Predicated region
        $region85: #{_lambda_.1} parent=75 // pred_check
          %p6604 = pneg %p210
        $region86: #{_lambda_.1} parent=75 // pred_check_branch
          %6606 = sbr.rel (%p6604) target = $region88
        $region87: #{_lambda_.1} parent=75 // pred_region
          %p6607 = scmp.lt.s32.totalorder %s25, 1
          %s6608 = scalar_select %p6607, %s25, 1
          %s6609 = smul.addr %s6608, 2
          %s6610 = scalar_lea.vmem %s7, %s6609
        $region88: #{_lambda_.1} parent=75 // pred_fallthru
          _
      $region76: #{_lambda_.1} parent=5 // pred_fallthru
        _
    $region6: #{_lambda_.1} parent=1 // loop_footer
      %s23 = sadd.s32 1, %s19
    $region7: #{_lambda_.1} parent=1 // loop_footer_branch
      %18 = sbr.rel target = $region3
    $region8: #{_lambda_.1} parent=1 // loop_exit
      _
    %6611 = vsyncpa [#allocation3], 1
    %s6612 = scalar_lea.sflag [#allocation3], 1
    %6613 = vsyncpa %s6612, 1
    %6614 = vsyncpa [#allocation5], 1
    %6615 = vsyncpa [#allocation8], 1

</llo_original>
